<compile_context>
chip_gen: v7x
topology: tpu7x:2x2x1
jax: 0.10.0
libtpu: 0.0.40
codegen_flags: <defaults>
</compile_context>

<pallas_src>
import functools

import jax
import jax.numpy as jnp
import numpy as np
from jax.experimental import pallas as pl
from jax.experimental.pallas import tpu as pltpu

BN_EPS = 1e-5
LANE = 128                      # TPU lane width: channel padding target
MXU_DTYPE = jnp.bfloat16        # MXU operand dtype (accumulation stays f32)

_COMPILER_PARAMS = pltpu.CompilerParams(
    dimension_semantics=("parallel",),       # shard the batch grid over TCs (v7x)
    vmem_limit_bytes=32 * 1024 * 1024,       # explicit; safe on v7x's 64 MiB VMEM
)


# ----------------------------------------------------------------------------
# Pallas kernels
# ----------------------------------------------------------------------------
def _basic_block_kernel(x_ref, w1_ref, s1_ref, b1_ref, w2_ref, s2_ref, b2_ref,
                        o_ref, mid_ref, *, H, W):
    """Fused BasicBlock for one image.

    x_ref   : (1, H+2, W+2, C)  halo-padded input (f32)
    w*_ref  : (9*C, C)          3x3 weights, taps flattened dy-major (bf16)
    s*/b*   : (1, C)            folded (eval-mode) BatchNorm scale / bias (f32)
    o_ref   : (1, H, W, C)      output (f32)
    mid_ref : (H+2, W+2, C)     VMEM scratch for the conv1 activation (bf16)
    """
    C = o_ref.shape[-1]
    M = H * W

    def conv3x3(load_tap, w_ref):
        # im2col lives only in VMEM/vregs: 9 shifted reads -> lane-aligned
        # concat -> one MXU matmul with a 9*C-deep contraction.
        taps = [load_tap(dy, dx).reshape(M, C)
                for dy in range(3) for dx in range(3)]
        patch = jnp.concatenate(taps, axis=1)                # (M, 9*C) bf16
        return jnp.dot(patch, w_ref[...], preferred_element_type=jnp.float32)

    # ---- conv1 + bn1 + relu -------------------------------------------------
    def tap_x(dy, dx):
        return x_ref[0, dy:dy + H, dx:dx + W, :].astype(MXU_DTYPE)

    y1 = conv3x3(tap_x, w1_ref) * s1_ref[...] + b1_ref[...]   # affine once, on acc
    y1 = jnp.maximum(y1, 0.0)

    # conv1 result stays on-chip: zero-ringed VMEM scratch, never touches HBM.
    mid_ref[...] = jnp.zeros_like(mid_ref)
    mid_ref[1:1 + H, 1:1 + W, :] = y1.reshape(H, W, C).astype(mid_ref.dtype)

    # ---- conv2 + bn2 + residual + relu --------------------------------------
    def tap_m(dy, dx):
        return mid_ref[dy:dy + H, dx:dx + W, :]

    res = x_ref[0, 1:1 + H, 1:1 + W, :].reshape(M, C)         # residual (f32)
    y2 = conv3x3(tap_m, w2_ref) * s2_ref[...] + b2_ref[...] + res
    y2 = jnp.maximum(y2, 0.0)
    o_ref[0] = y2.reshape(H, W, C).astype(o_ref.dtype)


def _conv3x3_s2_kernel(xph_ref, w_ref, s_ref, b_ref, o_ref, *, Ho, Wo, Hh, relu):
    """3x3 / stride-2 conv + folded BN (+ReLU) for one image.

    xph_ref : (1, 4*Hh, Wh, C)  phase-split halo-padded input: the row block
              [p*Hh, (p+1)*Hh) holds xpad[py::2, px::2] with p = 2*py + px,
              so every stride-2 tap is a contiguous static window.
    """
    C = o_ref.shape[-1]
    M = Ho * Wo
    taps = []
    for dy in range(3):
        for dx in range(3):
            p = 2 * (dy % 2) + (dx % 2)
            r0 = p * Hh + dy // 2
            c0 = dx // 2
            t = xph_ref[0, r0:r0 + Ho, c0:c0 + Wo, :].astype(MXU_DTYPE)
            taps.append(t.reshape(M, C))
    patch = jnp.concatenate(taps, axis=1)                     # (M, 9*C) bf16
    y = jnp.dot(patch, w_ref[...], preferred_element_type=jnp.float32)
    y = y * s_ref[...] + b_ref[...]
    if relu:
        y = jnp.maximum(y, 0.0)
    o_ref[0] = y.reshape(Ho, Wo, C).astype(o_ref.dtype)


def _fuse_kernel(*refs, Hi, Wi, up_meta, n_direct):
    """One HRNet fuse output: sum(direct) + sum(upsample(bn(1x1conv(x_j)))) -> ReLU.

    refs = [direct_0 .. direct_{n_direct-1},
            (x_j, w_j, s_j, b_j) per up-path ..., out_ref]
    """
    o_ref = refs[-1]
    C = o_ref.shape[-1]
    M = Hi * Wi

    acc = refs[0][0].reshape(M, C).astype(jnp.float32)
    for r in refs[1:n_direct]:
        acc = acc + r[0].reshape(M, C).astype(jnp.float32)

    idx = n_direct
    for (Hj, Wj, f) in up_meta:
        x_ref, w_ref, s_ref, b_ref = refs[idx:idx + 4]
        idx += 4
        z = x_ref[0].reshape(Hj * Wj, C).astype(MXU_DTYPE)
        z = jnp.dot(z, w_ref[...], preferred_element_type=jnp.float32)  # 1x1 conv
        z = z * s_ref[...] + b_ref[...]                                 # folded BN
        # nearest-neighbour x f upsample, fused in-kernel (no HBM blow-up)
        z = z.reshape(Hj, Wj, C)
        z = jnp.stack([z] * f, axis=1).reshape(Hj * f, Wj, C)
        z = jnp.stack([z] * f, axis=2).reshape(Hj * f, Wj * f, C)
        acc = acc + z.reshape(M, C)

    o_ref[0] = jnp.maximum(acc, 0.0).reshape(Hi, Wi, C).astype(o_ref.dtype)


# ----------------------------------------------------------------------------
# Wrappers (thin XLA glue: halo pad, phase split, channel pad/slice)
# ----------------------------------------------------------------------------
def _pad_channels(x):
    c = x.shape[-1]
    # TODO(synk): channels > 128 would need lane-dim tiling; configs here are <=128.
    assert c <= LANE
    if c == LANE:
        return x
    return jnp.pad(x, ((0, 0),) * (x.ndim - 1) + ((0, LANE - c),))


def _prep_conv(w, scale, bias):
    """Zero-pad a (K,K,Cin,Cout) weight to the 128-lane grid, flatten taps, cast bf16."""
    K = w.shape[0]
    cin, cout = w.shape[2], w.shape[3]
    wp = jnp.pad(w, ((0, 0), (0, 0), (0, LANE - cin), (0, LANE - cout)))
    wp = wp.reshape(K * K * LANE, LANE).astype(MXU_DTYPE)
    s = jnp.pad(scale, (0, LANE - cout)).reshape(1, LANE).astype(jnp.float32)
    b = jnp.pad(bias, (0, LANE - cout)).reshape(1, LANE).astype(jnp.float32)
    return wp, s, b


def basic_block_pallas(x, blk):
    """x: (N, H, W, 128) f32 -> (N, H, W, 128) f32, one fused pallas_call."""
    N, H, W, C = x.shape
    xp = jnp.pad(x, ((0, 0), (1, 1), (1, 1), (0, 0)))          # halo only, no im2col
    w1, s1, b1 = _prep_conv(blk["w1"], *blk["bn1"])
    w2, s2, b2 = _prep_conv(blk["w2"], *blk["bn2"])
    vec_spec = pl.BlockSpec((1, LANE), lambda n: (0, 0))
    return pl.pallas_call(
        functools.partial(_basic_block_kernel, H=H, W=W),
        grid=(N,),
        in_specs=[
            pl.BlockSpec((1, H + 2, W + 2, C), lambda n: (n, 0, 0, 0)),
            pl.BlockSpec((9 * LANE, LANE), lambda n: (0, 0)), vec_spec, vec_spec,
            pl.BlockSpec((9 * LANE, LANE), lambda n: (0, 0)), vec_spec, vec_spec,
        ],
        out_specs=pl.BlockSpec((1, H, W, C), lambda n: (n, 0, 0, 0)),
        out_shape=jax.ShapeDtypeStruct((N, H, W, C), jnp.float32),
        scratch_shapes=[pltpu.VMEM((H + 2, W + 2, C), MXU_DTYPE)],
        compiler_params=_COMPILER_PARAMS,
    )(xp, w1, s1, b1, w2, s2, b2)


def conv3x3_s2_pallas(x, w, scale, bias, *, relu):
    """3x3 stride-2 conv + BN (+ReLU) on channel-padded NHWC input."""
    N, H, W, C = x.shape
    assert H % 2 == 0 and W % 2 == 0
    Ho, Wo = H // 2, W // 2
    Hh, Wh = (H + 2) // 2, (W + 2) // 2
    xp = jnp.pad(x, ((0, 0), (1, 1), (1, 1), (0, 0)))
    # Single O(bytes) phase-split (space-to-depth) relayout for stride 2; the
    # kernel then only does contiguous static window reads.
    xph = jnp.concatenate(
        [xp[:, py::2, px::2, :] for py in range(2) for px in range(2)], axis=1)
    wf, s, b = _prep_conv(w, scale, bias)
    vec_spec = pl.BlockSpec((1, LANE), lambda n: (0, 0))
    return pl.pallas_call(
        functools.partial(_conv3x3_s2_kernel, Ho=Ho, Wo=Wo, Hh=Hh, relu=relu),
        grid=(N,),
        in_specs=[
            pl.BlockSpec((1, 4 * Hh, Wh, C), lambda n: (n, 0, 0, 0)),
            pl.BlockSpec((9 * LANE, LANE), lambda n: (0, 0)), vec_spec, vec_spec,
        ],
        out_specs=pl.BlockSpec((1, Ho, Wo, C), lambda n: (n, 0, 0, 0)),
        out_shape=jax.ShapeDtypeStruct((N, Ho, Wo, C), jnp.float32),
        compiler_params=_COMPILER_PARAMS,
    )(xph, wf, s, b)


def fuse_sum_pallas(direct, ups, Hi, Wi):
    """Fused sum(direct) + sum(upsampled 1x1-conv paths) + ReLU, one pallas_call."""
    N = direct[0].shape[0]
    C = LANE
    vec_spec = pl.BlockSpec((1, LANE), lambda n: (0, 0))
    args, in_specs, up_meta = [], [], []
    for d in direct:
        args.append(d)
        in_specs.append(pl.BlockSpec((1, Hi, Wi, C), lambda n: (n, 0, 0, 0)))
    for (xj, w, scale, bias, f) in ups:
        Hj, Wj = xj.shape[1], xj.shape[2]
        wf, s, b = _prep_conv(w, scale, bias)
        args += [xj, wf, s, b]
        in_specs += [pl.BlockSpec((1, Hj, Wj, C), lambda n: (n, 0, 0, 0)),
                     pl.BlockSpec((LANE, LANE), lambda n: (0, 0)),
                     vec_spec, vec_spec]
        up_meta.append((Hj, Wj, f))
    return pl.pallas_call(
        functools.partial(_fuse_kernel, Hi=Hi, Wi=Wi,
                          up_meta=tuple(up_meta), n_direct=len(direct)),
        grid=(N,),
        in_specs=in_specs,
        out_specs=pl.BlockSpec((1, Hi, Wi, C), lambda n: (n, 0, 0, 0)),
        out_shape=jax.ShapeDtypeStruct((N, Hi, Wi, C), jnp.float32),
        compiler_params=_COMPILER_PARAMS,
    )(*args)


# ----------------------------------------------------------------------------
# Pallas forward (matches HighResolutionModule.forward semantics)
# ----------------------------------------------------------------------------
def module_forward_pallas(params, xs, num_branches, num_inchannels,
                          multi_scale_output=True):
    xs = [_pad_channels(x) for x in xs]                        # pad channels once
    for i in range(num_branches):
        for blk in params["branches"][i]:
            xs[i] = basic_block_pallas(xs[i], blk)
    if num_branches == 1:
        return [xs[0][..., :num_inchannels[0]]]
    outs = []
    n_out = num_branches if multi_scale_output else 1
    for i in range(n_out):
        Hi, Wi = xs[i].shape[1], xs[i].shape[2]
        direct, ups = [xs[i]], []
        for j in range(num_branches):
            if j == i:
                continue
            p = params["fuse"][i][j]
            if p["kind"] == "down":
                z = xs[j]
                for c in p["convs"]:
                    z = conv3x3_s2_pallas(z, c["w"], *c["bn"], relu=c["relu"])
                direct.append(z)
            else:  # "up": 1x1 conv + BN + upsample fused into the fuse kernel
                ups.append((xs[j], p["w"], p["bn"][0], p["bn"][1], p["factor"]))
        y = fuse_sum_pallas(direct, ups, Hi, Wi)
        outs.append(y[..., :num_inchannels[i]])                # un-pad channels
    return outs


# ----------------------------------------------------------------------------
# Pure-JAX f32 reference (correctness check)
# ----------------------------------------------------------------------------
def ref_conv_bn(x, w, scale, bias, *, stride=1, relu=False):
    K = w.shape[0]
    pad = (K - 1) // 2
    y = jax.lax.conv_general_dilated(
        x, w, (stride, stride), [(pad, pad), (pad, pad)],
        dimension_numbers=("NHWC", "HWIO", "NHWC"))
    y = y * scale.reshape(1, 1, 1, -1) + bias.reshape(1, 1, 1, -1)
    if relu:
        y = jnp.maximum(y, 0.0)
    return y


def module_forward_ref(params, xs, num_branches, multi_scale_output=True):
    xs = list(xs)
    for i in range(num_branches):
        for blk in params["branches"][i]:
            out = ref_conv_bn(xs[i], blk["w1"], *blk["bn1"], relu=True)
            out = ref_conv_bn(out, blk["w2"], *blk["bn2"], relu=False)
            xs[i] = jnp.maximum(out + xs[i], 0.0)
    if num_branches == 1:
        return [xs[0]]
    outs = []
    n_out = num_branches if multi_scale_output else 1
    for i in range(n_out):
        acc = None
        for j in range(num_branches):
            if j == i:
                z = xs[j]
            else:
                p = params["fuse"][i][j]
                if p["kind"] == "up":
                    z = ref_conv_bn(xs[j], p["w"], *p["bn"], relu=False)
                    f = p["factor"]
                    z = jnp.repeat(jnp.repeat(z, f, axis=1), f, axis=2)
                else:
                    z = xs[j]
                    for c in p["convs"]:
                        z = ref_conv_bn(z, c["w"], *c["bn"], stride=2, relu=c["relu"])
            acc = z if acc is None else acc + z
        outs.append(jnp.maximum(acc, 0.0))
    return outs


# ----------------------------------------------------------------------------
# Parameter construction (mirrors the PyTorch __init__ shapes; BasicBlock,
# expansion=1, stride=1 => no downsample in branches).  Eval-mode BatchNorm is
# folded into per-channel (scale, bias).
# ----------------------------------------------------------------------------
def _init_bn(key, c):
    k1, k2, k3, k4 = jax.random.split(key, 4)
    gamma = 1.0 + 0.1 * jax.random.normal(k1, (c,), jnp.float32)
    beta = 0.1 * jax.random.normal(k2, (c,), jnp.float32)
    mean = 0.1 * jax.random.normal(k3, (c,), jnp.float32)
    var = 1.0 + 0.1 * jnp.abs(jax.random.normal(k4, (c,), jnp.float32))
    scale = gamma / jnp.sqrt(var + BN_EPS)
    bias = beta - mean * scale
    return scale, bias


def _init_conv(key, k, cin, cout):
    return 0.1 * jax.random.normal(key, (k, k, cin, cout), jnp.float32)


def build_params(key, num_branches, num_blocks, num_inchannels,
                 multi_scale_output=True):
    keys = iter(jax.random.split(key, 256))
    params = {"branches": [], "fuse": []}
    for i in range(num_branches):
        c = num_inchannels[i]
        blocks = []
        for _ in range(num_blocks[i]):
            blocks.append({
                "w1": _init_conv(next(keys), 3, c, c), "bn1": _init_bn(next(keys), c),
                "w2": _init_conv(next(keys), 3, c, c), "bn2": _init_bn(next(keys), c),
            })
        params["branches"].append(blocks)
    if num_branches > 1:
        n_out = num_branches if multi_scale_output else 1
        for i in range(n_out):
            row = []
            for j in range(num_branches):
                if j > i:
                    row.append({
                        "kind": "up",
                        "w": _init_conv(next(keys), 1, num_inchannels[j], num_inchannels[i]),
                        "bn": _init_bn(next(keys), num_inchannels[i]),
                        "factor": 2 ** (j - i),
                    })
                elif j == i:
                    row.append(None)
                else:
                    convs = []
                    for k in range(i - j):
                        last = (k == i - j - 1)
                        cout = num_inchannels[i] if last else num_inchannels[j]
                        convs.append({
                            "w": _init_conv(next(keys), 3, num_inchannels[j], cout),
                            "bn": _init_bn(next(keys), cout),
                            "relu": not last,
                        })
                    row.append({"kind": "down", "convs": convs})
            params["fuse"].append(row)
    return params


# ----------------------------------------------------------------------------
if __name__ == "__main__":
    # Config: 2 branches, BasicBlock (expansion=1), 1 block each, fuse='SUM'.
    num_branches = 2
    num_blocks = [1, 1]
    num_inchannels = [8, 16]

    key = jax.random.PRNGKey(0)
    kp, kx0, kx1 = jax.random.split(key, 3)
    params = build_params(kp, num_branches, num_blocks, num_inchannels)

    # PyTorch-style NCHW inputs (branch 0: 16x16, branch 1: 8x8).
    x0_nchw = jax.random.normal(kx0, (2, 8, 16, 16), jnp.float32)
    x1_nchw = jax.random.normal(kx1, (2, 16, 8, 8), jnp.float32)
    xs_nhwc = [jnp.transpose(x0_nchw, (0, 2, 3, 1)),
               jnp.transpose(x1_nchw, (0, 2, 3, 1))]

    outs = module_forward_pallas(params, xs_nhwc, num_branches, num_inchannels)
    outs = jax.block_until_ready(outs)

    refs = module_forward_ref(params, xs_nhwc, num_branches)
    refs = jax.block_until_ready(refs)

    # bf16 MXU operands (f32 accumulation) vs. a pure-f32 reference -> widened tol.
    for o, r in zip(outs, refs):
        np.testing.assert_allclose(np.asarray(o), np.asarray(r),
                                   atol=8e-2, rtol=8e-2)
    print("KERNEL_OK")
</pallas_src>

<mosaic_0001>
module attributes {stable_mosaic.version = 11 : i64} {
  func.func @_basic_block_kernel(%arg0: i32, %arg1: memref<1x18x18x128xf32, #tpu.memory_space<vmem>>, %arg2: memref<1152x128xbf16, #tpu.memory_space<vmem>>, %arg3: memref<1x128xf32, #tpu.memory_space<vmem>>, %arg4: memref<1x128xf32, #tpu.memory_space<vmem>>, %arg5: memref<1152x128xbf16, #tpu.memory_space<vmem>>, %arg6: memref<1x128xf32, #tpu.memory_space<vmem>>, %arg7: memref<1x128xf32, #tpu.memory_space<vmem>>, %arg8: memref<1x16x16x128xf32, #tpu.memory_space<vmem>>, %arg9: memref<18x18x128xbf16, #tpu.memory_space<vmem>>) attributes {dimension_semantics = [#tpu.dimension_semantics<parallel>], iteration_bounds = array<i64: 2>, scalar_prefetch = 0 : i64, scratch_operands = 1 : i64, tpu.core_type = #tpu.core_type<tc>, window_params = [{transform_indices = @transform_0, window_bounds = array<i64: 1, 18, 18, 128>}, {pipeline_mode = #tpu.pipeline_mode<synchronous>, transform_indices = @transform_1, window_bounds = array<i64: 1152, 128>}, {pipeline_mode = #tpu.pipeline_mode<synchronous>, transform_indices = @transform_2, window_bounds = array<i64: 1, 128>}, {pipeline_mode = #tpu.pipeline_mode<synchronous>, transform_indices = @transform_3, window_bounds = array<i64: 1, 128>}, {pipeline_mode = #tpu.pipeline_mode<synchronous>, transform_indices = @transform_4, window_bounds = array<i64: 1152, 128>}, {pipeline_mode = #tpu.pipeline_mode<synchronous>, transform_indices = @transform_5, window_bounds = array<i64: 1, 128>}, {pipeline_mode = #tpu.pipeline_mode<synchronous>, transform_indices = @transform_6, window_bounds = array<i64: 1, 128>}, {transform_indices = @transform_7, window_bounds = array<i64: 1, 16, 16, 128>}]} {
    %c0 = arith.constant 0 : index
    %c0_0 = arith.constant 0 : index
    %c0_1 = arith.constant 0 : index
    %c0_2 = arith.constant 0 : index
    %0 = vector.load %arg1[%c0, %c0_0, %c0_1, %c0_2] : memref<1x18x18x128xf32, #tpu.memory_space<vmem>>, vector<1x16x16x128xf32>
    %1 = vector.shape_cast %0 : vector<1x16x16x128xf32> to vector<16x16x128xf32>
    %2 = arith.truncf %1 : vector<16x16x128xf32> to vector<16x16x128xbf16>
    %3 = vector.shape_cast %2 : vector<16x16x128xbf16> to vector<256x128xbf16>
    %c0_3 = arith.constant 0 : index
    %c0_4 = arith.constant 0 : index
    %c1 = arith.constant 1 : index
    %c0_5 = arith.constant 0 : index
    %4 = vector.load %arg1[%c0_3, %c0_4, %c1, %c0_5] : memref<1x18x18x128xf32, #tpu.memory_space<vmem>>, vector<1x16x16x128xf32>
    %5 = vector.shape_cast %4 : vector<1x16x16x128xf32> to vector<16x16x128xf32>
    %6 = arith.truncf %5 : vector<16x16x128xf32> to vector<16x16x128xbf16>
    %7 = vector.shape_cast %6 : vector<16x16x128xbf16> to vector<256x128xbf16>
    %c0_6 = arith.constant 0 : index
    %c0_7 = arith.constant 0 : index
    %c2 = arith.constant 2 : index
    %c0_8 = arith.constant 0 : index
    %8 = vector.load %arg1[%c0_6, %c0_7, %c2, %c0_8] : memref<1x18x18x128xf32, #tpu.memory_space<vmem>>, vector<1x16x16x128xf32>
    %9 = vector.shape_cast %8 : vector<1x16x16x128xf32> to vector<16x16x128xf32>
    %10 = arith.truncf %9 : vector<16x16x128xf32> to vector<16x16x128xbf16>
    %11 = vector.shape_cast %10 : vector<16x16x128xbf16> to vector<256x128xbf16>
    %c0_9 = arith.constant 0 : index
    %c1_10 = arith.constant 1 : index
    %c0_11 = arith.constant 0 : index
    %c0_12 = arith.constant 0 : index
    %12 = vector.load %arg1[%c0_9, %c1_10, %c0_11, %c0_12] : memref<1x18x18x128xf32, #tpu.memory_space<vmem>>, vector<1x16x16x128xf32>
    %13 = vector.shape_cast %12 : vector<1x16x16x128xf32> to vector<16x16x128xf32>
    %14 = arith.truncf %13 : vector<16x16x128xf32> to vector<16x16x128xbf16>
    %15 = vector.shape_cast %14 : vector<16x16x128xbf16> to vector<256x128xbf16>
    %c0_13 = arith.constant 0 : index
    %c1_14 = arith.constant 1 : index
    %c1_15 = arith.constant 1 : index
    %c0_16 = arith.constant 0 : index
    %16 = vector.load %arg1[%c0_13, %c1_14, %c1_15, %c0_16] : memref<1x18x18x128xf32, #tpu.memory_space<vmem>>, vector<1x16x16x128xf32>
    %17 = vector.shape_cast %16 : vector<1x16x16x128xf32> to vector<16x16x128xf32>
    %18 = arith.truncf %17 : vector<16x16x128xf32> to vector<16x16x128xbf16>
    %19 = vector.shape_cast %18 : vector<16x16x128xbf16> to vector<256x128xbf16>
    %c0_17 = arith.constant 0 : index
    %c1_18 = arith.constant 1 : index
    %c2_19 = arith.constant 2 : index
    %c0_20 = arith.constant 0 : index
    %20 = vector.load %arg1[%c0_17, %c1_18, %c2_19, %c0_20] : memref<1x18x18x128xf32, #tpu.memory_space<vmem>>, vector<1x16x16x128xf32>
    %21 = vector.shape_cast %20 : vector<1x16x16x128xf32> to vector<16x16x128xf32>
    %22 = arith.truncf %21 : vector<16x16x128xf32> to vector<16x16x128xbf16>
    %23 = vector.shape_cast %22 : vector<16x16x128xbf16> to vector<256x128xbf16>
    %c0_21 = arith.constant 0 : index
    %c2_22 = arith.constant 2 : index
    %c0_23 = arith.constant 0 : index
    %c0_24 = arith.constant 0 : index
    %24 = vector.load %arg1[%c0_21, %c2_22, %c0_23, %c0_24] : memref<1x18x18x128xf32, #tpu.memory_space<vmem>>, vector<1x16x16x128xf32>
    %25 = vector.shape_cast %24 : vector<1x16x16x128xf32> to vector<16x16x128xf32>
    %26 = arith.truncf %25 : vector<16x16x128xf32> to vector<16x16x128xbf16>
    %27 = vector.shape_cast %26 : vector<16x16x128xbf16> to vector<256x128xbf16>
    %c0_25 = arith.constant 0 : index
    %c2_26 = arith.constant 2 : index
    %c1_27 = arith.constant 1 : index
    %c0_28 = arith.constant 0 : index
    %28 = vector.load %arg1[%c0_25, %c2_26, %c1_27, %c0_28] : memref<1x18x18x128xf32, #tpu.memory_space<vmem>>, vector<1x16x16x128xf32>
    %29 = vector.shape_cast %28 : vector<1x16x16x128xf32> to vector<16x16x128xf32>
    %30 = arith.truncf %29 : vector<16x16x128xf32> to vector<16x16x128xbf16>
    %31 = vector.shape_cast %30 : vector<16x16x128xbf16> to vector<256x128xbf16>
    %c0_29 = arith.constant 0 : index
    %c2_30 = arith.constant 2 : index
    %c2_31 = arith.constant 2 : index
    %c0_32 = arith.constant 0 : index
    %32 = vector.load %arg1[%c0_29, %c2_30, %c2_31, %c0_32] : memref<1x18x18x128xf32, #tpu.memory_space<vmem>>, vector<1x16x16x128xf32>
    %33 = vector.shape_cast %32 : vector<1x16x16x128xf32> to vector<16x16x128xf32>
    %34 = arith.truncf %33 : vector<16x16x128xf32> to vector<16x16x128xbf16>
    %35 = vector.shape_cast %34 : vector<16x16x128xbf16> to vector<256x128xbf16>
    %36 = tpu.concatenate %3, %7, %11, %15, %19, %23, %27, %31, %35 in 1 : vector<256x128xbf16>, vector<256x128xbf16>, vector<256x128xbf16>, vector<256x128xbf16>, vector<256x128xbf16>, vector<256x128xbf16>, vector<256x128xbf16>, vector<256x128xbf16>, vector<256x128xbf16> -> vector<256x1152xbf16>
    %c0_33 = arith.constant 0 : index
    %c0_34 = arith.constant 0 : index
    %37 = vector.load %arg2[%c0_33, %c0_34] : memref<1152x128xbf16, #tpu.memory_space<vmem>>, vector<1152x128xbf16>
    %cst = arith.constant dense<0.000000e+00> : vector<256x128xf32>
    %38 = tpu.matmul %36, %37, %cst {dimension_numbers = #tpu.dot_dimension_numbers<[1], [0], [0], [1], [0, 0, 1, 1], [], []>} : vector<256x1152xbf16>, vector<1152x128xbf16>, vector<256x128xf32> -> vector<256x128xf32>
    %c0_35 = arith.constant 0 : index
    %c0_36 = arith.constant 0 : index
    %39 = vector.load %arg3[%c0_35, %c0_36] : memref<1x128xf32, #tpu.memory_space<vmem>>, vector<1x128xf32>
    %40 = vector.broadcast %39 : vector<1x128xf32> to vector<256x128xf32>
    %41 = arith.mulf %38, %40 : vector<256x128xf32>
    %c0_37 = arith.constant 0 : index
    %c0_38 = arith.constant 0 : index
    %42 = vector.load %arg4[%c0_37, %c0_38] : memref<1x128xf32, #tpu.memory_space<vmem>>, vector<1x128xf32>
    %43 = vector.broadcast %42 : vector<1x128xf32> to vector<256x128xf32>
    %44 = arith.addf %41, %43 : vector<256x128xf32>
    %cst_39 = arith.constant 0.000000e+00 : f32
    %45 = vector.broadcast %cst_39 : f32 to vector<256x128xf32>
    %46 = arith.maximumf %44, %45 : vector<256x128xf32>
    %cst_40 = arith.constant 0.000000e+00 : bf16
    %47 = vector.broadcast %cst_40 : bf16 to vector<18x18x128xbf16>
    %c0_41 = arith.constant 0 : index
    %c0_42 = arith.constant 0 : index
    %c0_43 = arith.constant 0 : index
    %48 = vector.load %arg9[%c0_41, %c0_42, %c0_43] : memref<18x18x128xbf16, #tpu.memory_space<vmem>>, vector<18x18x128xbf16>
    tpu.vector_store %arg9[%c0_41, %c0_42, %c0_43], %47 {strides = array<i32>} : memref<18x18x128xbf16, #tpu.memory_space<vmem>>, vector<18x18x128xbf16>,
    %49 = vector.shape_cast %46 : vector<256x128xf32> to vector<16x16x128xf32>
    %50 = arith.truncf %49 : vector<16x16x128xf32> to vector<16x16x128xbf16>
    %c1_44 = arith.constant 1 : index
    %c1_45 = arith.constant 1 : index
    %c0_46 = arith.constant 0 : index
    %51 = vector.load %arg9[%c1_44, %c1_45, %c0_46] : memref<18x18x128xbf16, #tpu.memory_space<vmem>>, vector<16x16x128xbf16>
    tpu.vector_store %arg9[%c1_44, %c1_45, %c0_46], %50 {strides = array<i32>} : memref<18x18x128xbf16, #tpu.memory_space<vmem>>, vector<16x16x128xbf16>,
    %c0_47 = arith.constant 0 : index
    %c1_48 = arith.constant 1 : index
    %c1_49 = arith.constant 1 : index
    %c0_50 = arith.constant 0 : index
    %52 = vector.load %arg1[%c0_47, %c1_48, %c1_49, %c0_50] : memref<1x18x18x128xf32, #tpu.memory_space<vmem>>, vector<1x16x16x128xf32>
    %53 = vector.shape_cast %52 : vector<1x16x16x128xf32> to vector<16x16x128xf32>
    %54 = vector.shape_cast %53 : vector<16x16x128xf32> to vector<256x128xf32>
    %c0_51 = arith.constant 0 : index
    %c0_52 = arith.constant 0 : index
    %c0_53 = arith.constant 0 : index
    %55 = vector.load %arg9[%c0_51, %c0_52, %c0_53] : memref<18x18x128xbf16, #tpu.memory_space<vmem>>, vector<16x16x128xbf16>
    %56 = vector.shape_cast %55 : vector<16x16x128xbf16> to vector<256x128xbf16>
    %c0_54 = arith.constant 0 : index
    %c1_55 = arith.constant 1 : index
    %c0_56 = arith.constant 0 : index
    %57 = vector.load %arg9[%c0_54, %c1_55, %c0_56] : memref<18x18x128xbf16, #tpu.memory_space<vmem>>, vector<16x16x128xbf16>
    %58 = vector.shape_cast %57 : vector<16x16x128xbf16> to vector<256x128xbf16>
    %c0_57 = arith.constant 0 : index
    %c2_58 = arith.constant 2 : index
    %c0_59 = arith.constant 0 : index
    %59 = vector.load %arg9[%c0_57, %c2_58, %c0_59] : memref<18x18x128xbf16, #tpu.memory_space<vmem>>, vector<16x16x128xbf16>
    %60 = vector.shape_cast %59 : vector<16x16x128xbf16> to vector<256x128xbf16>
    %c1_60 = arith.constant 1 : index
    %c0_61 = arith.constant 0 : index
    %c0_62 = arith.constant 0 : index
    %61 = vector.load %arg9[%c1_60, %c0_61, %c0_62] : memref<18x18x128xbf16, #tpu.memory_space<vmem>>, vector<16x16x128xbf16>
    %62 = vector.shape_cast %61 : vector<16x16x128xbf16> to vector<256x128xbf16>
    %c1_63 = arith.constant 1 : index
    %c1_64 = arith.constant 1 : index
    %c0_65 = arith.constant 0 : index
    %63 = vector.load %arg9[%c1_63, %c1_64, %c0_65] : memref<18x18x128xbf16, #tpu.memory_space<vmem>>, vector<16x16x128xbf16>
    %64 = vector.shape_cast %63 : vector<16x16x128xbf16> to vector<256x128xbf16>
    %c1_66 = arith.constant 1 : index
    %c2_67 = arith.constant 2 : index
    %c0_68 = arith.constant 0 : index
    %65 = vector.load %arg9[%c1_66, %c2_67, %c0_68] : memref<18x18x128xbf16, #tpu.memory_space<vmem>>, vector<16x16x128xbf16>
    %66 = vector.shape_cast %65 : vector<16x16x128xbf16> to vector<256x128xbf16>
    %c2_69 = arith.constant 2 : index
    %c0_70 = arith.constant 0 : index
    %c0_71 = arith.constant 0 : index
    %67 = vector.load %arg9[%c2_69, %c0_70, %c0_71] : memref<18x18x128xbf16, #tpu.memory_space<vmem>>, vector<16x16x128xbf16>
    %68 = vector.shape_cast %67 : vector<16x16x128xbf16> to vector<256x128xbf16>
    %c2_72 = arith.constant 2 : index
    %c1_73 = arith.constant 1 : index
    %c0_74 = arith.constant 0 : index
    %69 = vector.load %arg9[%c2_72, %c1_73, %c0_74] : memref<18x18x128xbf16, #tpu.memory_space<vmem>>, vector<16x16x128xbf16>
    %70 = vector.shape_cast %69 : vector<16x16x128xbf16> to vector<256x128xbf16>
    %c2_75 = arith.constant 2 : index
    %c2_76 = arith.constant 2 : index
    %c0_77 = arith.constant 0 : index
    %71 = vector.load %arg9[%c2_75, %c2_76, %c0_77] : memref<18x18x128xbf16, #tpu.memory_space<vmem>>, vector<16x16x128xbf16>
    %72 = vector.shape_cast %71 : vector<16x16x128xbf16> to vector<256x128xbf16>
    %73 = tpu.concatenate %56, %58, %60, %62, %64, %66, %68, %70, %72 in 1 : vector<256x128xbf16>, vector<256x128xbf16>, vector<256x128xbf16>, vector<256x128xbf16>, vector<256x128xbf16>, vector<256x128xbf16>, vector<256x128xbf16>, vector<256x128xbf16>, vector<256x128xbf16> -> vector<256x1152xbf16>
    %c0_78 = arith.constant 0 : index
    %c0_79 = arith.constant 0 : index
    %74 = vector.load %arg5[%c0_78, %c0_79] : memref<1152x128xbf16, #tpu.memory_space<vmem>>, vector<1152x128xbf16>
    %cst_80 = arith.constant dense<0.000000e+00> : vector<256x128xf32>
    %75 = tpu.matmul %73, %74, %cst_80 {dimension_numbers = #tpu.dot_dimension_numbers<[1], [0], [0], [1], [0, 0, 1, 1], [], []>} : vector<256x1152xbf16>, vector<1152x128xbf16>, vector<256x128xf32> -> vector<256x128xf32>
    %c0_81 = arith.constant 0 : index
    %c0_82 = arith.constant 0 : index
    %76 = vector.load %arg6[%c0_81, %c0_82] : memref<1x128xf32, #tpu.memory_space<vmem>>, vector<1x128xf32>
    %77 = vector.broadcast %76 : vector<1x128xf32> to vector<256x128xf32>
    %78 = arith.mulf %75, %77 : vector<256x128xf32>
    %c0_83 = arith.constant 0 : index
    %c0_84 = arith.constant 0 : index
    %79 = vector.load %arg7[%c0_83, %c0_84] : memref<1x128xf32, #tpu.memory_space<vmem>>, vector<1x128xf32>
    %80 = vector.broadcast %79 : vector<1x128xf32> to vector<256x128xf32>
    %81 = arith.addf %78, %80 : vector<256x128xf32>
    %82 = arith.addf %81, %54 : vector<256x128xf32>
    %cst_85 = arith.constant 0.000000e+00 : f32
    %83 = vector.broadcast %cst_85 : f32 to vector<256x128xf32>
    %84 = arith.maximumf %82, %83 : vector<256x128xf32>
    %85 = vector.shape_cast %84 : vector<256x128xf32> to vector<16x16x128xf32>
    %c0_86 = arith.constant 0 : index
    %c0_87 = arith.constant 0 : index
    %c0_88 = arith.constant 0 : index
    %c0_89 = arith.constant 0 : index
    %86 = vector.load %arg8[%c0_86, %c0_87, %c0_88, %c0_89] : memref<1x16x16x128xf32, #tpu.memory_space<vmem>>, vector<1x16x16x128xf32>
    %87 = vector.shape_cast %86 : vector<1x16x16x128xf32> to vector<16x16x128xf32>
    %88 = vector.shape_cast %85 : vector<16x16x128xf32> to vector<1x16x16x128xf32>
    tpu.vector_store %arg8[%c0_86, %c0_87, %c0_88, %c0_89], %88 {strides = array<i32>} : memref<1x16x16x128xf32, #tpu.memory_space<vmem>>, vector<1x16x16x128xf32>,
    return
  }
  func.func @transform_0(%arg0: i32) -> (i32, i32, i32, i32) {
    %c0_i32 = arith.constant 0 : i32
    %c0_i32_0 = arith.constant 0 : i32
    %c0_i32_1 = arith.constant 0 : i32
    %c0_i32_2 = arith.constant 0 : i32
    return %arg0, %c0_i32, %c0_i32_0, %c0_i32_1 : i32, i32, i32, i32
  }
  func.func @transform_1(%arg0: i32) -> (i32, i32) {
    %c0_i32 = arith.constant 0 : i32
    %c0_i32_0 = arith.constant 0 : i32
    %c0_i32_1 = arith.constant 0 : i32
    return %c0_i32, %c0_i32_0 : i32, i32
  }
  func.func @transform_2(%arg0: i32) -> (i32, i32) {
    %c0_i32 = arith.constant 0 : i32
    %c0_i32_0 = arith.constant 0 : i32
    %c0_i32_1 = arith.constant 0 : i32
    return %c0_i32, %c0_i32_0 : i32, i32
  }
  func.func @transform_3(%arg0: i32) -> (i32, i32) {
    %c0_i32 = arith.constant 0 : i32
    %c0_i32_0 = arith.constant 0 : i32
    %c0_i32_1 = arith.constant 0 : i32
    return %c0_i32, %c0_i32_0 : i32, i32
  }
  func.func @transform_4(%arg0: i32) -> (i32, i32) {
    %c0_i32 = arith.constant 0 : i32
    %c0_i32_0 = arith.constant 0 : i32
    %c0_i32_1 = arith.constant 0 : i32
    return %c0_i32, %c0_i32_0 : i32, i32
  }
  func.func @transform_5(%arg0: i32) -> (i32, i32) {
    %c0_i32 = arith.constant 0 : i32
    %c0_i32_0 = arith.constant 0 : i32
    %c0_i32_1 = arith.constant 0 : i32
    return %c0_i32, %c0_i32_0 : i32, i32
  }
  func.func @transform_6(%arg0: i32) -> (i32, i32) {
    %c0_i32 = arith.constant 0 : i32
    %c0_i32_0 = arith.constant 0 : i32
    %c0_i32_1 = arith.constant 0 : i32
    return %c0_i32, %c0_i32_0 : i32, i32
  }
  func.func @transform_7(%arg0: i32) -> (i32, i32, i32, i32) {
    %c0_i32 = arith.constant 0 : i32
    %c0_i32_0 = arith.constant 0 : i32
    %c0_i32_1 = arith.constant 0 : i32
    %c0_i32_2 = arith.constant 0 : i32
    return %arg0, %c0_i32, %c0_i32_0, %c0_i32_1 : i32, i32, i32, i32
  }
}

</mosaic_0001>

<llo_original>
// kernel: tpu_custom_call.1
$region0: #{tpu_custom_call.1}
  #allocation0 [shape = 'u32[]', space=smem, size = 0x4, offset = 0x4, fixed_abs, tag = 'smem constant byte address 0x4 - core index']
  #allocation1 [shape = 'u32[144,128]{1,0:T(1,128)}', space=vmem, size = 0x12000, scoped, tag = 'internal scratch']
  #allocation2 [shape = 'bf16[18,18,128]{2,1,0:T(8,128)(2,1)}', space=vmem, size = 0x1b000, scoped, tag = 'scratch operand']
  %s0 = inlined_call_operand.vmem [shape: f32[2,18,18,128], index: 0, kind: input, shape index: {}]
  %s1 = inlined_call_operand.vmem [shape: bf16[1152,128], index: 1, kind: input, shape index: {}]
  %s2 = inlined_call_operand.vmem [shape: f32[1,128], index: 2, kind: input, shape index: {}]
  %s3 = inlined_call_operand.vmem [shape: f32[1,128], index: 3, kind: input, shape index: {}]
  %s4 = inlined_call_operand.vmem [shape: bf16[1152,128], index: 4, kind: input, shape index: {}]
  %s5 = inlined_call_operand.vmem [shape: f32[1,128], index: 5, kind: input, shape index: {}]
  %s6 = inlined_call_operand.vmem [shape: f32[1,128], index: 6, kind: input, shape index: {}]
  %s7 = inlined_call_operand.hbm [shape: f32[2,16,16,128], index: 7, kind: output, shape index: {}]
  %s8 = sld [smem:[#allocation0]]
  $region61: #{tpu_custom_call.1} parent=0
    _
  %s10 = ssub.s32 1, %s8
  %s11 = scalar_select 0, %s10, %s8
  $region1: #{tpu_custom_call.1} parent=0
    #allocation3 [shape = 'u8[262144]{0}', space=vmem, size = 0x40000, scoped, tag = 'output window, operand 0']
    #allocation4 [shape = 's32[2]{0}', space=sflag, size = 0x8, scoped, tag = 'scoped memory for tpu_custom_call.1']
    %12 = vsyncpa [#allocation4], 0
    %s13 = scalar_lea.sflag [#allocation4], 1
    %14 = vsyncpa %s13, 0
    loop: start=0, step=1, limit=4
    $region2: #{tpu_custom_call.1} parent=1 // loop_pre_header
      _
    $region3: #{tpu_custom_call.1} parent=1 // loop_header
      %s16 = sphi 0, %s20
      %p17 = scmp.ge.s32.totalorder %s16, 4
      %s26 = sphi 0, %s28
      %s29 = sphi 0, %s26
      %s30 = sphi 0, %s29
      %s46 = sphi 0, %s30
      %s50 = sphi 0, %s50
      %s52 = sphi 0, %s50
      %s53 = sphi 0, %s52
      %s67 = sphi 0, %s53
      %s71 = sphi 0, %s71
      %s73 = sphi 0, %s71
      %s74 = sphi 0, %s73
      %s88 = sphi 0, %s74
      %s92 = sphi 0, %s92
      %s94 = sphi 0, %s92
      %s95 = sphi 0, %s94
      %s109 = sphi 0, %s95
      %s113 = sphi 0, %s113
      %s115 = sphi 0, %s113
      %s116 = sphi 0, %s115
      %s130 = sphi 0, %s116
      %s134 = sphi 0, %s134
      %s136 = sphi 0, %s134
      %s137 = sphi 0, %s136
      %s151 = sphi 0, %s137
      %s155 = sphi 0, %s155
      %s157 = sphi 0, %s155
      %s158 = sphi 0, %s157
      %s172 = sphi 0, %s158
      %s178 = sphi 0, %s180
      %s181 = sphi 0, %s178
      %s182 = sphi 0, %s181
      %s198 = sphi 0, %s182
    $region4: #{tpu_custom_call.1} parent=1 // loop_header_branch
      %19 = sbr.rel (%p17) target = $region8
    $region5: #{tpu_custom_call.1} parent=1 // loop_body
      %s21 = ssub.s32 %s16, 1
      %s22 = ssub.s32 %s16, 2
      %s23 = sadd.s32 %s16, 1
      %s24 = ssub.s32 %s16, %s23
      %p25 = scmp.eq.s32.totalorder %s24, 0
      %s27 = sadd.s32 %s26, 1
      %s28 = scalar_select %p25, %s26, %s27
      %p31 = pneg %p25
      %p32 = scmp.eq.s32.totalorder %s16, 1
      %p33 = por %p31, %p32
      %p34 = scmp.ne.s32.totalorder %s26, %s29
      %p35 = scmp.eq.s32.totalorder %s16, 0
      %p36 = por %p34, %p35
      %p37 = scmp.ne.s32.totalorder %s26, %s29
      %p38 = scmp.eq.s32.totalorder %s21, 1
      %p39 = por %p37, %p38
      %p40 = scmp.ne.s32.totalorder %s29, %s30
      %p41 = scmp.eq.s32.totalorder %s21, 0
      %p42 = por %p40, %p41
      %p43 = scmp.ne.s32.totalorder %s29, %s30
      %p44 = scmp.eq.s32.totalorder %s22, 1
      %p45 = por %p43, %p44
      %p47 = scmp.ne.s32.totalorder %s30, %s46
      %p48 = scmp.eq.s32.totalorder %s22, 0
      %p49 = por %p47, %p48
      %s51 = sadd.s32 %s50, 1
      %p54 = scmp.eq.s32.totalorder %s16, 1
      %p55 = scmp.ne.s32.totalorder %s50, %s52
      %p56 = scmp.eq.s32.totalorder %s16, 0
      %p57 = por %p55, %p56
      %p58 = scmp.ne.s32.totalorder %s50, %s52
      %p59 = scmp.eq.s32.totalorder %s21, 1
      %p60 = por %p58, %p59
      %p61 = scmp.ne.s32.totalorder %s52, %s53
      %p62 = scmp.eq.s32.totalorder %s21, 0
      %p63 = por %p61, %p62
      %p64 = scmp.ne.s32.totalorder %s52, %s53
      %p65 = scmp.eq.s32.totalorder %s22, 1
      %p66 = por %p64, %p65
      %p68 = scmp.ne.s32.totalorder %s53, %s67
      %p69 = scmp.eq.s32.totalorder %s22, 0
      %p70 = por %p68, %p69
      %s72 = sadd.s32 %s71, 1
      %p75 = scmp.eq.s32.totalorder %s16, 1
      %p76 = scmp.ne.s32.totalorder %s71, %s73
      %p77 = scmp.eq.s32.totalorder %s16, 0
      %p78 = por %p76, %p77
      %p79 = scmp.ne.s32.totalorder %s71, %s73
      %p80 = scmp.eq.s32.totalorder %s21, 1
      %p81 = por %p79, %p80
      %p82 = scmp.ne.s32.totalorder %s73, %s74
      %p83 = scmp.eq.s32.totalorder %s21, 0
      %p84 = por %p82, %p83
      %p85 = scmp.ne.s32.totalorder %s73, %s74
      %p86 = scmp.eq.s32.totalorder %s22, 1
      %p87 = por %p85, %p86
      %p89 = scmp.ne.s32.totalorder %s74, %s88
      %p90 = scmp.eq.s32.totalorder %s22, 0
      %p91 = por %p89, %p90
      %s93 = sadd.s32 %s92, 1
      %p96 = scmp.eq.s32.totalorder %s16, 1
      %p97 = scmp.ne.s32.totalorder %s92, %s94
      %p98 = scmp.eq.s32.totalorder %s16, 0
      %p99 = por %p97, %p98
      %p100 = scmp.ne.s32.totalorder %s92, %s94
      %p101 = scmp.eq.s32.totalorder %s21, 1
      %p102 = por %p100, %p101
      %p103 = scmp.ne.s32.totalorder %s94, %s95
      %p104 = scmp.eq.s32.totalorder %s21, 0
      %p105 = por %p103, %p104
      %p106 = scmp.ne.s32.totalorder %s94, %s95
      %p107 = scmp.eq.s32.totalorder %s22, 1
      %p108 = por %p106, %p107
      %p110 = scmp.ne.s32.totalorder %s95, %s109
      %p111 = scmp.eq.s32.totalorder %s22, 0
      %p112 = por %p110, %p111
      %s114 = sadd.s32 %s113, 1
      %p117 = scmp.eq.s32.totalorder %s16, 1
      %p118 = scmp.ne.s32.totalorder %s113, %s115
      %p119 = scmp.eq.s32.totalorder %s16, 0
      %p120 = por %p118, %p119
      %p121 = scmp.ne.s32.totalorder %s113, %s115
      %p122 = scmp.eq.s32.totalorder %s21, 1
      %p123 = por %p121, %p122
      %p124 = scmp.ne.s32.totalorder %s115, %s116
      %p125 = scmp.eq.s32.totalorder %s21, 0
      %p126 = por %p124, %p125
      %p127 = scmp.ne.s32.totalorder %s115, %s116
      %p128 = scmp.eq.s32.totalorder %s22, 1
      %p129 = por %p127, %p128
      %p131 = scmp.ne.s32.totalorder %s116, %s130
      %p132 = scmp.eq.s32.totalorder %s22, 0
      %p133 = por %p131, %p132
      %s135 = sadd.s32 %s134, 1
      %p138 = scmp.eq.s32.totalorder %s16, 1
      %p139 = scmp.ne.s32.totalorder %s134, %s136
      %p140 = scmp.eq.s32.totalorder %s16, 0
      %p141 = por %p139, %p140
      %p142 = scmp.ne.s32.totalorder %s134, %s136
      %p143 = scmp.eq.s32.totalorder %s21, 1
      %p144 = por %p142, %p143
      %p145 = scmp.ne.s32.totalorder %s136, %s137
      %p146 = scmp.eq.s32.totalorder %s21, 0
      %p147 = por %p145, %p146
      %p148 = scmp.ne.s32.totalorder %s136, %s137
      %p149 = scmp.eq.s32.totalorder %s22, 1
      %p150 = por %p148, %p149
      %p152 = scmp.ne.s32.totalorder %s137, %s151
      %p153 = scmp.eq.s32.totalorder %s22, 0
      %p154 = por %p152, %p153
      %s156 = sadd.s32 %s155, 1
      %p159 = scmp.eq.s32.totalorder %s16, 1
      %p160 = scmp.ne.s32.totalorder %s155, %s157
      %p161 = scmp.eq.s32.totalorder %s16, 0
      %p162 = por %p160, %p161
      %p163 = scmp.ne.s32.totalorder %s155, %s157
      %p164 = scmp.eq.s32.totalorder %s21, 1
      %p165 = por %p163, %p164
      %p166 = scmp.ne.s32.totalorder %s157, %s158
      %p167 = scmp.eq.s32.totalorder %s21, 0
      %p168 = por %p166, %p167
      %p169 = scmp.ne.s32.totalorder %s157, %s158
      %p170 = scmp.eq.s32.totalorder %s22, 1
      %p171 = por %p169, %p170
      %p173 = scmp.ne.s32.totalorder %s158, %s172
      %p174 = scmp.eq.s32.totalorder %s22, 0
      %p175 = por %p173, %p174
      %s176 = ssub.s32 %s16, %s23
      %p177 = scmp.eq.s32.totalorder %s176, 0
      %s179 = sadd.s32 %s178, 1
      %s180 = scalar_select %p177, %s178, %s179
      %p183 = pneg %p177
      %p184 = scmp.eq.s32.totalorder %s16, 1
      %p185 = por %p183, %p184
      %p186 = scmp.ne.s32.totalorder %s178, %s181
      %p187 = scmp.eq.s32.totalorder %s16, 0
      %p188 = por %p186, %p187
      %p189 = scmp.ne.s32.totalorder %s178, %s181
      %p190 = scmp.eq.s32.totalorder %s21, 1
      %p191 = por %p189, %p190
      %p192 = scmp.ne.s32.totalorder %s181, %s182
      %p193 = scmp.eq.s32.totalorder %s21, 0
      %p194 = por %p192, %p193
      %p195 = scmp.ne.s32.totalorder %s181, %s182
      %p196 = scmp.eq.s32.totalorder %s22, 1
      %p197 = por %p195, %p196
      %p199 = scmp.ne.s32.totalorder %s182, %s198
      %p200 = scmp.eq.s32.totalorder %s22, 0
      %p201 = por %p199, %p200
      %p202 = scmp.le.s32.totalorder 1, %s16
      %p203 = scmp.lt.s32.totalorder %s16, 3
      %p204 = pnand %p202, %p203
      %p205 = pneg %p204
      // Predicated region
      $region9: #{tpu_custom_call.1} parent=5 // pred_check
        _
      $region10: #{tpu_custom_call.1} parent=5 // pred_check_branch
        %207 = sbr.rel (%p204) target = $region12
      $region11: #{tpu_custom_call.1} parent=5 // pred_region
        %s208 = ssub.s32 %s16, 1
        // Predicated region
        $region13: #{tpu_custom_call.1} parent=11 // pred_check
          %p209 = pneg %p63
        $region14: #{tpu_custom_call.1} parent=11 // pred_check_branch
          %211 = sbr.rel (%p209) target = $region16
        $region15: #{tpu_custom_call.1} parent=11 // pred_region
          _
        $region16: #{tpu_custom_call.1} parent=11 // pred_fallthru
          _
        // Predicated region
        $region17: #{tpu_custom_call.1} parent=11 // pred_check
          %p212 = pneg %p84
        $region18: #{tpu_custom_call.1} parent=11 // pred_check_branch
          %214 = sbr.rel (%p212) target = $region20
        $region19: #{tpu_custom_call.1} parent=11 // pred_region
          _
        $region20: #{tpu_custom_call.1} parent=11 // pred_fallthru
          _
        // Predicated region
        $region21: #{tpu_custom_call.1} parent=11 // pred_check
          %p215 = pneg %p105
        $region22: #{tpu_custom_call.1} parent=11 // pred_check_branch
          %217 = sbr.rel (%p215) target = $region24
        $region23: #{tpu_custom_call.1} parent=11 // pred_region
          _
        $region24: #{tpu_custom_call.1} parent=11 // pred_fallthru
          _
        // Predicated region
        $region25: #{tpu_custom_call.1} parent=11 // pred_check
          %p218 = pneg %p126
        $region26: #{tpu_custom_call.1} parent=11 // pred_check_branch
          %220 = sbr.rel (%p218) target = $region28
        $region27: #{tpu_custom_call.1} parent=11 // pred_region
          _
        $region28: #{tpu_custom_call.1} parent=11 // pred_fallthru
          _
        // Predicated region
        $region29: #{tpu_custom_call.1} parent=11 // pred_check
          %p221 = pneg %p147
        $region30: #{tpu_custom_call.1} parent=11 // pred_check_branch
          %223 = sbr.rel (%p221) target = $region32
        $region31: #{tpu_custom_call.1} parent=11 // pred_region
          _
        $region32: #{tpu_custom_call.1} parent=11 // pred_fallthru
          _
        // Predicated region
        $region33: #{tpu_custom_call.1} parent=11 // pred_check
          %p224 = pneg %p168
        $region34: #{tpu_custom_call.1} parent=11 // pred_check_branch
          %226 = sbr.rel (%p224) target = $region36
        $region35: #{tpu_custom_call.1} parent=11 // pred_region
          _
        $region36: #{tpu_custom_call.1} parent=11 // pred_fallthru
          _
      $region12: #{tpu_custom_call.1} parent=5 // pred_fallthru
        _
      %p227 = scmp.lt.s32.totalorder %s16, 2
      // Predicated region
      $region37: #{tpu_custom_call.1} parent=5 // pred_check
        %p228 = pneg %p227
      $region38: #{tpu_custom_call.1} parent=5 // pred_check_branch
        %230 = sbr.rel (%p228) target = $region40
      $region39: #{tpu_custom_call.1} parent=5 // pred_region
        // Predicated region
        $region41: #{tpu_custom_call.1} parent=39 // pred_check
          %p231 = pneg %p36
        $region42: #{tpu_custom_call.1} parent=39 // pred_check_branch
          %233 = sbr.rel (%p231) target = $region44
        $region43: #{tpu_custom_call.1} parent=39 // pred_region
          %p234 = scmp.lt.s32.totalorder %s16, 1
          %s235 = scalar_select %p234, %s16, 1
          %s236 = smul.addr %s235, 54
          %s237 = smul.addr %s236, 8
          %s238 = scalar_lea.vmem %s0, %s237
        $region44: #{tpu_custom_call.1} parent=39 // pred_fallthru
          _
      $region40: #{tpu_custom_call.1} parent=5 // pred_fallthru
        _
      %p239 = scmp.le.s32.totalorder 1, %s16
      %p240 = scmp.lt.s32.totalorder %s16, 3
      %p241 = pnand %p239, %p240
      %p242 = pneg %p241
      // Predicated region
      $region45: #{tpu_custom_call.1} parent=5 // pred_check
        _
      $region46: #{tpu_custom_call.1} parent=5 // pred_check_branch
        %244 = sbr.rel (%p241) target = $region48
      $region47: #{tpu_custom_call.1} parent=5 // pred_region
        %s245 = ssub.s32 %s16, 1
        %p246 = scmp.lt.s32.totalorder %s21, 1
        %s247 = scalar_select %p246, %s21, 1
        %s248 = smul.addr %s247, 54
        %s249 = smul.addr %s248, 8
        %s250 = scalar_lea.vmem %s0, %s249
        %p251 = pneg %p42
        %p252 = pneg %p39
        %p253 = pneg %p63
        %p254 = pneg %p60
        %p255 = pneg %p84
        %p256 = pneg %p81
        %p257 = pneg %p105
        %p258 = pneg %p102
        %p259 = pneg %p126
        %p260 = pneg %p123
        %p261 = pneg %p147
        %p262 = pneg %p144
        %p263 = pneg %p168
        %p264 = pneg %p165
        %p265 = pneg %p194
        %p266 = pneg %p191
        %s267 = sand.u32 %s181, 1
        %s268 = scalar_lea.sflag [#allocation4], %s267
        %s269 = sand.u32 %s181, 1
        %s270 = smul.addr %s269, 256
        %s271 = scalar_lea.vmem [#allocation3], %s270
        %p272 = scmp.lt.s32.totalorder %s21, 1
        %s273 = scalar_select %p272, %s21, 1
        %s274 = smul.addr %s273, 54
        %s275 = smul.addr %s274, 8
        %s276 = scalar_lea.vmem %s0, %s275
        %v278 = vld [vmem:[%s276] sm:$0xff]
        %v279 = vld [vmem:[%s276 + $0x8] sm:$0xff]
        %v280 = vld [vmem:[%s276 + $0x18] sm:$0xff]
        %v281 = vld [vmem:[%s276 + $0x20] sm:$0xff]
        %v282 = vld [vmem:[%s276 + $0x30] sm:$0xff]
        %v283 = vld [vmem:[%s276 + $0x38] sm:$0xff]
        %v284 = vld [vmem:[%s276 + $0x48] sm:$0xff]
        %v285 = vld [vmem:[%s276 + $0x50] sm:$0xff]
        %v286 = vld [vmem:[%s276 + $0x60] sm:$0xff]
        %v287 = vld [vmem:[%s276 + $0x68] sm:$0xff]
        %v288 = vld [vmem:[%s276 + $0x78] sm:$0xff]
        %v289 = vld [vmem:[%s276 + $0x80] sm:$0xff]
        %v290 = vld [vmem:[%s276 + $0x90] sm:$0xff]
        %v291 = vld [vmem:[%s276 + $0x98] sm:$0xff]
        %v292 = vld [vmem:[%s276 + $0xa8] sm:$0xff]
        %v293 = vld [vmem:[%s276 + $0xb0] sm:$0xff]
        %v294 = vld [vmem:[%s276 + $0xc0] sm:$0xff]
        %v295 = vld [vmem:[%s276 + $0xc8] sm:$0xff]
        %v296 = vld [vmem:[%s276 + $0xd8] sm:$0xff]
        %v297 = vld [vmem:[%s276 + $0xe0] sm:$0xff]
        %v298 = vld [vmem:[%s276 + $0xf0] sm:$0xff]
        %v299 = vld [vmem:[%s276 + $0xf8] sm:$0xff]
        %v300 = vld [vmem:[%s276 + $0x108] sm:$0xff]
        %v301 = vld [vmem:[%s276 + $0x110] sm:$0xff]
        %v302 = vld [vmem:[%s276 + $0x120] sm:$0xff]
        %v303 = vld [vmem:[%s276 + $0x128] sm:$0xff]
        %v304 = vld [vmem:[%s276 + $0x138] sm:$0xff]
        %v305 = vld [vmem:[%s276 + $0x140] sm:$0xff]
        %v306 = vld [vmem:[%s276 + $0x150] sm:$0xff]
        %v307 = vld [vmem:[%s276 + $0x158] sm:$0xff]
        %v308 = vld [vmem:[%s276 + $0x168] sm:$0xff]
        %v309 = vld [vmem:[%s276 + $0x170] sm:$0xff]
        %v310 = vpack.c.bf16 %v279, %v278
        %v311 = vpack.c.bf16 %v281, %v280
        %v312 = vpack.c.bf16 %v283, %v282
        %v313 = vpack.c.bf16 %v285, %v284
        %v314 = vpack.c.bf16 %v287, %v286
        %v315 = vpack.c.bf16 %v289, %v288
        %v316 = vpack.c.bf16 %v291, %v290
        %v317 = vpack.c.bf16 %v293, %v292
        %v318 = vpack.c.bf16 %v295, %v294
        %v319 = vpack.c.bf16 %v297, %v296
        %v320 = vpack.c.bf16 %v299, %v298
        %v321 = vpack.c.bf16 %v301, %v300
        %v322 = vpack.c.bf16 %v303, %v302
        %v323 = vpack.c.bf16 %v305, %v304
        %v324 = vpack.c.bf16 %v307, %v306
        %v325 = vpack.c.bf16 %v309, %v308
        %v326 = vld [vmem:[%s276 + $0x1] sm:$0xff]
        %v327 = vld [vmem:[%s276 + $0x9] sm:$0xff]
        %v328 = vld [vmem:[%s276 + $0x19] sm:$0xff]
        %v329 = vld [vmem:[%s276 + $0x21] sm:$0xff]
        %v330 = vld [vmem:[%s276 + $0x31] sm:$0xff]
        %v331 = vld [vmem:[%s276 + $0x39] sm:$0xff]
        %v332 = vld [vmem:[%s276 + $0x49] sm:$0xff]
        %v333 = vld [vmem:[%s276 + $0x51] sm:$0xff]
        %v334 = vld [vmem:[%s276 + $0x61] sm:$0xff]
        %v335 = vld [vmem:[%s276 + $0x69] sm:$0xff]
        %v336 = vld [vmem:[%s276 + $0x79] sm:$0xff]
        %v337 = vld [vmem:[%s276 + $0x81] sm:$0xff]
        %v338 = vld [vmem:[%s276 + $0x91] sm:$0xff]
        %v339 = vld [vmem:[%s276 + $0x99] sm:$0xff]
        %v340 = vld [vmem:[%s276 + $0xa9] sm:$0xff]
        %v341 = vld [vmem:[%s276 + $0xb1] sm:$0xff]
        %v342 = vld [vmem:[%s276 + $0xc1] sm:$0xff]
        %v343 = vld [vmem:[%s276 + $0xc9] sm:$0xff]
        %v344 = vld [vmem:[%s276 + $0xd9] sm:$0xff]
        %v345 = vld [vmem:[%s276 + $0xe1] sm:$0xff]
        %v346 = vld [vmem:[%s276 + $0xf1] sm:$0xff]
        %v347 = vld [vmem:[%s276 + $0xf9] sm:$0xff]
        %v348 = vld [vmem:[%s276 + $0x109] sm:$0xff]
        %v349 = vld [vmem:[%s276 + $0x111] sm:$0xff]
        %v350 = vld [vmem:[%s276 + $0x121] sm:$0xff]
        %v351 = vld [vmem:[%s276 + $0x129] sm:$0xff]
        %v352 = vld [vmem:[%s276 + $0x139] sm:$0xff]
        %v353 = vld [vmem:[%s276 + $0x141] sm:$0xff]
        %v354 = vld [vmem:[%s276 + $0x151] sm:$0xff]
        %v355 = vld [vmem:[%s276 + $0x159] sm:$0xff]
        %v356 = vld [vmem:[%s276 + $0x169] sm:$0xff]
        %v357 = vld [vmem:[%s276 + $0x171] sm:$0xff]
        %v358 = vpack.c.bf16 %v327, %v326
        %v359 = vpack.c.bf16 %v329, %v328
        %v360 = vpack.c.bf16 %v331, %v330
        %v361 = vpack.c.bf16 %v333, %v332
        %v362 = vpack.c.bf16 %v335, %v334
        %v363 = vpack.c.bf16 %v337, %v336
        %v364 = vpack.c.bf16 %v339, %v338
        %v365 = vpack.c.bf16 %v341, %v340
        %v366 = vpack.c.bf16 %v343, %v342
        %v367 = vpack.c.bf16 %v345, %v344
        %v368 = vpack.c.bf16 %v347, %v346
        %v369 = vpack.c.bf16 %v349, %v348
        %v370 = vpack.c.bf16 %v351, %v350
        %v371 = vpack.c.bf16 %v353, %v352
        %v372 = vpack.c.bf16 %v355, %v354
        %v373 = vpack.c.bf16 %v357, %v356
        %v374 = vld [vmem:[%s276 + $0x2] sm:$0xff]
        %v375 = vld [vmem:[%s276 + $0xa] sm:$0xff]
        %v376 = vld [vmem:[%s276 + $0x1a] sm:$0xff]
        %v377 = vld [vmem:[%s276 + $0x22] sm:$0xff]
        %v378 = vld [vmem:[%s276 + $0x32] sm:$0xff]
        %v379 = vld [vmem:[%s276 + $0x3a] sm:$0xff]
        %v380 = vld [vmem:[%s276 + $0x4a] sm:$0xff]
        %v381 = vld [vmem:[%s276 + $0x52] sm:$0xff]
        %v382 = vld [vmem:[%s276 + $0x62] sm:$0xff]
        %v383 = vld [vmem:[%s276 + $0x6a] sm:$0xff]
        %v384 = vld [vmem:[%s276 + $0x7a] sm:$0xff]
        %v385 = vld [vmem:[%s276 + $0x82] sm:$0xff]
        %v386 = vld [vmem:[%s276 + $0x92] sm:$0xff]
        %v387 = vld [vmem:[%s276 + $0x9a] sm:$0xff]
        %v388 = vld [vmem:[%s276 + $0xaa] sm:$0xff]
        %v389 = vld [vmem:[%s276 + $0xb2] sm:$0xff]
        %v390 = vld [vmem:[%s276 + $0xc2] sm:$0xff]
        %v391 = vld [vmem:[%s276 + $0xca] sm:$0xff]
        %v392 = vld [vmem:[%s276 + $0xda] sm:$0xff]
        %v393 = vld [vmem:[%s276 + $0xe2] sm:$0xff]
        %v394 = vld [vmem:[%s276 + $0xf2] sm:$0xff]
        %v395 = vld [vmem:[%s276 + $0xfa] sm:$0xff]
        %v396 = vld [vmem:[%s276 + $0x10a] sm:$0xff]
        %v397 = vld [vmem:[%s276 + $0x112] sm:$0xff]
        %v398 = vld [vmem:[%s276 + $0x122] sm:$0xff]
        %v399 = vld [vmem:[%s276 + $0x12a] sm:$0xff]
        %v400 = vld [vmem:[%s276 + $0x13a] sm:$0xff]
        %v401 = vld [vmem:[%s276 + $0x142] sm:$0xff]
        %v402 = vld [vmem:[%s276 + $0x152] sm:$0xff]
        %v403 = vld [vmem:[%s276 + $0x15a] sm:$0xff]
        %v404 = vld [vmem:[%s276 + $0x16a] sm:$0xff]
        %v405 = vld [vmem:[%s276 + $0x172] sm:$0xff]
        %v406 = vpack.c.bf16 %v375, %v374
        %v407 = vpack.c.bf16 %v377, %v376
        %v408 = vpack.c.bf16 %v379, %v378
        %v409 = vpack.c.bf16 %v381, %v380
        %v410 = vpack.c.bf16 %v383, %v382
        %v411 = vpack.c.bf16 %v385, %v384
        %v412 = vpack.c.bf16 %v387, %v386
        %v413 = vpack.c.bf16 %v389, %v388
        %v414 = vpack.c.bf16 %v391, %v390
        %v415 = vpack.c.bf16 %v393, %v392
        %v416 = vpack.c.bf16 %v395, %v394
        %v417 = vpack.c.bf16 %v397, %v396
        %v418 = vpack.c.bf16 %v399, %v398
        %v419 = vpack.c.bf16 %v401, %v400
        %v420 = vpack.c.bf16 %v403, %v402
        %v421 = vpack.c.bf16 %v405, %v404
        %s422 = scalar_lea.vmem %s276, 24
        %v423 = vld [vmem:[%s422] sm:$0xff]
        %v424 = vld [vmem:[%s422 + $0x8] sm:$0xff]
        %v425 = vld [vmem:[%s422 + $0x18] sm:$0xff]
        %v426 = vld [vmem:[%s422 + $0x20] sm:$0xff]
        %v427 = vld [vmem:[%s422 + $0x30] sm:$0xff]
        %v428 = vld [vmem:[%s422 + $0x38] sm:$0xff]
        %v429 = vld [vmem:[%s422 + $0x48] sm:$0xff]
        %v430 = vld [vmem:[%s422 + $0x50] sm:$0xff]
        %v431 = vld [vmem:[%s422 + $0x60] sm:$0xff]
        %v432 = vld [vmem:[%s422 + $0x68] sm:$0xff]
        %v433 = vld [vmem:[%s422 + $0x78] sm:$0xff]
        %v434 = vld [vmem:[%s422 + $0x80] sm:$0xff]
        %v435 = vld [vmem:[%s422 + $0x90] sm:$0xff]
        %v436 = vld [vmem:[%s422 + $0x98] sm:$0xff]
        %v437 = vld [vmem:[%s422 + $0xa8] sm:$0xff]
        %v438 = vld [vmem:[%s422 + $0xb0] sm:$0xff]
        %v439 = vld [vmem:[%s422 + $0xc0] sm:$0xff]
        %v440 = vld [vmem:[%s422 + $0xc8] sm:$0xff]
        %v441 = vld [vmem:[%s422 + $0xd8] sm:$0xff]
        %v442 = vld [vmem:[%s422 + $0xe0] sm:$0xff]
        %v443 = vld [vmem:[%s422 + $0xf0] sm:$0xff]
        %v444 = vld [vmem:[%s422 + $0xf8] sm:$0xff]
        %v445 = vld [vmem:[%s422 + $0x108] sm:$0xff]
        %v446 = vld [vmem:[%s422 + $0x110] sm:$0xff]
        %v447 = vld [vmem:[%s422 + $0x120] sm:$0xff]
        %v448 = vld [vmem:[%s422 + $0x128] sm:$0xff]
        %v449 = vld [vmem:[%s422 + $0x138] sm:$0xff]
        %v450 = vld [vmem:[%s422 + $0x140] sm:$0xff]
        %v451 = vld [vmem:[%s422 + $0x150] sm:$0xff]
        %v452 = vld [vmem:[%s422 + $0x158] sm:$0xff]
        %v453 = vld [vmem:[%s422 + $0x168] sm:$0xff]
        %v454 = vld [vmem:[%s422 + $0x170] sm:$0xff]
        %v455 = vpack.c.bf16 %v424, %v423
        %v456 = vpack.c.bf16 %v426, %v425
        %v457 = vpack.c.bf16 %v428, %v427
        %v458 = vpack.c.bf16 %v430, %v429
        %v459 = vpack.c.bf16 %v432, %v431
        %v460 = vpack.c.bf16 %v434, %v433
        %v461 = vpack.c.bf16 %v436, %v435
        %v462 = vpack.c.bf16 %v438, %v437
        %v463 = vpack.c.bf16 %v440, %v439
        %v464 = vpack.c.bf16 %v442, %v441
        %v465 = vpack.c.bf16 %v444, %v443
        %v466 = vpack.c.bf16 %v446, %v445
        %v467 = vpack.c.bf16 %v448, %v447
        %v468 = vpack.c.bf16 %v450, %v449
        %v469 = vpack.c.bf16 %v452, %v451
        %v470 = vpack.c.bf16 %v454, %v453
        %v471 = vld [vmem:[%s422 + $0x1] sm:$0xff]
        %v472 = vld [vmem:[%s422 + $0x9] sm:$0xff]
        %v473 = vld [vmem:[%s422 + $0x19] sm:$0xff]
        %v474 = vld [vmem:[%s422 + $0x21] sm:$0xff]
        %v475 = vld [vmem:[%s422 + $0x31] sm:$0xff]
        %v476 = vld [vmem:[%s422 + $0x39] sm:$0xff]
        %v477 = vld [vmem:[%s422 + $0x49] sm:$0xff]
        %v478 = vld [vmem:[%s422 + $0x51] sm:$0xff]
        %v479 = vld [vmem:[%s422 + $0x61] sm:$0xff]
        %v480 = vld [vmem:[%s422 + $0x69] sm:$0xff]
        %v481 = vld [vmem:[%s422 + $0x79] sm:$0xff]
        %v482 = vld [vmem:[%s422 + $0x81] sm:$0xff]
        %v483 = vld [vmem:[%s422 + $0x91] sm:$0xff]
        %v484 = vld [vmem:[%s422 + $0x99] sm:$0xff]
        %v485 = vld [vmem:[%s422 + $0xa9] sm:$0xff]
        %v486 = vld [vmem:[%s422 + $0xb1] sm:$0xff]
        %v487 = vld [vmem:[%s422 + $0xc1] sm:$0xff]
        %v488 = vld [vmem:[%s422 + $0xc9] sm:$0xff]
        %v489 = vld [vmem:[%s422 + $0xd9] sm:$0xff]
        %v490 = vld [vmem:[%s422 + $0xe1] sm:$0xff]
        %v491 = vld [vmem:[%s422 + $0xf1] sm:$0xff]
        %v492 = vld [vmem:[%s422 + $0xf9] sm:$0xff]
        %v493 = vld [vmem:[%s422 + $0x109] sm:$0xff]
        %v494 = vld [vmem:[%s422 + $0x111] sm:$0xff]
        %v495 = vld [vmem:[%s422 + $0x121] sm:$0xff]
        %v496 = vld [vmem:[%s422 + $0x129] sm:$0xff]
        %v497 = vld [vmem:[%s422 + $0x139] sm:$0xff]
        %v498 = vld [vmem:[%s422 + $0x141] sm:$0xff]
        %v499 = vld [vmem:[%s422 + $0x151] sm:$0xff]
        %v500 = vld [vmem:[%s422 + $0x159] sm:$0xff]
        %v501 = vld [vmem:[%s422 + $0x169] sm:$0xff]
        %v502 = vld [vmem:[%s422 + $0x171] sm:$0xff]
        %v503 = vpack.c.bf16 %v472, %v471
        %v504 = vpack.c.bf16 %v474, %v473
        %v505 = vpack.c.bf16 %v476, %v475
        %v506 = vpack.c.bf16 %v478, %v477
        %v507 = vpack.c.bf16 %v480, %v479
        %v508 = vpack.c.bf16 %v482, %v481
        %v509 = vpack.c.bf16 %v484, %v483
        %v510 = vpack.c.bf16 %v486, %v485
        %v511 = vpack.c.bf16 %v488, %v487
        %v512 = vpack.c.bf16 %v490, %v489
        %v513 = vpack.c.bf16 %v492, %v491
        %v514 = vpack.c.bf16 %v494, %v493
        %v515 = vpack.c.bf16 %v496, %v495
        %v516 = vpack.c.bf16 %v498, %v497
        %v517 = vpack.c.bf16 %v500, %v499
        %v518 = vpack.c.bf16 %v502, %v501
        %v519 = vld [vmem:[%s422 + $0x2] sm:$0xff]
        %v520 = vld [vmem:[%s422 + $0xa] sm:$0xff]
        %v521 = vld [vmem:[%s422 + $0x1a] sm:$0xff]
        %v522 = vld [vmem:[%s422 + $0x22] sm:$0xff]
        %v523 = vld [vmem:[%s422 + $0x32] sm:$0xff]
        %v524 = vld [vmem:[%s422 + $0x3a] sm:$0xff]
        %v525 = vld [vmem:[%s422 + $0x4a] sm:$0xff]
        %v526 = vld [vmem:[%s422 + $0x52] sm:$0xff]
        %v527 = vld [vmem:[%s422 + $0x62] sm:$0xff]
        %v528 = vld [vmem:[%s422 + $0x6a] sm:$0xff]
        %v529 = vld [vmem:[%s422 + $0x7a] sm:$0xff]
        %v530 = vld [vmem:[%s422 + $0x82] sm:$0xff]
        %v531 = vld [vmem:[%s422 + $0x92] sm:$0xff]
        %v532 = vld [vmem:[%s422 + $0x9a] sm:$0xff]
        %v533 = vld [vmem:[%s422 + $0xaa] sm:$0xff]
        %v534 = vld [vmem:[%s422 + $0xb2] sm:$0xff]
        %v535 = vld [vmem:[%s422 + $0xc2] sm:$0xff]
        %v536 = vld [vmem:[%s422 + $0xca] sm:$0xff]
        %v537 = vld [vmem:[%s422 + $0xda] sm:$0xff]
        %v538 = vld [vmem:[%s422 + $0xe2] sm:$0xff]
        %v539 = vld [vmem:[%s422 + $0xf2] sm:$0xff]
        %v540 = vld [vmem:[%s422 + $0xfa] sm:$0xff]
        %v541 = vld [vmem:[%s422 + $0x10a] sm:$0xff]
        %v542 = vld [vmem:[%s422 + $0x112] sm:$0xff]
        %v543 = vld [vmem:[%s422 + $0x122] sm:$0xff]
        %v544 = vld [vmem:[%s422 + $0x12a] sm:$0xff]
        %v545 = vld [vmem:[%s422 + $0x13a] sm:$0xff]
        %v546 = vld [vmem:[%s422 + $0x142] sm:$0xff]
        %v547 = vld [vmem:[%s422 + $0x152] sm:$0xff]
        %v548 = vld [vmem:[%s422 + $0x15a] sm:$0xff]
        %v549 = vld [vmem:[%s422 + $0x16a] sm:$0xff]
        %v550 = vld [vmem:[%s422 + $0x172] sm:$0xff]
        %v551 = vpack.c.bf16 %v520, %v519
        %v552 = vpack.c.bf16 %v522, %v521
        %v553 = vpack.c.bf16 %v524, %v523
        %v554 = vpack.c.bf16 %v526, %v525
        %v555 = vpack.c.bf16 %v528, %v527
        %v556 = vpack.c.bf16 %v530, %v529
        %v557 = vpack.c.bf16 %v532, %v531
        %v558 = vpack.c.bf16 %v534, %v533
        %v559 = vpack.c.bf16 %v536, %v535
        %v560 = vpack.c.bf16 %v538, %v537
        %v561 = vpack.c.bf16 %v540, %v539
        %v562 = vpack.c.bf16 %v542, %v541
        %v563 = vpack.c.bf16 %v544, %v543
        %v564 = vpack.c.bf16 %v546, %v545
        %v565 = vpack.c.bf16 %v548, %v547
        %v566 = vpack.c.bf16 %v550, %v549
        %s567 = scalar_lea.vmem %s276, 48
        %v568 = vld [vmem:[%s567] sm:$0xff]
        %v569 = vld [vmem:[%s567 + $0x8] sm:$0xff]
        %v570 = vld [vmem:[%s567 + $0x18] sm:$0xff]
        %v571 = vld [vmem:[%s567 + $0x20] sm:$0xff]
        %v572 = vld [vmem:[%s567 + $0x30] sm:$0xff]
        %v573 = vld [vmem:[%s567 + $0x38] sm:$0xff]
        %v574 = vld [vmem:[%s567 + $0x48] sm:$0xff]
        %v575 = vld [vmem:[%s567 + $0x50] sm:$0xff]
        %v576 = vld [vmem:[%s567 + $0x60] sm:$0xff]
        %v577 = vld [vmem:[%s567 + $0x68] sm:$0xff]
        %v578 = vld [vmem:[%s567 + $0x78] sm:$0xff]
        %v579 = vld [vmem:[%s567 + $0x80] sm:$0xff]
        %v580 = vld [vmem:[%s567 + $0x90] sm:$0xff]
        %v581 = vld [vmem:[%s567 + $0x98] sm:$0xff]
        %v582 = vld [vmem:[%s567 + $0xa8] sm:$0xff]
        %v583 = vld [vmem:[%s567 + $0xb0] sm:$0xff]
        %v584 = vld [vmem:[%s567 + $0xc0] sm:$0xff]
        %v585 = vld [vmem:[%s567 + $0xc8] sm:$0xff]
        %v586 = vld [vmem:[%s567 + $0xd8] sm:$0xff]
        %v587 = vld [vmem:[%s567 + $0xe0] sm:$0xff]
        %v588 = vld [vmem:[%s567 + $0xf0] sm:$0xff]
        %v589 = vld [vmem:[%s567 + $0xf8] sm:$0xff]
        %v590 = vld [vmem:[%s567 + $0x108] sm:$0xff]
        %v591 = vld [vmem:[%s567 + $0x110] sm:$0xff]
        %v592 = vld [vmem:[%s567 + $0x120] sm:$0xff]
        %v593 = vld [vmem:[%s567 + $0x128] sm:$0xff]
        %v594 = vld [vmem:[%s567 + $0x138] sm:$0xff]
        %v595 = vld [vmem:[%s567 + $0x140] sm:$0xff]
        %v596 = vld [vmem:[%s567 + $0x150] sm:$0xff]
        %v597 = vld [vmem:[%s567 + $0x158] sm:$0xff]
        %v598 = vld [vmem:[%s567 + $0x168] sm:$0xff]
        %v599 = vld [vmem:[%s567 + $0x170] sm:$0xff]
        %v600 = vpack.c.bf16 %v569, %v568
        %v601 = vpack.c.bf16 %v571, %v570
        %v602 = vpack.c.bf16 %v573, %v572
        %v603 = vpack.c.bf16 %v575, %v574
        %v604 = vpack.c.bf16 %v577, %v576
        %v605 = vpack.c.bf16 %v579, %v578
        %v606 = vpack.c.bf16 %v581, %v580
        %v607 = vpack.c.bf16 %v583, %v582
        %v608 = vpack.c.bf16 %v585, %v584
        %v609 = vpack.c.bf16 %v587, %v586
        %v610 = vpack.c.bf16 %v589, %v588
        %v611 = vpack.c.bf16 %v591, %v590
        %v612 = vpack.c.bf16 %v593, %v592
        %v613 = vpack.c.bf16 %v595, %v594
        %v614 = vpack.c.bf16 %v597, %v596
        %v615 = vpack.c.bf16 %v599, %v598
        %v616 = vld [vmem:[%s567 + $0x1] sm:$0xff]
        %v617 = vld [vmem:[%s567 + $0x9] sm:$0xff]
        %v618 = vld [vmem:[%s567 + $0x19] sm:$0xff]
        %v619 = vld [vmem:[%s567 + $0x21] sm:$0xff]
        %v620 = vld [vmem:[%s567 + $0x31] sm:$0xff]
        %v621 = vld [vmem:[%s567 + $0x39] sm:$0xff]
        %v622 = vld [vmem:[%s567 + $0x49] sm:$0xff]
        %v623 = vld [vmem:[%s567 + $0x51] sm:$0xff]
        %v624 = vld [vmem:[%s567 + $0x61] sm:$0xff]
        %v625 = vld [vmem:[%s567 + $0x69] sm:$0xff]
        %v626 = vld [vmem:[%s567 + $0x79] sm:$0xff]
        %v627 = vld [vmem:[%s567 + $0x81] sm:$0xff]
        %v628 = vld [vmem:[%s567 + $0x91] sm:$0xff]
        %v629 = vld [vmem:[%s567 + $0x99] sm:$0xff]
        %v630 = vld [vmem:[%s567 + $0xa9] sm:$0xff]
        %v631 = vld [vmem:[%s567 + $0xb1] sm:$0xff]
        %v632 = vld [vmem:[%s567 + $0xc1] sm:$0xff]
        %v633 = vld [vmem:[%s567 + $0xc9] sm:$0xff]
        %v634 = vld [vmem:[%s567 + $0xd9] sm:$0xff]
        %v635 = vld [vmem:[%s567 + $0xe1] sm:$0xff]
        %v636 = vld [vmem:[%s567 + $0xf1] sm:$0xff]
        %v637 = vld [vmem:[%s567 + $0xf9] sm:$0xff]
        %v638 = vld [vmem:[%s567 + $0x109] sm:$0xff]
        %v639 = vld [vmem:[%s567 + $0x111] sm:$0xff]
        %v640 = vld [vmem:[%s567 + $0x121] sm:$0xff]
        %v641 = vld [vmem:[%s567 + $0x129] sm:$0xff]
        %v642 = vld [vmem:[%s567 + $0x139] sm:$0xff]
        %v643 = vld [vmem:[%s567 + $0x141] sm:$0xff]
        %v644 = vld [vmem:[%s567 + $0x151] sm:$0xff]
        %v645 = vld [vmem:[%s567 + $0x159] sm:$0xff]
        %v646 = vld [vmem:[%s567 + $0x169] sm:$0xff]
        %v647 = vld [vmem:[%s567 + $0x171] sm:$0xff]
        %v648 = vpack.c.bf16 %v617, %v616
        %v649 = vpack.c.bf16 %v619, %v618
        %v650 = vpack.c.bf16 %v621, %v620
        %v651 = vpack.c.bf16 %v623, %v622
        %v652 = vpack.c.bf16 %v625, %v624
        %v653 = vpack.c.bf16 %v627, %v626
        %v654 = vpack.c.bf16 %v629, %v628
        %v655 = vpack.c.bf16 %v631, %v630
        %v656 = vpack.c.bf16 %v633, %v632
        %v657 = vpack.c.bf16 %v635, %v634
        %v658 = vpack.c.bf16 %v637, %v636
        %v659 = vpack.c.bf16 %v639, %v638
        %v660 = vpack.c.bf16 %v641, %v640
        %v661 = vpack.c.bf16 %v643, %v642
        %v662 = vpack.c.bf16 %v645, %v644
        %v663 = vpack.c.bf16 %v647, %v646
        %v664 = vld [vmem:[%s567 + $0x2] sm:$0xff]
        %v665 = vld [vmem:[%s567 + $0xa] sm:$0xff]
        %v666 = vld [vmem:[%s567 + $0x1a] sm:$0xff]
        %v667 = vld [vmem:[%s567 + $0x22] sm:$0xff]
        %v668 = vld [vmem:[%s567 + $0x32] sm:$0xff]
        %v669 = vld [vmem:[%s567 + $0x3a] sm:$0xff]
        %v670 = vld [vmem:[%s567 + $0x4a] sm:$0xff]
        %v671 = vld [vmem:[%s567 + $0x52] sm:$0xff]
        %v672 = vld [vmem:[%s567 + $0x62] sm:$0xff]
        %v673 = vld [vmem:[%s567 + $0x6a] sm:$0xff]
        %v674 = vld [vmem:[%s567 + $0x7a] sm:$0xff]
        %v675 = vld [vmem:[%s567 + $0x82] sm:$0xff]
        %v676 = vld [vmem:[%s567 + $0x92] sm:$0xff]
        %v677 = vld [vmem:[%s567 + $0x9a] sm:$0xff]
        %v678 = vld [vmem:[%s567 + $0xaa] sm:$0xff]
        %v679 = vld [vmem:[%s567 + $0xb2] sm:$0xff]
        %v680 = vld [vmem:[%s567 + $0xc2] sm:$0xff]
        %v681 = vld [vmem:[%s567 + $0xca] sm:$0xff]
        %v682 = vld [vmem:[%s567 + $0xda] sm:$0xff]
        %v683 = vld [vmem:[%s567 + $0xe2] sm:$0xff]
        %v684 = vld [vmem:[%s567 + $0xf2] sm:$0xff]
        %v685 = vld [vmem:[%s567 + $0xfa] sm:$0xff]
        %v686 = vld [vmem:[%s567 + $0x10a] sm:$0xff]
        %v687 = vld [vmem:[%s567 + $0x112] sm:$0xff]
        %v688 = vld [vmem:[%s567 + $0x122] sm:$0xff]
        %v689 = vld [vmem:[%s567 + $0x12a] sm:$0xff]
        %v690 = vld [vmem:[%s567 + $0x13a] sm:$0xff]
        %v691 = vld [vmem:[%s567 + $0x142] sm:$0xff]
        %v692 = vld [vmem:[%s567 + $0x152] sm:$0xff]
        %v693 = vld [vmem:[%s567 + $0x15a] sm:$0xff]
        %v694 = vld [vmem:[%s567 + $0x16a] sm:$0xff]
        %v695 = vld [vmem:[%s567 + $0x172] sm:$0xff]
        %v696 = vpack.c.bf16 %v665, %v664
        %v697 = vpack.c.bf16 %v667, %v666
        %v698 = vpack.c.bf16 %v669, %v668
        %v699 = vpack.c.bf16 %v671, %v670
        %v700 = vpack.c.bf16 %v673, %v672
        %v701 = vpack.c.bf16 %v675, %v674
        %v702 = vpack.c.bf16 %v677, %v676
        %v703 = vpack.c.bf16 %v679, %v678
        %v704 = vpack.c.bf16 %v681, %v680
        %v705 = vpack.c.bf16 %v683, %v682
        %v706 = vpack.c.bf16 %v685, %v684
        %v707 = vpack.c.bf16 %v687, %v686
        %v708 = vpack.c.bf16 %v689, %v688
        %v709 = vpack.c.bf16 %v691, %v690
        %v710 = vpack.c.bf16 %v693, %v692
        %v711 = vpack.c.bf16 %v695, %v694
        %v712 = vld [vmem:[%s1] sm:$0xf]
        %v713 = vld [vmem:[%s1 + $0x4] sm:$0xf]
        %v714 = vld [vmem:[%s1 + $0x8] sm:$0xf]
        %v715 = vld [vmem:[%s1 + $0xc] sm:$0xf]
        %v716 = vld [vmem:[%s1 + $0x10] sm:$0xf]
        %v717 = vld [vmem:[%s1 + $0x14] sm:$0xf]
        %v718 = vld [vmem:[%s1 + $0x18] sm:$0xf]
        %v719 = vld [vmem:[%s1 + $0x1c] sm:$0xf]
        %v720 = vld [vmem:[%s1 + $0x20] sm:$0xf]
        %v721 = vld [vmem:[%s1 + $0x24] sm:$0xf]
        %v722 = vld [vmem:[%s1 + $0x28] sm:$0xf]
        %v723 = vld [vmem:[%s1 + $0x2c] sm:$0xf]
        %v724 = vld [vmem:[%s1 + $0x30] sm:$0xf]
        %v725 = vld [vmem:[%s1 + $0x34] sm:$0xf]
        %v726 = vld [vmem:[%s1 + $0x38] sm:$0xf]
        %v727 = vld [vmem:[%s1 + $0x3c] sm:$0xf]
        %v728 = vld [vmem:[%s1 + $0x40] sm:$0xf]
        %v729 = vld [vmem:[%s1 + $0x44] sm:$0xf]
        %v730 = vld [vmem:[%s1 + $0x48] sm:$0xf]
        %v731 = vld [vmem:[%s1 + $0x4c] sm:$0xf]
        %v732 = vld [vmem:[%s1 + $0x50] sm:$0xf]
        %v733 = vld [vmem:[%s1 + $0x54] sm:$0xf]
        %v734 = vld [vmem:[%s1 + $0x58] sm:$0xf]
        %v735 = vld [vmem:[%s1 + $0x5c] sm:$0xf]
        %v736 = vld [vmem:[%s1 + $0x60] sm:$0xf]
        %v737 = vld [vmem:[%s1 + $0x64] sm:$0xf]
        %v738 = vld [vmem:[%s1 + $0x68] sm:$0xf]
        %v739 = vld [vmem:[%s1 + $0x6c] sm:$0xf]
        %v740 = vld [vmem:[%s1 + $0x70] sm:$0xf]
        %v741 = vld [vmem:[%s1 + $0x74] sm:$0xf]
        %v742 = vld [vmem:[%s1 + $0x78] sm:$0xf]
        %v743 = vld [vmem:[%s1 + $0x7c] sm:$0xf]
        %v744 = vld [vmem:[%s1 + $0x80] sm:$0xf]
        %v745 = vld [vmem:[%s1 + $0x84] sm:$0xf]
        %v746 = vld [vmem:[%s1 + $0x88] sm:$0xf]
        %v747 = vld [vmem:[%s1 + $0x8c] sm:$0xf]
        %v748 = vld [vmem:[%s1 + $0x90] sm:$0xf]
        %v749 = vld [vmem:[%s1 + $0x94] sm:$0xf]
        %v750 = vld [vmem:[%s1 + $0x98] sm:$0xf]
        %v751 = vld [vmem:[%s1 + $0x9c] sm:$0xf]
        %v752 = vld [vmem:[%s1 + $0xa0] sm:$0xf]
        %v753 = vld [vmem:[%s1 + $0xa4] sm:$0xf]
        %v754 = vld [vmem:[%s1 + $0xa8] sm:$0xf]
        %v755 = vld [vmem:[%s1 + $0xac] sm:$0xf]
        %v756 = vld [vmem:[%s1 + $0xb0] sm:$0xf]
        %v757 = vld [vmem:[%s1 + $0xb4] sm:$0xf]
        %v758 = vld [vmem:[%s1 + $0xb8] sm:$0xf]
        %v759 = vld [vmem:[%s1 + $0xbc] sm:$0xf]
        %v760 = vld [vmem:[%s1 + $0xc0] sm:$0xf]
        %v761 = vld [vmem:[%s1 + $0xc4] sm:$0xf]
        %v762 = vld [vmem:[%s1 + $0xc8] sm:$0xf]
        %v763 = vld [vmem:[%s1 + $0xcc] sm:$0xf]
        %v764 = vld [vmem:[%s1 + $0xd0] sm:$0xf]
        %v765 = vld [vmem:[%s1 + $0xd4] sm:$0xf]
        %v766 = vld [vmem:[%s1 + $0xd8] sm:$0xf]
        %v767 = vld [vmem:[%s1 + $0xdc] sm:$0xf]
        %v768 = vld [vmem:[%s1 + $0xe0] sm:$0xf]
        %v769 = vld [vmem:[%s1 + $0xe4] sm:$0xf]
        %v770 = vld [vmem:[%s1 + $0xe8] sm:$0xf]
        %v771 = vld [vmem:[%s1 + $0xec] sm:$0xf]
        %v772 = vld [vmem:[%s1 + $0xf0] sm:$0xf]
        %v773 = vld [vmem:[%s1 + $0xf4] sm:$0xf]
        %v774 = vld [vmem:[%s1 + $0xf8] sm:$0xf]
        %v775 = vld [vmem:[%s1 + $0xfc] sm:$0xf]
        %v776 = vld [vmem:[%s1 + $0x100] sm:$0xf]
        %v777 = vld [vmem:[%s1 + $0x104] sm:$0xf]
        %v778 = vld [vmem:[%s1 + $0x108] sm:$0xf]
        %v779 = vld [vmem:[%s1 + $0x10c] sm:$0xf]
        %v780 = vld [vmem:[%s1 + $0x110] sm:$0xf]
        %v781 = vld [vmem:[%s1 + $0x114] sm:$0xf]
        %v782 = vld [vmem:[%s1 + $0x118] sm:$0xf]
        %v783 = vld [vmem:[%s1 + $0x11c] sm:$0xf]
        %v784 = vld [vmem:[%s1 + $0x120] sm:$0xf]
        %v785 = vld [vmem:[%s1 + $0x124] sm:$0xf]
        %v786 = vld [vmem:[%s1 + $0x128] sm:$0xf]
        %v787 = vld [vmem:[%s1 + $0x12c] sm:$0xf]
        %v788 = vld [vmem:[%s1 + $0x130] sm:$0xf]
        %v789 = vld [vmem:[%s1 + $0x134] sm:$0xf]
        %v790 = vld [vmem:[%s1 + $0x138] sm:$0xf]
        %v791 = vld [vmem:[%s1 + $0x13c] sm:$0xf]
        %v792 = vld [vmem:[%s1 + $0x140] sm:$0xf]
        %v793 = vld [vmem:[%s1 + $0x144] sm:$0xf]
        %v794 = vld [vmem:[%s1 + $0x148] sm:$0xf]
        %v795 = vld [vmem:[%s1 + $0x14c] sm:$0xf]
        %v796 = vld [vmem:[%s1 + $0x150] sm:$0xf]
        %v797 = vld [vmem:[%s1 + $0x154] sm:$0xf]
        %v798 = vld [vmem:[%s1 + $0x158] sm:$0xf]
        %v799 = vld [vmem:[%s1 + $0x15c] sm:$0xf]
        %v800 = vld [vmem:[%s1 + $0x160] sm:$0xf]
        %v801 = vld [vmem:[%s1 + $0x164] sm:$0xf]
        %v802 = vld [vmem:[%s1 + $0x168] sm:$0xf]
        %v803 = vld [vmem:[%s1 + $0x16c] sm:$0xf]
        %v804 = vld [vmem:[%s1 + $0x170] sm:$0xf]
        %v805 = vld [vmem:[%s1 + $0x174] sm:$0xf]
        %v806 = vld [vmem:[%s1 + $0x178] sm:$0xf]
        %v807 = vld [vmem:[%s1 + $0x17c] sm:$0xf]
        %v808 = vld [vmem:[%s1 + $0x180] sm:$0xf]
        %v809 = vld [vmem:[%s1 + $0x184] sm:$0xf]
        %v810 = vld [vmem:[%s1 + $0x188] sm:$0xf]
        %v811 = vld [vmem:[%s1 + $0x18c] sm:$0xf]
        %v812 = vld [vmem:[%s1 + $0x190] sm:$0xf]
        %v813 = vld [vmem:[%s1 + $0x194] sm:$0xf]
        %v814 = vld [vmem:[%s1 + $0x198] sm:$0xf]
        %v815 = vld [vmem:[%s1 + $0x19c] sm:$0xf]
        %v816 = vld [vmem:[%s1 + $0x1a0] sm:$0xf]
        %v817 = vld [vmem:[%s1 + $0x1a4] sm:$0xf]
        %v818 = vld [vmem:[%s1 + $0x1a8] sm:$0xf]
        %v819 = vld [vmem:[%s1 + $0x1ac] sm:$0xf]
        %v820 = vld [vmem:[%s1 + $0x1b0] sm:$0xf]
        %v821 = vld [vmem:[%s1 + $0x1b4] sm:$0xf]
        %v822 = vld [vmem:[%s1 + $0x1b8] sm:$0xf]
        %v823 = vld [vmem:[%s1 + $0x1bc] sm:$0xf]
        %v824 = vld [vmem:[%s1 + $0x1c0] sm:$0xf]
        %v825 = vld [vmem:[%s1 + $0x1c4] sm:$0xf]
        %v826 = vld [vmem:[%s1 + $0x1c8] sm:$0xf]
        %v827 = vld [vmem:[%s1 + $0x1cc] sm:$0xf]
        %v828 = vld [vmem:[%s1 + $0x1d0] sm:$0xf]
        %v829 = vld [vmem:[%s1 + $0x1d4] sm:$0xf]
        %v830 = vld [vmem:[%s1 + $0x1d8] sm:$0xf]
        %v831 = vld [vmem:[%s1 + $0x1dc] sm:$0xf]
        %v832 = vld [vmem:[%s1 + $0x1e0] sm:$0xf]
        %v833 = vld [vmem:[%s1 + $0x1e4] sm:$0xf]
        %v834 = vld [vmem:[%s1 + $0x1e8] sm:$0xf]
        %v835 = vld [vmem:[%s1 + $0x1ec] sm:$0xf]
        %v836 = vld [vmem:[%s1 + $0x1f0] sm:$0xf]
        %v837 = vld [vmem:[%s1 + $0x1f4] sm:$0xf]
        %v838 = vld [vmem:[%s1 + $0x1f8] sm:$0xf]
        %v839 = vld [vmem:[%s1 + $0x1fc] sm:$0xf]
        %v840 = vld [vmem:[%s1 + $0x200] sm:$0xf]
        %v841 = vld [vmem:[%s1 + $0x204] sm:$0xf]
        %v842 = vld [vmem:[%s1 + $0x208] sm:$0xf]
        %v843 = vld [vmem:[%s1 + $0x20c] sm:$0xf]
        %v844 = vld [vmem:[%s1 + $0x210] sm:$0xf]
        %v845 = vld [vmem:[%s1 + $0x214] sm:$0xf]
        %v846 = vld [vmem:[%s1 + $0x218] sm:$0xf]
        %v847 = vld [vmem:[%s1 + $0x21c] sm:$0xf]
        %v848 = vld [vmem:[%s1 + $0x220] sm:$0xf]
        %v849 = vld [vmem:[%s1 + $0x224] sm:$0xf]
        %v850 = vld [vmem:[%s1 + $0x228] sm:$0xf]
        %v851 = vld [vmem:[%s1 + $0x22c] sm:$0xf]
        %v852 = vld [vmem:[%s1 + $0x230] sm:$0xf]
        %v853 = vld [vmem:[%s1 + $0x234] sm:$0xf]
        %v854 = vld [vmem:[%s1 + $0x238] sm:$0xf]
        %v855 = vld [vmem:[%s1 + $0x23c] sm:$0xf]
        %v1000 = vunpack.c.l.b16 %v712
        %v1001 = vunpack.c.l.b16 %v713
        %v1002 = vunpack.c.l.b16 %v714
        %v1003 = vunpack.c.l.b16 %v715
        %v1004 = vunpack.c.l.b16 %v716
        %v1005 = vunpack.c.l.b16 %v717
        %v1006 = vunpack.c.l.b16 %v718
        %v1007 = vunpack.c.l.b16 %v719
        %v1008 = vunpack.c.l.b16 %v720
        %v1009 = vunpack.c.l.b16 %v721
        %v1010 = vunpack.c.l.b16 %v722
        %v1011 = vunpack.c.l.b16 %v723
        %v1012 = vunpack.c.l.b16 %v724
        %v1013 = vunpack.c.l.b16 %v725
        %v1014 = vunpack.c.l.b16 %v726
        %v1015 = vunpack.c.l.b16 %v727
        %v1016 = vunpack.c.l.b16 %v728
        %v1017 = vunpack.c.l.b16 %v729
        %v1018 = vunpack.c.l.b16 %v730
        %v1019 = vunpack.c.l.b16 %v731
        %v1020 = vunpack.c.l.b16 %v732
        %v1021 = vunpack.c.l.b16 %v733
        %v1022 = vunpack.c.l.b16 %v734
        %v1023 = vunpack.c.l.b16 %v735
        %v1024 = vunpack.c.l.b16 %v736
        %v1025 = vunpack.c.l.b16 %v737
        %v1026 = vunpack.c.l.b16 %v738
        %v1027 = vunpack.c.l.b16 %v739
        %v1028 = vunpack.c.l.b16 %v740
        %v1029 = vunpack.c.l.b16 %v741
        %v1030 = vunpack.c.l.b16 %v742
        %v1031 = vunpack.c.l.b16 %v743
        %v1032 = vunpack.c.l.b16 %v744
        %v1033 = vunpack.c.l.b16 %v745
        %v1034 = vunpack.c.l.b16 %v746
        %v1035 = vunpack.c.l.b16 %v747
        %v1036 = vunpack.c.l.b16 %v748
        %v1037 = vunpack.c.l.b16 %v749
        %v1038 = vunpack.c.l.b16 %v750
        %v1039 = vunpack.c.l.b16 %v751
        %v1040 = vunpack.c.l.b16 %v752
        %v1041 = vunpack.c.l.b16 %v753
        %v1042 = vunpack.c.l.b16 %v754
        %v1043 = vunpack.c.l.b16 %v755
        %v1044 = vunpack.c.l.b16 %v756
        %v1045 = vunpack.c.l.b16 %v757
        %v1046 = vunpack.c.l.b16 %v758
        %v1047 = vunpack.c.l.b16 %v759
        %v1048 = vunpack.c.l.b16 %v760
        %v1049 = vunpack.c.l.b16 %v761
        %v1050 = vunpack.c.l.b16 %v762
        %v1051 = vunpack.c.l.b16 %v763
        %v1052 = vunpack.c.l.b16 %v764
        %v1053 = vunpack.c.l.b16 %v765
        %v1054 = vunpack.c.l.b16 %v766
        %v1055 = vunpack.c.l.b16 %v767
        %v1056 = vunpack.c.l.b16 %v768
        %v1057 = vunpack.c.l.b16 %v769
        %v1058 = vunpack.c.l.b16 %v770
        %v1059 = vunpack.c.l.b16 %v771
        %v1060 = vunpack.c.l.b16 %v772
        %v1061 = vunpack.c.l.b16 %v773
        %v1062 = vunpack.c.l.b16 %v774
        %v1063 = vunpack.c.l.b16 %v775
        %v1064 = vunpack.c.l.b16 %v776
        %v1065 = vunpack.c.l.b16 %v777
        %v1066 = vunpack.c.l.b16 %v778
        %v1067 = vunpack.c.l.b16 %v779
        %v1068 = vunpack.c.l.b16 %v780
        %v1069 = vunpack.c.l.b16 %v781
        %v1070 = vunpack.c.l.b16 %v782
        %v1071 = vunpack.c.l.b16 %v783
        %v1072 = vunpack.c.l.b16 %v784
        %v1073 = vunpack.c.l.b16 %v785
        %v1074 = vunpack.c.l.b16 %v786
        %v1075 = vunpack.c.l.b16 %v787
        %v1076 = vunpack.c.l.b16 %v788
        %v1077 = vunpack.c.l.b16 %v789
        %v1078 = vunpack.c.l.b16 %v790
        %v1079 = vunpack.c.l.b16 %v791
        %v1080 = vunpack.c.l.b16 %v792
        %v1081 = vunpack.c.l.b16 %v793
        %v1082 = vunpack.c.l.b16 %v794
        %v1083 = vunpack.c.l.b16 %v795
        %v1084 = vunpack.c.l.b16 %v796
        %v1085 = vunpack.c.l.b16 %v797
        %v1086 = vunpack.c.l.b16 %v798
        %v1087 = vunpack.c.l.b16 %v799
        %v1088 = vunpack.c.l.b16 %v800
        %v1089 = vunpack.c.l.b16 %v801
        %v1090 = vunpack.c.l.b16 %v802
        %v1091 = vunpack.c.l.b16 %v803
        %v1092 = vunpack.c.l.b16 %v804
        %v1093 = vunpack.c.l.b16 %v805
        %v1094 = vunpack.c.l.b16 %v806
        %v1095 = vunpack.c.l.b16 %v807
        %v1096 = vunpack.c.l.b16 %v808
        %v1097 = vunpack.c.l.b16 %v809
        %v1098 = vunpack.c.l.b16 %v810
        %v1099 = vunpack.c.l.b16 %v811
        %v1100 = vunpack.c.l.b16 %v812
        %v1101 = vunpack.c.l.b16 %v813
        %v1102 = vunpack.c.l.b16 %v814
        %v1103 = vunpack.c.l.b16 %v815
        %v1104 = vunpack.c.l.b16 %v816
        %v1105 = vunpack.c.l.b16 %v817
        %v1106 = vunpack.c.l.b16 %v818
        %v1107 = vunpack.c.l.b16 %v819
        %v1108 = vunpack.c.l.b16 %v820
        %v1109 = vunpack.c.l.b16 %v821
        %v1110 = vunpack.c.l.b16 %v822
        %v1111 = vunpack.c.l.b16 %v823
        %v1112 = vunpack.c.l.b16 %v824
        %v1113 = vunpack.c.l.b16 %v825
        %v1114 = vunpack.c.l.b16 %v826
        %v1115 = vunpack.c.l.b16 %v827
        %v1116 = vunpack.c.l.b16 %v828
        %v1117 = vunpack.c.l.b16 %v829
        %v1118 = vunpack.c.l.b16 %v830
        %v1119 = vunpack.c.l.b16 %v831
        %v1120 = vunpack.c.l.b16 %v832
        %v1121 = vunpack.c.l.b16 %v833
        %v1122 = vunpack.c.l.b16 %v834
        %v1123 = vunpack.c.l.b16 %v835
        %v1124 = vunpack.c.l.b16 %v836
        %v1125 = vunpack.c.l.b16 %v837
        %v1126 = vunpack.c.l.b16 %v838
        %v1127 = vunpack.c.l.b16 %v839
        %v1128 = vunpack.c.l.b16 %v840
        %v1129 = vunpack.c.l.b16 %v841
        %v1130 = vunpack.c.l.b16 %v842
        %v1131 = vunpack.c.l.b16 %v843
        %v1132 = vunpack.c.l.b16 %v844
        %v1133 = vunpack.c.l.b16 %v845
        %v1134 = vunpack.c.l.b16 %v846
        %v1135 = vunpack.c.l.b16 %v847
        %v1136 = vunpack.c.l.b16 %v848
        %v1137 = vunpack.c.l.b16 %v849
        %v1138 = vunpack.c.l.b16 %v850
        %v1139 = vunpack.c.l.b16 %v851
        %v1140 = vunpack.c.l.b16 %v852
        %v1141 = vunpack.c.l.b16 %v853
        %v1142 = vunpack.c.l.b16 %v854
        %v1143 = vunpack.c.l.b16 %v855
        %v1144 = vpack.c.b16 %v1001, %v1000
        %v1145 = vpack.c.b16 %v1003, %v1002
        %v1146 = vpack.c.b16 %v1005, %v1004
        %v1147 = vpack.c.b16 %v1007, %v1006
        %v1148 = vpack.c.b16 %v1009, %v1008
        %v1149 = vpack.c.b16 %v1011, %v1010
        %v1150 = vpack.c.b16 %v1013, %v1012
        %v1151 = vpack.c.b16 %v1015, %v1014
        %v1152 = vpack.c.b16 %v1017, %v1016
        %v1153 = vpack.c.b16 %v1019, %v1018
        %v1154 = vpack.c.b16 %v1021, %v1020
        %v1155 = vpack.c.b16 %v1023, %v1022
        %v1156 = vpack.c.b16 %v1025, %v1024
        %v1157 = vpack.c.b16 %v1027, %v1026
        %v1158 = vpack.c.b16 %v1029, %v1028
        %v1159 = vpack.c.b16 %v1031, %v1030
        %v1160 = vpack.c.b16 %v1033, %v1032
        %v1161 = vpack.c.b16 %v1035, %v1034
        %v1162 = vpack.c.b16 %v1037, %v1036
        %v1163 = vpack.c.b16 %v1039, %v1038
        %v1164 = vpack.c.b16 %v1041, %v1040
        %v1165 = vpack.c.b16 %v1043, %v1042
        %v1166 = vpack.c.b16 %v1045, %v1044
        %v1167 = vpack.c.b16 %v1047, %v1046
        %v1168 = vpack.c.b16 %v1049, %v1048
        %v1169 = vpack.c.b16 %v1051, %v1050
        %v1170 = vpack.c.b16 %v1053, %v1052
        %v1171 = vpack.c.b16 %v1055, %v1054
        %v1172 = vpack.c.b16 %v1057, %v1056
        %v1173 = vpack.c.b16 %v1059, %v1058
        %v1174 = vpack.c.b16 %v1061, %v1060
        %v1175 = vpack.c.b16 %v1063, %v1062
        %v1176 = vpack.c.b16 %v1065, %v1064
        %v1177 = vpack.c.b16 %v1067, %v1066
        %v1178 = vpack.c.b16 %v1069, %v1068
        %v1179 = vpack.c.b16 %v1071, %v1070
        %v1180 = vpack.c.b16 %v1073, %v1072
        %v1181 = vpack.c.b16 %v1075, %v1074
        %v1182 = vpack.c.b16 %v1077, %v1076
        %v1183 = vpack.c.b16 %v1079, %v1078
        %v1184 = vpack.c.b16 %v1081, %v1080
        %v1185 = vpack.c.b16 %v1083, %v1082
        %v1186 = vpack.c.b16 %v1085, %v1084
        %v1187 = vpack.c.b16 %v1087, %v1086
        %v1188 = vpack.c.b16 %v1089, %v1088
        %v1189 = vpack.c.b16 %v1091, %v1090
        %v1190 = vpack.c.b16 %v1093, %v1092
        %v1191 = vpack.c.b16 %v1095, %v1094
        %v1192 = vpack.c.b16 %v1097, %v1096
        %v1193 = vpack.c.b16 %v1099, %v1098
        %v1194 = vpack.c.b16 %v1101, %v1100
        %v1195 = vpack.c.b16 %v1103, %v1102
        %v1196 = vpack.c.b16 %v1105, %v1104
        %v1197 = vpack.c.b16 %v1107, %v1106
        %v1198 = vpack.c.b16 %v1109, %v1108
        %v1199 = vpack.c.b16 %v1111, %v1110
        %v1200 = vpack.c.b16 %v1113, %v1112
        %v1201 = vpack.c.b16 %v1115, %v1114
        %v1202 = vpack.c.b16 %v1117, %v1116
        %v1203 = vpack.c.b16 %v1119, %v1118
        %v1204 = vpack.c.b16 %v1121, %v1120
        %v1205 = vpack.c.b16 %v1123, %v1122
        %v1206 = vpack.c.b16 %v1125, %v1124
        %v1207 = vpack.c.b16 %v1127, %v1126
        %v1208 = vpack.c.b16 %v1129, %v1128
        %v1209 = vpack.c.b16 %v1131, %v1130
        %v1210 = vpack.c.b16 %v1133, %v1132
        %v1211 = vpack.c.b16 %v1135, %v1134
        %v1212 = vpack.c.b16 %v1137, %v1136
        %v1213 = vpack.c.b16 %v1139, %v1138
        %v1214 = vpack.c.b16 %v1141, %v1140
        %v1215 = vpack.c.b16 %v1143, %v1142
        %1288 = vmatprep.subr.bf16.mxu0 0
        %1289 = vmatpush1.bf16.msra.mxu0 %v1144
        %1290 = vmatprep.subr.bf16.mxu0 0
        %1291 = vmatpush1.bf16.msra.mxu0 %v1145
        %1292 = vmatprep.subr.bf16.mxu0 0
        %1293 = vmatpush1.bf16.msra.mxu0 %v1146
        %1294 = vmatprep.subr.bf16.mxu0 0
        %1295 = vmatpush1.bf16.msra.mxu0 %v1147
        %1296 = vmatprep.subr.bf16.mxu0 0
        %1297 = vmatpush1.bf16.msra.mxu0 %v1148
        %1298 = vmatprep.subr.bf16.mxu0 0
        %1299 = vmatpush1.bf16.msra.mxu0 %v1149
        %1300 = vmatprep.subr.bf16.mxu0 0
        %1301 = vmatpush1.bf16.msra.mxu0 %v1150
        %1302 = vmatprep.subr.bf16.mxu0 0
        %1303 = vmatpush1.bf16.msra.mxu0 %v1151
        %1304 = vmatprep.subr.bf16.mxu0 0
        %1305 = vmatpush1.bf16.msra.mxu0 %v1152
        %1306 = vmatprep.subr.bf16.mxu0 0
        %1307 = vmatpush1.bf16.msra.mxu0 %v1153
        %1308 = vmatprep.subr.bf16.mxu0 0
        %1309 = vmatpush1.bf16.msra.mxu0 %v1154
        %1310 = vmatprep.subr.bf16.mxu0 0
        %1311 = vmatpush1.bf16.msra.mxu0 %v1155
        %1312 = vmatprep.subr.bf16.mxu0 0
        %1313 = vmatpush1.bf16.msra.mxu0 %v1156
        %1314 = vmatprep.subr.bf16.mxu0 0
        %1315 = vmatpush1.bf16.msra.mxu0 %v1157
        %1316 = vmatprep.subr.bf16.mxu0 0
        %1317 = vmatpush1.bf16.msra.mxu0 %v1158
        %1318 = vmatprep.subr.bf16.mxu0 0
        %1319 = vmatpush1.bf16.msra.mxu0 %v1159
        %1320 = vmatprep.mubr.bf16.mxu0 %v358
        %1321 = vmatmul.mubr.bf16.gmra.mrb[0].mxu0 %v310
        %v1322 = vpop.f32.mrb[0].mxu0
        %v1323 = vadd.f32 0.0, %v1322
        %v1324 = vpop.f32.mrb[0].mxu0
        %v1325 = vpop.f32.mrb[0].mxu0
        %v1326 = vadd.f32 0.0, %v1325
        %v1327 = vpop.f32.mrb[0].mxu0
        %1328 = vmatprep.mubr.bf16.mxu0 %v359
        %1329 = vmatmul.mubr.bf16.gmra.mrb[0].mxu0 %v311
        %v1330 = vpop.f32.mrb[0].mxu0
        %v1331 = vadd.f32 0.0, %v1330
        %v1332 = vpop.f32.mrb[0].mxu0
        %v1333 = vpop.f32.mrb[0].mxu0
        %v1334 = vadd.f32 0.0, %v1333
        %v1335 = vpop.f32.mrb[0].mxu0
        %1336 = vmatprep.mubr.bf16.mxu0 %v360
        %1337 = vmatmul.mubr.bf16.gmra.mrb[0].mxu0 %v312
        %v1338 = vpop.f32.mrb[0].mxu0
        %v1339 = vadd.f32 0.0, %v1338
        %v1340 = vpop.f32.mrb[0].mxu0
        %v1341 = vpop.f32.mrb[0].mxu0
        %v1342 = vadd.f32 0.0, %v1341
        %v1343 = vpop.f32.mrb[0].mxu0
        %1344 = vmatprep.mubr.bf16.mxu0 %v361
        %1345 = vmatmul.mubr.bf16.gmra.mrb[0].mxu0 %v313
        %v1346 = vpop.f32.mrb[0].mxu0
        %v1347 = vadd.f32 0.0, %v1346
        %v1348 = vpop.f32.mrb[0].mxu0
        %v1349 = vpop.f32.mrb[0].mxu0
        %v1350 = vadd.f32 0.0, %v1349
        %v1351 = vpop.f32.mrb[0].mxu0
        %1352 = vmatprep.mubr.bf16.mxu0 %v362
        %1353 = vmatmul.mubr.bf16.gmra.mrb[0].mxu0 %v314
        %v1354 = vpop.f32.mrb[0].mxu0
        %v1355 = vadd.f32 0.0, %v1354
        %v1356 = vpop.f32.mrb[0].mxu0
        %v1357 = vpop.f32.mrb[0].mxu0
        %v1358 = vadd.f32 0.0, %v1357
        %v1359 = vpop.f32.mrb[0].mxu0
        %1360 = vmatprep.mubr.bf16.mxu0 %v363
        %1361 = vmatmul.mubr.bf16.gmra.mrb[0].mxu0 %v315
        %v1362 = vpop.f32.mrb[0].mxu0
        %v1363 = vadd.f32 0.0, %v1362
        %v1364 = vpop.f32.mrb[0].mxu0
        %v1365 = vpop.f32.mrb[0].mxu0
        %v1366 = vadd.f32 0.0, %v1365
        %v1367 = vpop.f32.mrb[0].mxu0
        %1368 = vmatprep.mubr.bf16.mxu0 %v364
        %1369 = vmatmul.mubr.bf16.gmra.mrb[0].mxu0 %v316
        %v1370 = vpop.f32.mrb[0].mxu0
        %v1371 = vadd.f32 0.0, %v1370
        %v1372 = vpop.f32.mrb[0].mxu0
        %v1373 = vpop.f32.mrb[0].mxu0
        %v1374 = vadd.f32 0.0, %v1373
        %v1375 = vpop.f32.mrb[0].mxu0
        %1376 = vmatprep.mubr.bf16.mxu0 %v365
        %1377 = vmatmul.mubr.bf16.gmra.mrb[0].mxu0 %v317
        %v1378 = vpop.f32.mrb[0].mxu0
        %v1379 = vadd.f32 0.0, %v1378
        %v1380 = vpop.f32.mrb[0].mxu0
        %v1381 = vpop.f32.mrb[0].mxu0
        %v1382 = vadd.f32 0.0, %v1381
        %v1383 = vpop.f32.mrb[0].mxu0
        %1384 = vmatprep.mubr.bf16.mxu0 %v366
        %1385 = vmatmul.mubr.bf16.gmra.mrb[0].mxu0 %v318
        %v1386 = vpop.f32.mrb[0].mxu0
        %v1387 = vadd.f32 0.0, %v1386
        %v1388 = vpop.f32.mrb[0].mxu0
        %v1389 = vpop.f32.mrb[0].mxu0
        %v1390 = vadd.f32 0.0, %v1389
        %v1391 = vpop.f32.mrb[0].mxu0
        %1392 = vmatprep.mubr.bf16.mxu0 %v367
        %1393 = vmatmul.mubr.bf16.gmra.mrb[0].mxu0 %v319
        %v1394 = vpop.f32.mrb[0].mxu0
        %v1395 = vadd.f32 0.0, %v1394
        %v1396 = vpop.f32.mrb[0].mxu0
        %v1397 = vpop.f32.mrb[0].mxu0
        %v1398 = vadd.f32 0.0, %v1397
        %v1399 = vpop.f32.mrb[0].mxu0
        %1400 = vmatprep.mubr.bf16.mxu0 %v368
        %1401 = vmatmul.mubr.bf16.gmra.mrb[0].mxu0 %v320
        %v1402 = vpop.f32.mrb[0].mxu0
        %v1403 = vadd.f32 0.0, %v1402
        %v1404 = vpop.f32.mrb[0].mxu0
        %v1405 = vpop.f32.mrb[0].mxu0
        %v1406 = vadd.f32 0.0, %v1405
        %v1407 = vpop.f32.mrb[0].mxu0
        %1408 = vmatprep.mubr.bf16.mxu0 %v369
        %1409 = vmatmul.mubr.bf16.gmra.mrb[0].mxu0 %v321
        %v1410 = vpop.f32.mrb[0].mxu0
        %v1411 = vadd.f32 0.0, %v1410
        %v1412 = vpop.f32.mrb[0].mxu0
        %v1413 = vpop.f32.mrb[0].mxu0
        %v1414 = vadd.f32 0.0, %v1413
        %v1415 = vpop.f32.mrb[0].mxu0
        %1416 = vmatprep.mubr.bf16.mxu0 %v370
        %1417 = vmatmul.mubr.bf16.gmra.mrb[0].mxu0 %v322
        %v1418 = vpop.f32.mrb[0].mxu0
        %v1419 = vadd.f32 0.0, %v1418
        %v1420 = vpop.f32.mrb[0].mxu0
        %v1421 = vpop.f32.mrb[0].mxu0
        %v1422 = vadd.f32 0.0, %v1421
        %v1423 = vpop.f32.mrb[0].mxu0
        %1424 = vmatprep.mubr.bf16.mxu0 %v371
        %1425 = vmatmul.mubr.bf16.gmra.mrb[0].mxu0 %v323
        %v1426 = vpop.f32.mrb[0].mxu0
        %v1427 = vadd.f32 0.0, %v1426
        %v1428 = vpop.f32.mrb[0].mxu0
        %v1429 = vpop.f32.mrb[0].mxu0
        %v1430 = vadd.f32 0.0, %v1429
        %v1431 = vpop.f32.mrb[0].mxu0
        %1432 = vmatprep.mubr.bf16.mxu0 %v372
        %1433 = vmatmul.mubr.bf16.gmra.mrb[0].mxu0 %v324
        %v1434 = vpop.f32.mrb[0].mxu0
        %v1435 = vadd.f32 0.0, %v1434
        %v1436 = vpop.f32.mrb[0].mxu0
        %v1437 = vpop.f32.mrb[0].mxu0
        %v1438 = vadd.f32 0.0, %v1437
        %v1439 = vpop.f32.mrb[0].mxu0
        %1440 = vmatprep.mubr.bf16.mxu0 %v373
        %1441 = vmatmul.mubr.bf16.gmra.mrb[0].mxu0 %v325
        %v1442 = vpop.f32.mrb[0].mxu0
        %v1443 = vadd.f32 0.0, %v1442
        %v1444 = vpop.f32.mrb[0].mxu0
        %v1445 = vpop.f32.mrb[0].mxu0
        %v1446 = vadd.f32 0.0, %v1445
        %v1447 = vpop.f32.mrb[0].mxu0
        %1448 = vdwg.mxu0
        %1449 = vmatprep.subr.bf16.mxu0 0
        %1450 = vmatpush1.bf16.msra.mxu0 %v1160
        %1451 = vmatprep.subr.bf16.mxu0 0
        %1452 = vmatpush1.bf16.msra.mxu0 %v1161
        %1453 = vmatprep.subr.bf16.mxu0 0
        %1454 = vmatpush1.bf16.msra.mxu0 %v1162
        %1455 = vmatprep.subr.bf16.mxu0 0
        %1456 = vmatpush1.bf16.msra.mxu0 %v1163
        %1457 = vmatprep.subr.bf16.mxu0 0
        %1458 = vmatpush1.bf16.msra.mxu0 %v1164
        %1459 = vmatprep.subr.bf16.mxu0 0
        %1460 = vmatpush1.bf16.msra.mxu0 %v1165
        %1461 = vmatprep.subr.bf16.mxu0 0
        %1462 = vmatpush1.bf16.msra.mxu0 %v1166
        %1463 = vmatprep.subr.bf16.mxu0 0
        %1464 = vmatpush1.bf16.msra.mxu0 %v1167
        %1465 = vmatprep.subr.bf16.mxu0 0
        %1466 = vmatpush1.bf16.msra.mxu0 %v1168
        %1467 = vmatprep.subr.bf16.mxu0 0
        %1468 = vmatpush1.bf16.msra.mxu0 %v1169
        %1469 = vmatprep.subr.bf16.mxu0 0
        %1470 = vmatpush1.bf16.msra.mxu0 %v1170
        %1471 = vmatprep.subr.bf16.mxu0 0
        %1472 = vmatpush1.bf16.msra.mxu0 %v1171
        %1473 = vmatprep.subr.bf16.mxu0 0
        %1474 = vmatpush1.bf16.msra.mxu0 %v1172
        %1475 = vmatprep.subr.bf16.mxu0 0
        %1476 = vmatpush1.bf16.msra.mxu0 %v1173
        %1477 = vmatprep.subr.bf16.mxu0 0
        %1478 = vmatpush1.bf16.msra.mxu0 %v1174
        %1479 = vmatprep.subr.bf16.mxu0 0
        %1480 = vmatpush1.bf16.msra.mxu0 %v1175
        %1481 = vmatprep.mubr.bf16.mxu0 %v455
        %1482 = vmatmul.mubr.bf16.gmra.mrb[0].mxu0 %v406
        %v1483 = vpop.f32.mrb[0].mxu0
        %v1484 = vadd.f32 %v1323, %v1483
        %v1485 = vpop.f32.mrb[0].mxu0
        %v1486 = vpop.f32.mrb[0].mxu0
        %v1487 = vadd.f32 %v1326, %v1486
        %v1488 = vpop.f32.mrb[0].mxu0
        %1489 = vmatprep.mubr.bf16.mxu0 %v456
        %1490 = vmatmul.mubr.bf16.gmra.mrb[0].mxu0 %v407
        %v1491 = vpop.f32.mrb[0].mxu0
        %v1492 = vadd.f32 %v1331, %v1491
        %v1493 = vpop.f32.mrb[0].mxu0
        %v1494 = vpop.f32.mrb[0].mxu0
        %v1495 = vadd.f32 %v1334, %v1494
        %v1496 = vpop.f32.mrb[0].mxu0
        %1497 = vmatprep.mubr.bf16.mxu0 %v457
        %1498 = vmatmul.mubr.bf16.gmra.mrb[0].mxu0 %v408
        %v1499 = vpop.f32.mrb[0].mxu0
        %v1500 = vadd.f32 %v1339, %v1499
        %v1501 = vpop.f32.mrb[0].mxu0
        %v1502 = vpop.f32.mrb[0].mxu0
        %v1503 = vadd.f32 %v1342, %v1502
        %v1504 = vpop.f32.mrb[0].mxu0
        %1505 = vmatprep.mubr.bf16.mxu0 %v458
        %1506 = vmatmul.mubr.bf16.gmra.mrb[0].mxu0 %v409
        %v1507 = vpop.f32.mrb[0].mxu0
        %v1508 = vadd.f32 %v1347, %v1507
        %v1509 = vpop.f32.mrb[0].mxu0
        %v1510 = vpop.f32.mrb[0].mxu0
        %v1511 = vadd.f32 %v1350, %v1510
        %v1512 = vpop.f32.mrb[0].mxu0
        %1513 = vmatprep.mubr.bf16.mxu0 %v459
        %1514 = vmatmul.mubr.bf16.gmra.mrb[0].mxu0 %v410
        %v1515 = vpop.f32.mrb[0].mxu0
        %v1516 = vadd.f32 %v1355, %v1515
        %v1517 = vpop.f32.mrb[0].mxu0
        %v1518 = vpop.f32.mrb[0].mxu0
        %v1519 = vadd.f32 %v1358, %v1518
        %v1520 = vpop.f32.mrb[0].mxu0
        %1521 = vmatprep.mubr.bf16.mxu0 %v460
        %1522 = vmatmul.mubr.bf16.gmra.mrb[0].mxu0 %v411
        %v1523 = vpop.f32.mrb[0].mxu0
        %v1524 = vadd.f32 %v1363, %v1523
        %v1525 = vpop.f32.mrb[0].mxu0
        %v1526 = vpop.f32.mrb[0].mxu0
        %v1527 = vadd.f32 %v1366, %v1526
        %v1528 = vpop.f32.mrb[0].mxu0
        %1529 = vmatprep.mubr.bf16.mxu0 %v461
        %1530 = vmatmul.mubr.bf16.gmra.mrb[0].mxu0 %v412
        %v1531 = vpop.f32.mrb[0].mxu0
        %v1532 = vadd.f32 %v1371, %v1531
        %v1533 = vpop.f32.mrb[0].mxu0
        %v1534 = vpop.f32.mrb[0].mxu0
        %v1535 = vadd.f32 %v1374, %v1534
        %v1536 = vpop.f32.mrb[0].mxu0
        %1537 = vmatprep.mubr.bf16.mxu0 %v462
        %1538 = vmatmul.mubr.bf16.gmra.mrb[0].mxu0 %v413
        %v1539 = vpop.f32.mrb[0].mxu0
        %v1540 = vadd.f32 %v1379, %v1539
        %v1541 = vpop.f32.mrb[0].mxu0
        %v1542 = vpop.f32.mrb[0].mxu0
        %v1543 = vadd.f32 %v1382, %v1542
        %v1544 = vpop.f32.mrb[0].mxu0
        %1545 = vmatprep.mubr.bf16.mxu0 %v463
        %1546 = vmatmul.mubr.bf16.gmra.mrb[0].mxu0 %v414
        %v1547 = vpop.f32.mrb[0].mxu0
        %v1548 = vadd.f32 %v1387, %v1547
        %v1549 = vpop.f32.mrb[0].mxu0
        %v1550 = vpop.f32.mrb[0].mxu0
        %v1551 = vadd.f32 %v1390, %v1550
        %v1552 = vpop.f32.mrb[0].mxu0
        %1553 = vmatprep.mubr.bf16.mxu0 %v464
        %1554 = vmatmul.mubr.bf16.gmra.mrb[0].mxu0 %v415
        %v1555 = vpop.f32.mrb[0].mxu0
        %v1556 = vadd.f32 %v1395, %v1555
        %v1557 = vpop.f32.mrb[0].mxu0
        %v1558 = vpop.f32.mrb[0].mxu0
        %v1559 = vadd.f32 %v1398, %v1558
        %v1560 = vpop.f32.mrb[0].mxu0
        %1561 = vmatprep.mubr.bf16.mxu0 %v465
        %1562 = vmatmul.mubr.bf16.gmra.mrb[0].mxu0 %v416
        %v1563 = vpop.f32.mrb[0].mxu0
        %v1564 = vadd.f32 %v1403, %v1563
        %v1565 = vpop.f32.mrb[0].mxu0
        %v1566 = vpop.f32.mrb[0].mxu0
        %v1567 = vadd.f32 %v1406, %v1566
        %v1568 = vpop.f32.mrb[0].mxu0
        %1569 = vmatprep.mubr.bf16.mxu0 %v466
        %1570 = vmatmul.mubr.bf16.gmra.mrb[0].mxu0 %v417
        %v1571 = vpop.f32.mrb[0].mxu0
        %v1572 = vadd.f32 %v1411, %v1571
        %v1573 = vpop.f32.mrb[0].mxu0
        %v1574 = vpop.f32.mrb[0].mxu0
        %v1575 = vadd.f32 %v1414, %v1574
        %v1576 = vpop.f32.mrb[0].mxu0
        %1577 = vmatprep.mubr.bf16.mxu0 %v467
        %1578 = vmatmul.mubr.bf16.gmra.mrb[0].mxu0 %v418
        %v1579 = vpop.f32.mrb[0].mxu0
        %v1580 = vadd.f32 %v1419, %v1579
        %v1581 = vpop.f32.mrb[0].mxu0
        %v1582 = vpop.f32.mrb[0].mxu0
        %v1583 = vadd.f32 %v1422, %v1582
        %v1584 = vpop.f32.mrb[0].mxu0
        %1585 = vmatprep.mubr.bf16.mxu0 %v468
        %1586 = vmatmul.mubr.bf16.gmra.mrb[0].mxu0 %v419
        %v1587 = vpop.f32.mrb[0].mxu0
        %v1588 = vadd.f32 %v1427, %v1587
        %v1589 = vpop.f32.mrb[0].mxu0
        %v1590 = vpop.f32.mrb[0].mxu0
        %v1591 = vadd.f32 %v1430, %v1590
        %v1592 = vpop.f32.mrb[0].mxu0
        %1593 = vmatprep.mubr.bf16.mxu0 %v469
        %1594 = vmatmul.mubr.bf16.gmra.mrb[0].mxu0 %v420
        %v1595 = vpop.f32.mrb[0].mxu0
        %v1596 = vadd.f32 %v1435, %v1595
        %v1597 = vpop.f32.mrb[0].mxu0
        %v1598 = vpop.f32.mrb[0].mxu0
        %v1599 = vadd.f32 %v1438, %v1598
        %v1600 = vpop.f32.mrb[0].mxu0
        %1601 = vmatprep.mubr.bf16.mxu0 %v470
        %1602 = vmatmul.mubr.bf16.gmra.mrb[0].mxu0 %v421
        %v1603 = vpop.f32.mrb[0].mxu0
        %v1604 = vadd.f32 %v1443, %v1603
        %v1605 = vpop.f32.mrb[0].mxu0
        %v1606 = vpop.f32.mrb[0].mxu0
        %v1607 = vadd.f32 %v1446, %v1606
        %v1608 = vpop.f32.mrb[0].mxu0
        %1609 = vdwg.mxu0
        %1610 = vmatprep.subr.bf16.mxu0 0
        %1611 = vmatpush1.bf16.msra.mxu0 %v1176
        %1612 = vmatprep.subr.bf16.mxu0 0
        %1613 = vmatpush1.bf16.msra.mxu0 %v1177
        %1614 = vmatprep.subr.bf16.mxu0 0
        %1615 = vmatpush1.bf16.msra.mxu0 %v1178
        %1616 = vmatprep.subr.bf16.mxu0 0
        %1617 = vmatpush1.bf16.msra.mxu0 %v1179
        %1618 = vmatprep.subr.bf16.mxu0 0
        %1619 = vmatpush1.bf16.msra.mxu0 %v1180
        %1620 = vmatprep.subr.bf16.mxu0 0
        %1621 = vmatpush1.bf16.msra.mxu0 %v1181
        %1622 = vmatprep.subr.bf16.mxu0 0
        %1623 = vmatpush1.bf16.msra.mxu0 %v1182
        %1624 = vmatprep.subr.bf16.mxu0 0
        %1625 = vmatpush1.bf16.msra.mxu0 %v1183
        %1626 = vmatprep.subr.bf16.mxu0 0
        %1627 = vmatpush1.bf16.msra.mxu0 %v1184
        %1628 = vmatprep.subr.bf16.mxu0 0
        %1629 = vmatpush1.bf16.msra.mxu0 %v1185
        %1630 = vmatprep.subr.bf16.mxu0 0
        %1631 = vmatpush1.bf16.msra.mxu0 %v1186
        %1632 = vmatprep.subr.bf16.mxu0 0
        %1633 = vmatpush1.bf16.msra.mxu0 %v1187
        %1634 = vmatprep.subr.bf16.mxu0 0
        %1635 = vmatpush1.bf16.msra.mxu0 %v1188
        %1636 = vmatprep.subr.bf16.mxu0 0
        %1637 = vmatpush1.bf16.msra.mxu0 %v1189
        %1638 = vmatprep.subr.bf16.mxu0 0
        %1639 = vmatpush1.bf16.msra.mxu0 %v1190
        %1640 = vmatprep.subr.bf16.mxu0 0
        %1641 = vmatpush1.bf16.msra.mxu0 %v1191
        %1642 = vmatprep.mubr.bf16.mxu0 %v551
        %1643 = vmatmul.mubr.bf16.gmra.mrb[0].mxu0 %v503
        %v1644 = vpop.f32.mrb[0].mxu0
        %v1645 = vadd.f32 %v1484, %v1644
        %v1646 = vpop.f32.mrb[0].mxu0
        %v1647 = vpop.f32.mrb[0].mxu0
        %v1648 = vadd.f32 %v1487, %v1647
        %v1649 = vpop.f32.mrb[0].mxu0
        %1650 = vmatprep.mubr.bf16.mxu0 %v552
        %1651 = vmatmul.mubr.bf16.gmra.mrb[0].mxu0 %v504
        %v1652 = vpop.f32.mrb[0].mxu0
        %v1653 = vadd.f32 %v1492, %v1652
        %v1654 = vpop.f32.mrb[0].mxu0
        %v1655 = vpop.f32.mrb[0].mxu0
        %v1656 = vadd.f32 %v1495, %v1655
        %v1657 = vpop.f32.mrb[0].mxu0
        %1658 = vmatprep.mubr.bf16.mxu0 %v553
        %1659 = vmatmul.mubr.bf16.gmra.mrb[0].mxu0 %v505
        %v1660 = vpop.f32.mrb[0].mxu0
        %v1661 = vadd.f32 %v1500, %v1660
        %v1662 = vpop.f32.mrb[0].mxu0
        %v1663 = vpop.f32.mrb[0].mxu0
        %v1664 = vadd.f32 %v1503, %v1663
        %v1665 = vpop.f32.mrb[0].mxu0
        %1666 = vmatprep.mubr.bf16.mxu0 %v554
        %1667 = vmatmul.mubr.bf16.gmra.mrb[0].mxu0 %v506
        %v1668 = vpop.f32.mrb[0].mxu0
        %v1669 = vadd.f32 %v1508, %v1668
        %v1670 = vpop.f32.mrb[0].mxu0
        %v1671 = vpop.f32.mrb[0].mxu0
        %v1672 = vadd.f32 %v1511, %v1671
        %v1673 = vpop.f32.mrb[0].mxu0
        %1674 = vmatprep.mubr.bf16.mxu0 %v555
        %1675 = vmatmul.mubr.bf16.gmra.mrb[0].mxu0 %v507
        %v1676 = vpop.f32.mrb[0].mxu0
        %v1677 = vadd.f32 %v1516, %v1676
        %v1678 = vpop.f32.mrb[0].mxu0
        %v1679 = vpop.f32.mrb[0].mxu0
        %v1680 = vadd.f32 %v1519, %v1679
        %v1681 = vpop.f32.mrb[0].mxu0
        %1682 = vmatprep.mubr.bf16.mxu0 %v556
        %1683 = vmatmul.mubr.bf16.gmra.mrb[0].mxu0 %v508
        %v1684 = vpop.f32.mrb[0].mxu0
        %v1685 = vadd.f32 %v1524, %v1684
        %v1686 = vpop.f32.mrb[0].mxu0
        %v1687 = vpop.f32.mrb[0].mxu0
        %v1688 = vadd.f32 %v1527, %v1687
        %v1689 = vpop.f32.mrb[0].mxu0
        %1690 = vmatprep.mubr.bf16.mxu0 %v557
        %1691 = vmatmul.mubr.bf16.gmra.mrb[0].mxu0 %v509
        %v1692 = vpop.f32.mrb[0].mxu0
        %v1693 = vadd.f32 %v1532, %v1692
        %v1694 = vpop.f32.mrb[0].mxu0
        %v1695 = vpop.f32.mrb[0].mxu0
        %v1696 = vadd.f32 %v1535, %v1695
        %v1697 = vpop.f32.mrb[0].mxu0
        %1698 = vmatprep.mubr.bf16.mxu0 %v558
        %1699 = vmatmul.mubr.bf16.gmra.mrb[0].mxu0 %v510
        %v1700 = vpop.f32.mrb[0].mxu0
        %v1701 = vadd.f32 %v1540, %v1700
        %v1702 = vpop.f32.mrb[0].mxu0
        %v1703 = vpop.f32.mrb[0].mxu0
        %v1704 = vadd.f32 %v1543, %v1703
        %v1705 = vpop.f32.mrb[0].mxu0
        %1706 = vmatprep.mubr.bf16.mxu0 %v559
        %1707 = vmatmul.mubr.bf16.gmra.mrb[0].mxu0 %v511
        %v1708 = vpop.f32.mrb[0].mxu0
        %v1709 = vadd.f32 %v1548, %v1708
        %v1710 = vpop.f32.mrb[0].mxu0
        %v1711 = vpop.f32.mrb[0].mxu0
        %v1712 = vadd.f32 %v1551, %v1711
        %v1713 = vpop.f32.mrb[0].mxu0
        %1714 = vmatprep.mubr.bf16.mxu0 %v560
        %1715 = vmatmul.mubr.bf16.gmra.mrb[0].mxu0 %v512
        %v1716 = vpop.f32.mrb[0].mxu0
        %v1717 = vadd.f32 %v1556, %v1716
        %v1718 = vpop.f32.mrb[0].mxu0
        %v1719 = vpop.f32.mrb[0].mxu0
        %v1720 = vadd.f32 %v1559, %v1719
        %v1721 = vpop.f32.mrb[0].mxu0
        %1722 = vmatprep.mubr.bf16.mxu0 %v561
        %1723 = vmatmul.mubr.bf16.gmra.mrb[0].mxu0 %v513
        %v1724 = vpop.f32.mrb[0].mxu0
        %v1725 = vadd.f32 %v1564, %v1724
        %v1726 = vpop.f32.mrb[0].mxu0
        %v1727 = vpop.f32.mrb[0].mxu0
        %v1728 = vadd.f32 %v1567, %v1727
        %v1729 = vpop.f32.mrb[0].mxu0
        %1730 = vmatprep.mubr.bf16.mxu0 %v562
        %1731 = vmatmul.mubr.bf16.gmra.mrb[0].mxu0 %v514
        %v1732 = vpop.f32.mrb[0].mxu0
        %v1733 = vadd.f32 %v1572, %v1732
        %v1734 = vpop.f32.mrb[0].mxu0
        %v1735 = vpop.f32.mrb[0].mxu0
        %v1736 = vadd.f32 %v1575, %v1735
        %v1737 = vpop.f32.mrb[0].mxu0
        %1738 = vmatprep.mubr.bf16.mxu0 %v563
        %1739 = vmatmul.mubr.bf16.gmra.mrb[0].mxu0 %v515
        %v1740 = vpop.f32.mrb[0].mxu0
        %v1741 = vadd.f32 %v1580, %v1740
        %v1742 = vpop.f32.mrb[0].mxu0
        %v1743 = vpop.f32.mrb[0].mxu0
        %v1744 = vadd.f32 %v1583, %v1743
        %v1745 = vpop.f32.mrb[0].mxu0
        %1746 = vmatprep.mubr.bf16.mxu0 %v564
        %1747 = vmatmul.mubr.bf16.gmra.mrb[0].mxu0 %v516
        %v1748 = vpop.f32.mrb[0].mxu0
        %v1749 = vadd.f32 %v1588, %v1748
        %v1750 = vpop.f32.mrb[0].mxu0
        %v1751 = vpop.f32.mrb[0].mxu0
        %v1752 = vadd.f32 %v1591, %v1751
        %v1753 = vpop.f32.mrb[0].mxu0
        %1754 = vmatprep.mubr.bf16.mxu0 %v565
        %1755 = vmatmul.mubr.bf16.gmra.mrb[0].mxu0 %v517
        %v1756 = vpop.f32.mrb[0].mxu0
        %v1757 = vadd.f32 %v1596, %v1756
        %v1758 = vpop.f32.mrb[0].mxu0
        %v1759 = vpop.f32.mrb[0].mxu0
        %v1760 = vadd.f32 %v1599, %v1759
        %v1761 = vpop.f32.mrb[0].mxu0
        %1762 = vmatprep.mubr.bf16.mxu0 %v566
        %1763 = vmatmul.mubr.bf16.gmra.mrb[0].mxu0 %v518
        %v1764 = vpop.f32.mrb[0].mxu0
        %v1765 = vadd.f32 %v1604, %v1764
        %v1766 = vpop.f32.mrb[0].mxu0
        %v1767 = vpop.f32.mrb[0].mxu0
        %v1768 = vadd.f32 %v1607, %v1767
        %v1769 = vpop.f32.mrb[0].mxu0
        %1770 = vdwg.mxu0
        %1771 = vmatprep.subr.bf16.mxu0 0
        %1772 = vmatpush1.bf16.msra.mxu0 %v1192
        %1773 = vmatprep.subr.bf16.mxu0 0
        %1774 = vmatpush1.bf16.msra.mxu0 %v1193
        %1775 = vmatprep.subr.bf16.mxu0 0
        %1776 = vmatpush1.bf16.msra.mxu0 %v1194
        %1777 = vmatprep.subr.bf16.mxu0 0
        %1778 = vmatpush1.bf16.msra.mxu0 %v1195
        %1779 = vmatprep.subr.bf16.mxu0 0
        %1780 = vmatpush1.bf16.msra.mxu0 %v1196
        %1781 = vmatprep.subr.bf16.mxu0 0
        %1782 = vmatpush1.bf16.msra.mxu0 %v1197
        %1783 = vmatprep.subr.bf16.mxu0 0
        %1784 = vmatpush1.bf16.msra.mxu0 %v1198
        %1785 = vmatprep.subr.bf16.mxu0 0
        %1786 = vmatpush1.bf16.msra.mxu0 %v1199
        %1787 = vmatprep.subr.bf16.mxu0 0
        %1788 = vmatpush1.bf16.msra.mxu0 %v1200
        %1789 = vmatprep.subr.bf16.mxu0 0
        %1790 = vmatpush1.bf16.msra.mxu0 %v1201
        %1791 = vmatprep.subr.bf16.mxu0 0
        %1792 = vmatpush1.bf16.msra.mxu0 %v1202
        %1793 = vmatprep.subr.bf16.mxu0 0
        %1794 = vmatpush1.bf16.msra.mxu0 %v1203
        %1795 = vmatprep.subr.bf16.mxu0 0
        %1796 = vmatpush1.bf16.msra.mxu0 %v1204
        %1797 = vmatprep.subr.bf16.mxu0 0
        %1798 = vmatpush1.bf16.msra.mxu0 %v1205
        %1799 = vmatprep.subr.bf16.mxu0 0
        %1800 = vmatpush1.bf16.msra.mxu0 %v1206
        %1801 = vmatprep.subr.bf16.mxu0 0
        %1802 = vmatpush1.bf16.msra.mxu0 %v1207
        %1803 = vmatprep.mubr.bf16.mxu0 %v648
        %1804 = vmatmul.mubr.bf16.gmra.mrb[0].mxu0 %v600
        %v1805 = vpop.f32.mrb[0].mxu0
        %v1806 = vadd.f32 %v1645, %v1805
        %v1807 = vpop.f32.mrb[0].mxu0
        %v1808 = vpop.f32.mrb[0].mxu0
        %v1809 = vadd.f32 %v1648, %v1808
        %v1810 = vpop.f32.mrb[0].mxu0
        %1811 = vmatprep.mubr.bf16.mxu0 %v649
        %1812 = vmatmul.mubr.bf16.gmra.mrb[0].mxu0 %v601
        %v1813 = vpop.f32.mrb[0].mxu0
        %v1814 = vadd.f32 %v1653, %v1813
        %v1815 = vpop.f32.mrb[0].mxu0
        %v1816 = vpop.f32.mrb[0].mxu0
        %v1817 = vadd.f32 %v1656, %v1816
        %v1818 = vpop.f32.mrb[0].mxu0
        %1819 = vmatprep.mubr.bf16.mxu0 %v650
        %1820 = vmatmul.mubr.bf16.gmra.mrb[0].mxu0 %v602
        %v1821 = vpop.f32.mrb[0].mxu0
        %v1822 = vadd.f32 %v1661, %v1821
        %v1823 = vpop.f32.mrb[0].mxu0
        %v1824 = vpop.f32.mrb[0].mxu0
        %v1825 = vadd.f32 %v1664, %v1824
        %v1826 = vpop.f32.mrb[0].mxu0
        %1827 = vmatprep.mubr.bf16.mxu0 %v651
        %1828 = vmatmul.mubr.bf16.gmra.mrb[0].mxu0 %v603
        %v1829 = vpop.f32.mrb[0].mxu0
        %v1830 = vadd.f32 %v1669, %v1829
        %v1831 = vpop.f32.mrb[0].mxu0
        %v1832 = vpop.f32.mrb[0].mxu0
        %v1833 = vadd.f32 %v1672, %v1832
        %v1834 = vpop.f32.mrb[0].mxu0
        %1835 = vmatprep.mubr.bf16.mxu0 %v652
        %1836 = vmatmul.mubr.bf16.gmra.mrb[0].mxu0 %v604
        %v1837 = vpop.f32.mrb[0].mxu0
        %v1838 = vadd.f32 %v1677, %v1837
        %v1839 = vpop.f32.mrb[0].mxu0
        %v1840 = vpop.f32.mrb[0].mxu0
        %v1841 = vadd.f32 %v1680, %v1840
        %v1842 = vpop.f32.mrb[0].mxu0
        %1843 = vmatprep.mubr.bf16.mxu0 %v653
        %1844 = vmatmul.mubr.bf16.gmra.mrb[0].mxu0 %v605
        %v1845 = vpop.f32.mrb[0].mxu0
        %v1846 = vadd.f32 %v1685, %v1845
        %v1847 = vpop.f32.mrb[0].mxu0
        %v1848 = vpop.f32.mrb[0].mxu0
        %v1849 = vadd.f32 %v1688, %v1848
        %v1850 = vpop.f32.mrb[0].mxu0
        %1851 = vmatprep.mubr.bf16.mxu0 %v654
        %1852 = vmatmul.mubr.bf16.gmra.mrb[0].mxu0 %v606
        %v1853 = vpop.f32.mrb[0].mxu0
        %v1854 = vadd.f32 %v1693, %v1853
        %v1855 = vpop.f32.mrb[0].mxu0
        %v1856 = vpop.f32.mrb[0].mxu0
        %v1857 = vadd.f32 %v1696, %v1856
        %v1858 = vpop.f32.mrb[0].mxu0
        %1859 = vmatprep.mubr.bf16.mxu0 %v655
        %1860 = vmatmul.mubr.bf16.gmra.mrb[0].mxu0 %v607
        %v1861 = vpop.f32.mrb[0].mxu0
        %v1862 = vadd.f32 %v1701, %v1861
        %v1863 = vpop.f32.mrb[0].mxu0
        %v1864 = vpop.f32.mrb[0].mxu0
        %v1865 = vadd.f32 %v1704, %v1864
        %v1866 = vpop.f32.mrb[0].mxu0
        %1867 = vmatprep.mubr.bf16.mxu0 %v656
        %1868 = vmatmul.mubr.bf16.gmra.mrb[0].mxu0 %v608
        %v1869 = vpop.f32.mrb[0].mxu0
        %v1870 = vadd.f32 %v1709, %v1869
        %v1871 = vpop.f32.mrb[0].mxu0
        %v1872 = vpop.f32.mrb[0].mxu0
        %v1873 = vadd.f32 %v1712, %v1872
        %v1874 = vpop.f32.mrb[0].mxu0
        %1875 = vmatprep.mubr.bf16.mxu0 %v657
        %1876 = vmatmul.mubr.bf16.gmra.mrb[0].mxu0 %v609
        %v1877 = vpop.f32.mrb[0].mxu0
        %v1878 = vadd.f32 %v1717, %v1877
        %v1879 = vpop.f32.mrb[0].mxu0
        %v1880 = vpop.f32.mrb[0].mxu0
        %v1881 = vadd.f32 %v1720, %v1880
        %v1882 = vpop.f32.mrb[0].mxu0
        %1883 = vmatprep.mubr.bf16.mxu0 %v658
        %1884 = vmatmul.mubr.bf16.gmra.mrb[0].mxu0 %v610
        %v1885 = vpop.f32.mrb[0].mxu0
        %v1886 = vadd.f32 %v1725, %v1885
        %v1887 = vpop.f32.mrb[0].mxu0
        %v1888 = vpop.f32.mrb[0].mxu0
        %v1889 = vadd.f32 %v1728, %v1888
        %v1890 = vpop.f32.mrb[0].mxu0
        %1891 = vmatprep.mubr.bf16.mxu0 %v659
        %1892 = vmatmul.mubr.bf16.gmra.mrb[0].mxu0 %v611
        %v1893 = vpop.f32.mrb[0].mxu0
        %v1894 = vadd.f32 %v1733, %v1893
        %v1895 = vpop.f32.mrb[0].mxu0
        %v1896 = vpop.f32.mrb[0].mxu0
        %v1897 = vadd.f32 %v1736, %v1896
        %v1898 = vpop.f32.mrb[0].mxu0
        %1899 = vmatprep.mubr.bf16.mxu0 %v660
        %1900 = vmatmul.mubr.bf16.gmra.mrb[0].mxu0 %v612
        %v1901 = vpop.f32.mrb[0].mxu0
        %v1902 = vadd.f32 %v1741, %v1901
        %v1903 = vpop.f32.mrb[0].mxu0
        %v1904 = vpop.f32.mrb[0].mxu0
        %v1905 = vadd.f32 %v1744, %v1904
        %v1906 = vpop.f32.mrb[0].mxu0
        %1907 = vmatprep.mubr.bf16.mxu0 %v661
        %1908 = vmatmul.mubr.bf16.gmra.mrb[0].mxu0 %v613
        %v1909 = vpop.f32.mrb[0].mxu0
        %v1910 = vadd.f32 %v1749, %v1909
        %v1911 = vpop.f32.mrb[0].mxu0
        %v1912 = vpop.f32.mrb[0].mxu0
        %v1913 = vadd.f32 %v1752, %v1912
        %v1914 = vpop.f32.mrb[0].mxu0
        %1915 = vmatprep.mubr.bf16.mxu0 %v662
        %1916 = vmatmul.mubr.bf16.gmra.mrb[0].mxu0 %v614
        %v1917 = vpop.f32.mrb[0].mxu0
        %v1918 = vadd.f32 %v1757, %v1917
        %v1919 = vpop.f32.mrb[0].mxu0
        %v1920 = vpop.f32.mrb[0].mxu0
        %v1921 = vadd.f32 %v1760, %v1920
        %v1922 = vpop.f32.mrb[0].mxu0
        %1923 = vmatprep.mubr.bf16.mxu0 %v663
        %1924 = vmatmul.mubr.bf16.gmra.mrb[0].mxu0 %v615
        %v1925 = vpop.f32.mrb[0].mxu0
        %v1926 = vadd.f32 %v1765, %v1925
        %v1927 = vpop.f32.mrb[0].mxu0
        %v1928 = vpop.f32.mrb[0].mxu0
        %v1929 = vadd.f32 %v1768, %v1928
        %v1930 = vpop.f32.mrb[0].mxu0
        %1931 = vdwg.mxu0
        %1932 = vmatprep.subr.bf16.mxu0 0
        %1933 = vmatpush1.bf16.msra.mxu0 %v1208
        %1934 = vmatprep.subr.bf16.mxu0 0
        %1935 = vmatpush1.bf16.msra.mxu0 %v1209
        %1936 = vmatprep.subr.bf16.mxu0 0
        %1937 = vmatpush1.bf16.msra.mxu0 %v1210
        %1938 = vmatprep.subr.bf16.mxu0 0
        %1939 = vmatpush1.bf16.msra.mxu0 %v1211
        %1940 = vmatprep.subr.bf16.mxu0 0
        %1941 = vmatpush1.bf16.msra.mxu0 %v1212
        %1942 = vmatprep.subr.bf16.mxu0 0
        %1943 = vmatpush1.bf16.msra.mxu0 %v1213
        %1944 = vmatprep.subr.bf16.mxu0 0
        %1945 = vmatpush1.bf16.msra.mxu0 %v1214
        %1946 = vmatprep.subr.bf16.mxu0 0
        %1947 = vmatpush1.bf16.msra.mxu0 %v1215
        %1948 = vmatprep.subr.bf16.mxu0 0
        %1949 = vmatpush1.bf16.msra.mxu0 0
        %1950 = vmatprep.subr.bf16.mxu0 0
        %1951 = vmatpush1.bf16.msra.mxu0 0
        %1952 = vmatprep.subr.bf16.mxu0 0
        %1953 = vmatpush1.bf16.msra.mxu0 0
        %1954 = vmatprep.subr.bf16.mxu0 0
        %1955 = vmatpush1.bf16.msra.mxu0 0
        %1956 = vmatprep.subr.bf16.mxu0 0
        %1957 = vmatpush1.bf16.msra.mxu0 0
        %1958 = vmatprep.subr.bf16.mxu0 0
        %1959 = vmatpush1.bf16.msra.mxu0 0
        %1960 = vmatprep.subr.bf16.mxu0 0
        %1961 = vmatpush1.bf16.msra.mxu0 0
        %1962 = vmatprep.subr.bf16.mxu0 0
        %1963 = vmatpush1.bf16.msra.mxu0 0
        %1964 = vmatprep.mubr.bf16.mxu0 0
        %1965 = vmatmul.mubr.bf16.gmra.mrb[0].mxu0 %v696
        %v1966 = vpop.f32.mrb[0].mxu0
        %v1967 = vadd.f32 %v1806, %v1966
        %v1968 = vpop.f32.mrb[0].mxu0
        %v1969 = vpop.f32.mrb[0].mxu0
        %v1970 = vadd.f32 %v1809, %v1969
        %v1971 = vpop.f32.mrb[0].mxu0
        %1972 = vmatprep.mubr.bf16.mxu0 0
        %1973 = vmatmul.mubr.bf16.gmra.mrb[0].mxu0 %v697
        %v1974 = vpop.f32.mrb[0].mxu0
        %v1975 = vadd.f32 %v1814, %v1974
        %v1976 = vpop.f32.mrb[0].mxu0
        %v1977 = vpop.f32.mrb[0].mxu0
        %v1978 = vadd.f32 %v1817, %v1977
        %v1979 = vpop.f32.mrb[0].mxu0
        %1980 = vmatprep.mubr.bf16.mxu0 0
        %1981 = vmatmul.mubr.bf16.gmra.mrb[0].mxu0 %v698
        %v1982 = vpop.f32.mrb[0].mxu0
        %v1983 = vadd.f32 %v1822, %v1982
        %v1984 = vpop.f32.mrb[0].mxu0
        %v1985 = vpop.f32.mrb[0].mxu0
        %v1986 = vadd.f32 %v1825, %v1985
        %v1987 = vpop.f32.mrb[0].mxu0
        %1988 = vmatprep.mubr.bf16.mxu0 0
        %1989 = vmatmul.mubr.bf16.gmra.mrb[0].mxu0 %v699
        %v1990 = vpop.f32.mrb[0].mxu0
        %v1991 = vadd.f32 %v1830, %v1990
        %v1992 = vpop.f32.mrb[0].mxu0
        %v1993 = vpop.f32.mrb[0].mxu0
        %v1994 = vadd.f32 %v1833, %v1993
        %v1995 = vpop.f32.mrb[0].mxu0
        %1996 = vmatprep.mubr.bf16.mxu0 0
        %1997 = vmatmul.mubr.bf16.gmra.mrb[0].mxu0 %v700
        %v1998 = vpop.f32.mrb[0].mxu0
        %v1999 = vadd.f32 %v1838, %v1998
        %v2000 = vpop.f32.mrb[0].mxu0
        %v2001 = vpop.f32.mrb[0].mxu0
        %v2002 = vadd.f32 %v1841, %v2001
        %v2003 = vpop.f32.mrb[0].mxu0
        %2004 = vmatprep.mubr.bf16.mxu0 0
        %2005 = vmatmul.mubr.bf16.gmra.mrb[0].mxu0 %v701
        %v2006 = vpop.f32.mrb[0].mxu0
        %v2007 = vadd.f32 %v1846, %v2006
        %v2008 = vpop.f32.mrb[0].mxu0
        %v2009 = vpop.f32.mrb[0].mxu0
        %v2010 = vadd.f32 %v1849, %v2009
        %v2011 = vpop.f32.mrb[0].mxu0
        %2012 = vmatprep.mubr.bf16.mxu0 0
        %2013 = vmatmul.mubr.bf16.gmra.mrb[0].mxu0 %v702
        %v2014 = vpop.f32.mrb[0].mxu0
        %v2015 = vadd.f32 %v1854, %v2014
        %v2016 = vpop.f32.mrb[0].mxu0
        %v2017 = vpop.f32.mrb[0].mxu0
        %v2018 = vadd.f32 %v1857, %v2017
        %v2019 = vpop.f32.mrb[0].mxu0
        %2020 = vmatprep.mubr.bf16.mxu0 0
        %2021 = vmatmul.mubr.bf16.gmra.mrb[0].mxu0 %v703
        %v2022 = vpop.f32.mrb[0].mxu0
        %v2023 = vadd.f32 %v1862, %v2022
        %v2024 = vpop.f32.mrb[0].mxu0
        %v2025 = vpop.f32.mrb[0].mxu0
        %v2026 = vadd.f32 %v1865, %v2025
        %v2027 = vpop.f32.mrb[0].mxu0
        %2028 = vmatprep.mubr.bf16.mxu0 0
        %2029 = vmatmul.mubr.bf16.gmra.mrb[0].mxu0 %v704
        %v2030 = vpop.f32.mrb[0].mxu0
        %v2031 = vadd.f32 %v1870, %v2030
        %v2032 = vpop.f32.mrb[0].mxu0
        %v2033 = vpop.f32.mrb[0].mxu0
        %v2034 = vadd.f32 %v1873, %v2033
        %v2035 = vpop.f32.mrb[0].mxu0
        %2036 = vmatprep.mubr.bf16.mxu0 0
        %2037 = vmatmul.mubr.bf16.gmra.mrb[0].mxu0 %v705
        %v2038 = vpop.f32.mrb[0].mxu0
        %v2039 = vadd.f32 %v1878, %v2038
        %v2040 = vpop.f32.mrb[0].mxu0
        %v2041 = vpop.f32.mrb[0].mxu0
        %v2042 = vadd.f32 %v1881, %v2041
        %v2043 = vpop.f32.mrb[0].mxu0
        %2044 = vmatprep.mubr.bf16.mxu0 0
        %2045 = vmatmul.mubr.bf16.gmra.mrb[0].mxu0 %v706
        %v2046 = vpop.f32.mrb[0].mxu0
        %v2047 = vadd.f32 %v1886, %v2046
        %v2048 = vpop.f32.mrb[0].mxu0
        %v2049 = vpop.f32.mrb[0].mxu0
        %v2050 = vadd.f32 %v1889, %v2049
        %v2051 = vpop.f32.mrb[0].mxu0
        %2052 = vmatprep.mubr.bf16.mxu0 0
        %2053 = vmatmul.mubr.bf16.gmra.mrb[0].mxu0 %v707
        %v2054 = vpop.f32.mrb[0].mxu0
        %v2055 = vadd.f32 %v1894, %v2054
        %v2056 = vpop.f32.mrb[0].mxu0
        %v2057 = vpop.f32.mrb[0].mxu0
        %v2058 = vadd.f32 %v1897, %v2057
        %v2059 = vpop.f32.mrb[0].mxu0
        %2060 = vmatprep.mubr.bf16.mxu0 0
        %2061 = vmatmul.mubr.bf16.gmra.mrb[0].mxu0 %v708
        %v2062 = vpop.f32.mrb[0].mxu0
        %v2063 = vadd.f32 %v1902, %v2062
        %v2064 = vpop.f32.mrb[0].mxu0
        %v2065 = vpop.f32.mrb[0].mxu0
        %v2066 = vadd.f32 %v1905, %v2065
        %v2067 = vpop.f32.mrb[0].mxu0
        %2068 = vmatprep.mubr.bf16.mxu0 0
        %2069 = vmatmul.mubr.bf16.gmra.mrb[0].mxu0 %v709
        %v2070 = vpop.f32.mrb[0].mxu0
        %v2071 = vadd.f32 %v1910, %v2070
        %v2072 = vpop.f32.mrb[0].mxu0
        %v2073 = vpop.f32.mrb[0].mxu0
        %v2074 = vadd.f32 %v1913, %v2073
        %v2075 = vpop.f32.mrb[0].mxu0
        %2076 = vmatprep.mubr.bf16.mxu0 0
        %2077 = vmatmul.mubr.bf16.gmra.mrb[0].mxu0 %v710
        %v2078 = vpop.f32.mrb[0].mxu0
        %v2079 = vadd.f32 %v1918, %v2078
        %v2080 = vpop.f32.mrb[0].mxu0
        %v2081 = vpop.f32.mrb[0].mxu0
        %v2082 = vadd.f32 %v1921, %v2081
        %v2083 = vpop.f32.mrb[0].mxu0
        %2084 = vmatprep.mubr.bf16.mxu0 0
        %2085 = vmatmul.mubr.bf16.gmra.mrb[0].mxu0 %v711
        %v2086 = vpop.f32.mrb[0].mxu0
        %v2087 = vadd.f32 %v1926, %v2086
        %v2088 = vpop.f32.mrb[0].mxu0
        %v2089 = vpop.f32.mrb[0].mxu0
        %v2090 = vadd.f32 %v1929, %v2089
        %v2091 = vpop.f32.mrb[0].mxu0
        %2092 = vdwg.mxu0
        %v2093 = vld [vmem:[%s2] sm:$0x1]
        %v2095 = vlaneseq
        %v2096 = vshrl.u32 %v2095, 7
        %v2097 = vsub.s32 0, %v2096
        %v2098 = vrot.slane %v2093, %v2097
        %v2100 = vmul.f32 %v1967, %v2098
        %v2101 = vmul.f32 %v1970, %v2098
        %v2102 = vmul.f32 %v1975, %v2098
        %v2103 = vmul.f32 %v1978, %v2098
        %v2104 = vmul.f32 %v1983, %v2098
        %v2105 = vmul.f32 %v1986, %v2098
        %v2106 = vmul.f32 %v1991, %v2098
        %v2107 = vmul.f32 %v1994, %v2098
        %v2108 = vmul.f32 %v1999, %v2098
        %v2109 = vmul.f32 %v2002, %v2098
        %v2110 = vmul.f32 %v2007, %v2098
        %v2111 = vmul.f32 %v2010, %v2098
        %v2112 = vmul.f32 %v2015, %v2098
        %v2113 = vmul.f32 %v2018, %v2098
        %v2114 = vmul.f32 %v2023, %v2098
        %v2115 = vmul.f32 %v2026, %v2098
        %v2116 = vmul.f32 %v2031, %v2098
        %v2117 = vmul.f32 %v2034, %v2098
        %v2118 = vmul.f32 %v2039, %v2098
        %v2119 = vmul.f32 %v2042, %v2098
        %v2120 = vmul.f32 %v2047, %v2098
        %v2121 = vmul.f32 %v2050, %v2098
        %v2122 = vmul.f32 %v2055, %v2098
        %v2123 = vmul.f32 %v2058, %v2098
        %v2124 = vmul.f32 %v2063, %v2098
        %v2125 = vmul.f32 %v2066, %v2098
        %v2126 = vmul.f32 %v2071, %v2098
        %v2127 = vmul.f32 %v2074, %v2098
        %v2128 = vmul.f32 %v2079, %v2098
        %v2129 = vmul.f32 %v2082, %v2098
        %v2130 = vmul.f32 %v2087, %v2098
        %v2131 = vmul.f32 %v2090, %v2098
        %v2132 = vld [vmem:[%s3] sm:$0x1]
        %v2134 = vlaneseq
        %v2135 = vshrl.u32 %v2134, 7
        %v2136 = vsub.s32 0, %v2135
        %v2137 = vrot.slane %v2132, %v2136
        %v2139 = vadd.f32 %v2100, %v2137
        %v2140 = vadd.f32 %v2101, %v2137
        %v2141 = vadd.f32 %v2102, %v2137
        %v2142 = vadd.f32 %v2103, %v2137
        %v2143 = vadd.f32 %v2104, %v2137
        %v2144 = vadd.f32 %v2105, %v2137
        %v2145 = vadd.f32 %v2106, %v2137
        %v2146 = vadd.f32 %v2107, %v2137
        %v2147 = vadd.f32 %v2108, %v2137
        %v2148 = vadd.f32 %v2109, %v2137
        %v2149 = vadd.f32 %v2110, %v2137
        %v2150 = vadd.f32 %v2111, %v2137
        %v2151 = vadd.f32 %v2112, %v2137
        %v2152 = vadd.f32 %v2113, %v2137
        %v2153 = vadd.f32 %v2114, %v2137
        %v2154 = vadd.f32 %v2115, %v2137
        %v2155 = vadd.f32 %v2116, %v2137
        %v2156 = vadd.f32 %v2117, %v2137
        %v2157 = vadd.f32 %v2118, %v2137
        %v2158 = vadd.f32 %v2119, %v2137
        %v2159 = vadd.f32 %v2120, %v2137
        %v2160 = vadd.f32 %v2121, %v2137
        %v2161 = vadd.f32 %v2122, %v2137
        %v2162 = vadd.f32 %v2123, %v2137
        %v2163 = vadd.f32 %v2124, %v2137
        %v2164 = vadd.f32 %v2125, %v2137
        %v2165 = vadd.f32 %v2126, %v2137
        %v2166 = vadd.f32 %v2127, %v2137
        %v2167 = vadd.f32 %v2128, %v2137
        %v2168 = vadd.f32 %v2129, %v2137
        %v2169 = vadd.f32 %v2130, %v2137
        %v2170 = vadd.f32 %v2131, %v2137
        %v2171 = vmax.f32 %v2139, 0.0
        %v2172 = vmax.f32 %v2140, 0.0
        %v2173 = vmax.f32 %v2141, 0.0
        %v2174 = vmax.f32 %v2142, 0.0
        %v2175 = vmax.f32 %v2143, 0.0
        %v2176 = vmax.f32 %v2144, 0.0
        %v2177 = vmax.f32 %v2145, 0.0
        %v2178 = vmax.f32 %v2146, 0.0
        %v2179 = vmax.f32 %v2147, 0.0
        %v2180 = vmax.f32 %v2148, 0.0
        %v2181 = vmax.f32 %v2149, 0.0
        %v2182 = vmax.f32 %v2150, 0.0
        %v2183 = vmax.f32 %v2151, 0.0
        %v2184 = vmax.f32 %v2152, 0.0
        %v2185 = vmax.f32 %v2153, 0.0
        %v2186 = vmax.f32 %v2154, 0.0
        %v2187 = vmax.f32 %v2155, 0.0
        %v2188 = vmax.f32 %v2156, 0.0
        %v2189 = vmax.f32 %v2157, 0.0
        %v2190 = vmax.f32 %v2158, 0.0
        %v2191 = vmax.f32 %v2159, 0.0
        %v2192 = vmax.f32 %v2160, 0.0
        %v2193 = vmax.f32 %v2161, 0.0
        %v2194 = vmax.f32 %v2162, 0.0
        %v2195 = vmax.f32 %v2163, 0.0
        %v2196 = vmax.f32 %v2164, 0.0
        %v2197 = vmax.f32 %v2165, 0.0
        %v2198 = vmax.f32 %v2166, 0.0
        %v2199 = vmax.f32 %v2167, 0.0
        %v2200 = vmax.f32 %v2168, 0.0
        %v2201 = vmax.f32 %v2169, 0.0
        %v2202 = vmax.f32 %v2170, 0.0
        %2203 = vst [vmem:[#allocation2] sm:$0xf] 0
        %2204 = vst [vmem:[#allocation2 + $0x4] sm:$0xf] 0
        %2205 = vst [vmem:[#allocation2 + $0x8] sm:$0x1] 0
        %2206 = vst [vmem:[#allocation2 + $0xc] sm:$0xf] 0
        %2207 = vst [vmem:[#allocation2 + $0x10] sm:$0xf] 0
        %2208 = vst [vmem:[#allocation2 + $0x14] sm:$0x1] 0
        %2209 = vst [vmem:[#allocation2 + $0x18] sm:$0xf] 0
        %2210 = vst [vmem:[#allocation2 + $0x1c] sm:$0xf] 0
        %2211 = vst [vmem:[#allocation2 + $0x20] sm:$0x1] 0
        %2212 = vst [vmem:[#allocation2 + $0x24] sm:$0xf] 0
        %2213 = vst [vmem:[#allocation2 + $0x28] sm:$0xf] 0
        %2214 = vst [vmem:[#allocation2 + $0x2c] sm:$0x1] 0
        %2215 = vst [vmem:[#allocation2 + $0x30] sm:$0xf] 0
        %2216 = vst [vmem:[#allocation2 + $0x34] sm:$0xf] 0
        %2217 = vst [vmem:[#allocation2 + $0x38] sm:$0x1] 0
        %2218 = vst [vmem:[#allocation2 + $0x3c] sm:$0xf] 0
        %2219 = vst [vmem:[#allocation2 + $0x40] sm:$0xf] 0
        %2220 = vst [vmem:[#allocation2 + $0x44] sm:$0x1] 0
        %2221 = vst [vmem:[#allocation2 + $0x48] sm:$0xf] 0
        %2222 = vst [vmem:[#allocation2 + $0x4c] sm:$0xf] 0
        %2223 = vst [vmem:[#allocation2 + $0x50] sm:$0x1] 0
        %2224 = vst [vmem:[#allocation2 + $0x54] sm:$0xf] 0
        %2225 = vst [vmem:[#allocation2 + $0x58] sm:$0xf] 0
        %2226 = vst [vmem:[#allocation2 + $0x5c] sm:$0x1] 0
        %2227 = vst [vmem:[#allocation2 + $0x60] sm:$0xf] 0
        %2228 = vst [vmem:[#allocation2 + $0x64] sm:$0xf] 0
        %2229 = vst [vmem:[#allocation2 + $0x68] sm:$0x1] 0
        %2230 = vst [vmem:[#allocation2 + $0x6c] sm:$0xf] 0
        %2231 = vst [vmem:[#allocation2 + $0x70] sm:$0xf] 0
        %2232 = vst [vmem:[#allocation2 + $0x74] sm:$0x1] 0
        %2233 = vst [vmem:[#allocation2 + $0x78] sm:$0xf] 0
        %2234 = vst [vmem:[#allocation2 + $0x7c] sm:$0xf] 0
        %2235 = vst [vmem:[#allocation2 + $0x80] sm:$0x1] 0
        %2236 = vst [vmem:[#allocation2 + $0x84] sm:$0xf] 0
        %2237 = vst [vmem:[#allocation2 + $0x88] sm:$0xf] 0
        %2238 = vst [vmem:[#allocation2 + $0x8c] sm:$0x1] 0
        %2239 = vst [vmem:[#allocation2 + $0x90] sm:$0xf] 0
        %2240 = vst [vmem:[#allocation2 + $0x94] sm:$0xf] 0
        %2241 = vst [vmem:[#allocation2 + $0x98] sm:$0x1] 0
        %2242 = vst [vmem:[#allocation2 + $0x9c] sm:$0xf] 0
        %2243 = vst [vmem:[#allocation2 + $0xa0] sm:$0xf] 0
        %2244 = vst [vmem:[#allocation2 + $0xa4] sm:$0x1] 0
        %2245 = vst [vmem:[#allocation2 + $0xa8] sm:$0xf] 0
        %2246 = vst [vmem:[#allocation2 + $0xac] sm:$0xf] 0
        %2247 = vst [vmem:[#allocation2 + $0xb0] sm:$0x1] 0
        %2248 = vst [vmem:[#allocation2 + $0xb4] sm:$0xf] 0
        %2249 = vst [vmem:[#allocation2 + $0xb8] sm:$0xf] 0
        %2250 = vst [vmem:[#allocation2 + $0xbc] sm:$0x1] 0
        %2251 = vst [vmem:[#allocation2 + $0xc0] sm:$0xf] 0
        %2252 = vst [vmem:[#allocation2 + $0xc4] sm:$0xf] 0
        %2253 = vst [vmem:[#allocation2 + $0xc8] sm:$0x1] 0
        %2254 = vst [vmem:[#allocation2 + $0xcc] sm:$0xf] 0
        %2255 = vst [vmem:[#allocation2 + $0xd0] sm:$0xf] 0
        %2256 = vst [vmem:[#allocation2 + $0xd4] sm:$0x1] 0
        %v2257 = vpack.c.bf16 %v2172, %v2171
        %v2258 = vpack.c.bf16 %v2174, %v2173
        %v2259 = vpack.c.bf16 %v2176, %v2175
        %v2260 = vpack.c.bf16 %v2178, %v2177
        %v2261 = vpack.c.bf16 %v2180, %v2179
        %v2262 = vpack.c.bf16 %v2182, %v2181
        %v2263 = vpack.c.bf16 %v2184, %v2183
        %v2264 = vpack.c.bf16 %v2186, %v2185
        %v2265 = vpack.c.bf16 %v2188, %v2187
        %v2266 = vpack.c.bf16 %v2190, %v2189
        %v2267 = vpack.c.bf16 %v2192, %v2191
        %v2268 = vpack.c.bf16 %v2194, %v2193
        %v2269 = vpack.c.bf16 %v2196, %v2195
        %v2270 = vpack.c.bf16 %v2198, %v2197
        %v2271 = vpack.c.bf16 %v2200, %v2199
        %v2272 = vpack.c.bf16 %v2202, %v2201
        %v2289 = vunpack.c.l.b16 %v2257
        %v2290 = vunpack.c.h.b16 %v2257
        %v2291 = vunpack.c.l.b16 %v2258
        %v2292 = vunpack.c.h.b16 %v2258
        %v2293 = vunpack.c.l.b16 %v2259
        %v2294 = vunpack.c.h.b16 %v2259
        %v2295 = vunpack.c.l.b16 %v2260
        %v2296 = vunpack.c.h.b16 %v2260
        %v2297 = vunpack.c.l.b16 %v2261
        %v2298 = vunpack.c.h.b16 %v2261
        %v2299 = vunpack.c.l.b16 %v2262
        %v2300 = vunpack.c.h.b16 %v2262
        %v2301 = vunpack.c.l.b16 %v2263
        %v2302 = vunpack.c.h.b16 %v2263
        %v2303 = vunpack.c.l.b16 %v2264
        %v2304 = vunpack.c.h.b16 %v2264
        %v2305 = vunpack.c.l.b16 %v2265
        %v2306 = vunpack.c.h.b16 %v2265
        %v2307 = vunpack.c.l.b16 %v2266
        %v2308 = vunpack.c.h.b16 %v2266
        %v2309 = vunpack.c.l.b16 %v2267
        %v2310 = vunpack.c.h.b16 %v2267
        %v2311 = vunpack.c.l.b16 %v2268
        %v2312 = vunpack.c.h.b16 %v2268
        %v2313 = vunpack.c.l.b16 %v2269
        %v2314 = vunpack.c.h.b16 %v2269
        %v2315 = vunpack.c.l.b16 %v2270
        %v2316 = vunpack.c.h.b16 %v2270
        %v2317 = vunpack.c.l.b16 %v2271
        %v2318 = vunpack.c.h.b16 %v2271
        %v2319 = vunpack.c.l.b16 %v2272
        %v2320 = vunpack.c.h.b16 %v2272
        %v2321 = vpack.c.b16 %v2289, %v2289
        %v2322 = vpack.c.b16 %v2290, %v2290
        %v2323 = vpack.c.b16 %v2291, %v2291
        %v2324 = vpack.c.b16 %v2292, %v2292
        %v2325 = vpack.c.b16 %v2293, %v2293
        %v2326 = vpack.c.b16 %v2294, %v2294
        %v2327 = vpack.c.b16 %v2295, %v2295
        %v2328 = vpack.c.b16 %v2296, %v2296
        %v2329 = vpack.c.b16 %v2297, %v2297
        %v2330 = vpack.c.b16 %v2298, %v2298
        %v2331 = vpack.c.b16 %v2299, %v2299
        %v2332 = vpack.c.b16 %v2300, %v2300
        %v2333 = vpack.c.b16 %v2301, %v2301
        %v2334 = vpack.c.b16 %v2302, %v2302
        %v2335 = vpack.c.b16 %v2303, %v2303
        %v2336 = vpack.c.b16 %v2304, %v2304
        %v2337 = vpack.c.b16 %v2305, %v2305
        %v2338 = vpack.c.b16 %v2306, %v2306
        %v2339 = vpack.c.b16 %v2307, %v2307
        %v2340 = vpack.c.b16 %v2308, %v2308
        %v2341 = vpack.c.b16 %v2309, %v2309
        %v2342 = vpack.c.b16 %v2310, %v2310
        %v2343 = vpack.c.b16 %v2311, %v2311
        %v2344 = vpack.c.b16 %v2312, %v2312
        %v2345 = vpack.c.b16 %v2313, %v2313
        %v2346 = vpack.c.b16 %v2314, %v2314
        %v2347 = vpack.c.b16 %v2315, %v2315
        %v2348 = vpack.c.b16 %v2316, %v2316
        %v2349 = vpack.c.b16 %v2317, %v2317
        %v2350 = vpack.c.b16 %v2318, %v2318
        %v2351 = vpack.c.b16 %v2319, %v2319
        %v2352 = vpack.c.b16 %v2320, %v2320
        %vm2353 = vsmask.f32 256
        %vm2354 = vsmask.f32 4368
        %vm2355 = vmor %vm2353, %vm2354
        %v2357 = vshrl.u32 %v2321, 16
        %v2359 = vrot.slane %v2357, 7
        %v2360 = vshll.u32 %v2321, 16
        %v2362 = vor.u32 %v2359, %v2360
        %v2363 = vrot.slane %v2359, 4
        %v2365 = vshrl.u32 %v2322, 16
        %v2367 = vrot.slane %v2365, 7
        %v2368 = vshll.u32 %v2322, 16
        %v2370 = vor.u32 %v2367, %v2368
        %v2371 = vsel %vm2355, %v2363, %v2370
        %v2372 = vrot.slane %v2367, 4
        %v2374 = vshrl.u32 %v2323, 16
        %v2376 = vrot.slane %v2374, 7
        %v2377 = vshll.u32 %v2323, 16
        %v2379 = vor.u32 %v2376, %v2377
        %v2380 = vrot.slane %v2376, 4
        %v2382 = vshrl.u32 %v2324, 16
        %v2384 = vrot.slane %v2382, 7
        %v2385 = vshll.u32 %v2324, 16
        %v2387 = vor.u32 %v2384, %v2385
        %v2388 = vsel %vm2355, %v2380, %v2387
        %v2389 = vrot.slane %v2384, 4
        %v2391 = vshrl.u32 %v2325, 16
        %v2393 = vrot.slane %v2391, 7
        %v2394 = vshll.u32 %v2325, 16
        %v2396 = vor.u32 %v2393, %v2394
        %v2397 = vrot.slane %v2393, 4
        %v2399 = vshrl.u32 %v2326, 16
        %v2401 = vrot.slane %v2399, 7
        %v2402 = vshll.u32 %v2326, 16
        %v2404 = vor.u32 %v2401, %v2402
        %v2405 = vsel %vm2355, %v2397, %v2404
        %v2406 = vrot.slane %v2401, 4
        %v2408 = vshrl.u32 %v2327, 16
        %v2410 = vrot.slane %v2408, 7
        %v2411 = vshll.u32 %v2327, 16
        %v2413 = vor.u32 %v2410, %v2411
        %v2414 = vrot.slane %v2410, 4
        %v2416 = vshrl.u32 %v2328, 16
        %v2418 = vrot.slane %v2416, 7
        %v2419 = vshll.u32 %v2328, 16
        %v2421 = vor.u32 %v2418, %v2419
        %v2422 = vsel %vm2355, %v2414, %v2421
        %v2423 = vrot.slane %v2418, 4
        %v2425 = vshrl.u32 %v2329, 16
        %v2427 = vrot.slane %v2425, 7
        %v2428 = vshll.u32 %v2329, 16
        %v2430 = vor.u32 %v2427, %v2428
        %v2431 = vrot.slane %v2427, 4
        %v2433 = vshrl.u32 %v2330, 16
        %v2435 = vrot.slane %v2433, 7
        %v2436 = vshll.u32 %v2330, 16
        %v2438 = vor.u32 %v2435, %v2436
        %v2439 = vsel %vm2355, %v2431, %v2438
        %v2440 = vrot.slane %v2435, 4
        %v2442 = vshrl.u32 %v2331, 16
        %v2444 = vrot.slane %v2442, 7
        %v2445 = vshll.u32 %v2331, 16
        %v2447 = vor.u32 %v2444, %v2445
        %v2448 = vrot.slane %v2444, 4
        %v2450 = vshrl.u32 %v2332, 16
        %v2452 = vrot.slane %v2450, 7
        %v2453 = vshll.u32 %v2332, 16
        %v2455 = vor.u32 %v2452, %v2453
        %v2456 = vsel %vm2355, %v2448, %v2455
        %v2457 = vrot.slane %v2452, 4
        %v2459 = vshrl.u32 %v2333, 16
        %v2461 = vrot.slane %v2459, 7
        %v2462 = vshll.u32 %v2333, 16
        %v2464 = vor.u32 %v2461, %v2462
        %v2465 = vrot.slane %v2461, 4
        %v2467 = vshrl.u32 %v2334, 16
        %v2469 = vrot.slane %v2467, 7
        %v2470 = vshll.u32 %v2334, 16
        %v2472 = vor.u32 %v2469, %v2470
        %v2473 = vsel %vm2355, %v2465, %v2472
        %v2474 = vrot.slane %v2469, 4
        %v2476 = vshrl.u32 %v2335, 16
        %v2478 = vrot.slane %v2476, 7
        %v2479 = vshll.u32 %v2335, 16
        %v2481 = vor.u32 %v2478, %v2479
        %v2482 = vrot.slane %v2478, 4
        %v2484 = vshrl.u32 %v2336, 16
        %v2486 = vrot.slane %v2484, 7
        %v2487 = vshll.u32 %v2336, 16
        %v2489 = vor.u32 %v2486, %v2487
        %v2490 = vsel %vm2355, %v2482, %v2489
        %v2491 = vrot.slane %v2486, 4
        %v2493 = vshrl.u32 %v2337, 16
        %v2495 = vrot.slane %v2493, 7
        %v2496 = vshll.u32 %v2337, 16
        %v2498 = vor.u32 %v2495, %v2496
        %v2499 = vrot.slane %v2495, 4
        %v2501 = vshrl.u32 %v2338, 16
        %v2503 = vrot.slane %v2501, 7
        %v2504 = vshll.u32 %v2338, 16
        %v2506 = vor.u32 %v2503, %v2504
        %v2507 = vsel %vm2355, %v2499, %v2506
        %v2508 = vrot.slane %v2503, 4
        %v2510 = vshrl.u32 %v2339, 16
        %v2512 = vrot.slane %v2510, 7
        %v2513 = vshll.u32 %v2339, 16
        %v2515 = vor.u32 %v2512, %v2513
        %v2516 = vrot.slane %v2512, 4
        %v2518 = vshrl.u32 %v2340, 16
        %v2520 = vrot.slane %v2518, 7
        %v2521 = vshll.u32 %v2340, 16
        %v2523 = vor.u32 %v2520, %v2521
        %v2524 = vsel %vm2355, %v2516, %v2523
        %v2525 = vrot.slane %v2520, 4
        %v2527 = vshrl.u32 %v2341, 16
        %v2529 = vrot.slane %v2527, 7
        %v2530 = vshll.u32 %v2341, 16
        %v2532 = vor.u32 %v2529, %v2530
        %v2533 = vrot.slane %v2529, 4
        %v2535 = vshrl.u32 %v2342, 16
        %v2537 = vrot.slane %v2535, 7
        %v2538 = vshll.u32 %v2342, 16
        %v2540 = vor.u32 %v2537, %v2538
        %v2541 = vsel %vm2355, %v2533, %v2540
        %v2542 = vrot.slane %v2537, 4
        %v2544 = vshrl.u32 %v2343, 16
        %v2546 = vrot.slane %v2544, 7
        %v2547 = vshll.u32 %v2343, 16
        %v2549 = vor.u32 %v2546, %v2547
        %v2550 = vrot.slane %v2546, 4
        %v2552 = vshrl.u32 %v2344, 16
        %v2554 = vrot.slane %v2552, 7
        %v2555 = vshll.u32 %v2344, 16
        %v2557 = vor.u32 %v2554, %v2555
        %v2558 = vsel %vm2355, %v2550, %v2557
        %v2559 = vrot.slane %v2554, 4
        %v2561 = vshrl.u32 %v2345, 16
        %v2563 = vrot.slane %v2561, 7
        %v2564 = vshll.u32 %v2345, 16
        %v2566 = vor.u32 %v2563, %v2564
        %v2567 = vrot.slane %v2563, 4
        %v2569 = vshrl.u32 %v2346, 16
        %v2571 = vrot.slane %v2569, 7
        %v2572 = vshll.u32 %v2346, 16
        %v2574 = vor.u32 %v2571, %v2572
        %v2575 = vsel %vm2355, %v2567, %v2574
        %v2576 = vrot.slane %v2571, 4
        %v2578 = vshrl.u32 %v2347, 16
        %v2580 = vrot.slane %v2578, 7
        %v2581 = vshll.u32 %v2347, 16
        %v2583 = vor.u32 %v2580, %v2581
        %v2584 = vrot.slane %v2580, 4
        %v2586 = vshrl.u32 %v2348, 16
        %v2588 = vrot.slane %v2586, 7
        %v2589 = vshll.u32 %v2348, 16
        %v2591 = vor.u32 %v2588, %v2589
        %v2592 = vsel %vm2355, %v2584, %v2591
        %v2593 = vrot.slane %v2588, 4
        %v2595 = vshrl.u32 %v2349, 16
        %v2597 = vrot.slane %v2595, 7
        %v2598 = vshll.u32 %v2349, 16
        %v2600 = vor.u32 %v2597, %v2598
        %v2601 = vrot.slane %v2597, 4
        %v2603 = vshrl.u32 %v2350, 16
        %v2605 = vrot.slane %v2603, 7
        %v2606 = vshll.u32 %v2350, 16
        %v2608 = vor.u32 %v2605, %v2606
        %v2609 = vsel %vm2355, %v2601, %v2608
        %v2610 = vrot.slane %v2605, 4
        %v2612 = vshrl.u32 %v2351, 16
        %v2614 = vrot.slane %v2612, 7
        %v2615 = vshll.u32 %v2351, 16
        %v2617 = vor.u32 %v2614, %v2615
        %v2618 = vrot.slane %v2614, 4
        %v2620 = vshrl.u32 %v2352, 16
        %v2622 = vrot.slane %v2620, 7
        %v2623 = vshll.u32 %v2352, 16
        %v2625 = vor.u32 %v2622, %v2623
        %v2626 = vsel %vm2355, %v2618, %v2625
        %v2627 = vrot.slane %v2622, 4
        %s2676 = scalar_lea.vmem [#allocation2], 12
        %vm2677 = vcmask 1043456
        %vm2678 = vsmask.f32 7938
        %vm2679 = vmand %vm2677, %vm2678
        %v2680 = vld [vmem:[%s2676] sm:$0xf]
        %v2681 = vsel %vm2679, %v2362, %v2680
        %2682 = vst [vmem:[%s2676] sm:$0xf] %v2681
        %2683 = vst [vmem:[%s2676 + $0x4] sm:$0xf] %v2371
        %vm2684 = vcmask 1040384
        %vm2685 = vmand %vm2684, %vm2353
        %v2686 = vld [vmem:[%s2676 + $0x8] sm:$0x1]
        %v2687 = vsel %vm2685, %v2372, %v2686
        %2688 = vst [vmem:[%s2676 + $0x8] sm:$0x1] %v2687
        %v2689 = vld [vmem:[%s2676 + $0xc] sm:$0xf]
        %v2690 = vsel %vm2679, %v2379, %v2689
        %2691 = vst [vmem:[%s2676 + $0xc] sm:$0xf] %v2690
        %2692 = vst [vmem:[%s2676 + $0x10] sm:$0xf] %v2388
        %v2693 = vld [vmem:[%s2676 + $0x14] sm:$0x1]
        %v2694 = vsel %vm2685, %v2389, %v2693
        %2695 = vst [vmem:[%s2676 + $0x14] sm:$0x1] %v2694
        %v2696 = vld [vmem:[%s2676 + $0x18] sm:$0xf]
        %v2697 = vsel %vm2679, %v2396, %v2696
        %2698 = vst [vmem:[%s2676 + $0x18] sm:$0xf] %v2697
        %2699 = vst [vmem:[%s2676 + $0x1c] sm:$0xf] %v2405
        %v2700 = vld [vmem:[%s2676 + $0x20] sm:$0x1]
        %v2701 = vsel %vm2685, %v2406, %v2700
        %2702 = vst [vmem:[%s2676 + $0x20] sm:$0x1] %v2701
        %v2703 = vld [vmem:[%s2676 + $0x24] sm:$0xf]
        %v2704 = vsel %vm2679, %v2413, %v2703
        %2705 = vst [vmem:[%s2676 + $0x24] sm:$0xf] %v2704
        %2706 = vst [vmem:[%s2676 + $0x28] sm:$0xf] %v2422
        %v2707 = vld [vmem:[%s2676 + $0x2c] sm:$0x1]
        %v2708 = vsel %vm2685, %v2423, %v2707
        %2709 = vst [vmem:[%s2676 + $0x2c] sm:$0x1] %v2708
        %v2710 = vld [vmem:[%s2676 + $0x30] sm:$0xf]
        %v2711 = vsel %vm2679, %v2430, %v2710
        %2712 = vst [vmem:[%s2676 + $0x30] sm:$0xf] %v2711
        %2713 = vst [vmem:[%s2676 + $0x34] sm:$0xf] %v2439
        %v2714 = vld [vmem:[%s2676 + $0x38] sm:$0x1]
        %v2715 = vsel %vm2685, %v2440, %v2714
        %2716 = vst [vmem:[%s2676 + $0x38] sm:$0x1] %v2715
        %v2717 = vld [vmem:[%s2676 + $0x3c] sm:$0xf]
        %v2718 = vsel %vm2679, %v2447, %v2717
        %2719 = vst [vmem:[%s2676 + $0x3c] sm:$0xf] %v2718
        %2720 = vst [vmem:[%s2676 + $0x40] sm:$0xf] %v2456
        %v2721 = vld [vmem:[%s2676 + $0x44] sm:$0x1]
        %v2722 = vsel %vm2685, %v2457, %v2721
        %2723 = vst [vmem:[%s2676 + $0x44] sm:$0x1] %v2722
        %v2724 = vld [vmem:[%s2676 + $0x48] sm:$0xf]
        %v2725 = vsel %vm2679, %v2464, %v2724
        %2726 = vst [vmem:[%s2676 + $0x48] sm:$0xf] %v2725
        %2727 = vst [vmem:[%s2676 + $0x4c] sm:$0xf] %v2473
        %v2728 = vld [vmem:[%s2676 + $0x50] sm:$0x1]
        %v2729 = vsel %vm2685, %v2474, %v2728
        %2730 = vst [vmem:[%s2676 + $0x50] sm:$0x1] %v2729
        %v2731 = vld [vmem:[%s2676 + $0x54] sm:$0xf]
        %v2732 = vsel %vm2679, %v2481, %v2731
        %2733 = vst [vmem:[%s2676 + $0x54] sm:$0xf] %v2732
        %2734 = vst [vmem:[%s2676 + $0x58] sm:$0xf] %v2490
        %v2735 = vld [vmem:[%s2676 + $0x5c] sm:$0x1]
        %v2736 = vsel %vm2685, %v2491, %v2735
        %2737 = vst [vmem:[%s2676 + $0x5c] sm:$0x1] %v2736
        %v2738 = vld [vmem:[%s2676 + $0x60] sm:$0xf]
        %v2739 = vsel %vm2679, %v2498, %v2738
        %2740 = vst [vmem:[%s2676 + $0x60] sm:$0xf] %v2739
        %2741 = vst [vmem:[%s2676 + $0x64] sm:$0xf] %v2507
        %v2742 = vld [vmem:[%s2676 + $0x68] sm:$0x1]
        %v2743 = vsel %vm2685, %v2508, %v2742
        %2744 = vst [vmem:[%s2676 + $0x68] sm:$0x1] %v2743
        %v2745 = vld [vmem:[%s2676 + $0x6c] sm:$0xf]
        %v2746 = vsel %vm2679, %v2515, %v2745
        %2747 = vst [vmem:[%s2676 + $0x6c] sm:$0xf] %v2746
        %2748 = vst [vmem:[%s2676 + $0x70] sm:$0xf] %v2524
        %v2749 = vld [vmem:[%s2676 + $0x74] sm:$0x1]
        %v2750 = vsel %vm2685, %v2525, %v2749
        %2751 = vst [vmem:[%s2676 + $0x74] sm:$0x1] %v2750
        %v2752 = vld [vmem:[%s2676 + $0x78] sm:$0xf]
        %v2753 = vsel %vm2679, %v2532, %v2752
        %2754 = vst [vmem:[%s2676 + $0x78] sm:$0xf] %v2753
        %2755 = vst [vmem:[%s2676 + $0x7c] sm:$0xf] %v2541
        %v2756 = vld [vmem:[%s2676 + $0x80] sm:$0x1]
        %v2757 = vsel %vm2685, %v2542, %v2756
        %2758 = vst [vmem:[%s2676 + $0x80] sm:$0x1] %v2757
        %v2759 = vld [vmem:[%s2676 + $0x84] sm:$0xf]
        %v2760 = vsel %vm2679, %v2549, %v2759
        %2761 = vst [vmem:[%s2676 + $0x84] sm:$0xf] %v2760
        %2762 = vst [vmem:[%s2676 + $0x88] sm:$0xf] %v2558
        %v2763 = vld [vmem:[%s2676 + $0x8c] sm:$0x1]
        %v2764 = vsel %vm2685, %v2559, %v2763
        %2765 = vst [vmem:[%s2676 + $0x8c] sm:$0x1] %v2764
        %v2766 = vld [vmem:[%s2676 + $0x90] sm:$0xf]
        %v2767 = vsel %vm2679, %v2566, %v2766
        %2768 = vst [vmem:[%s2676 + $0x90] sm:$0xf] %v2767
        %2769 = vst [vmem:[%s2676 + $0x94] sm:$0xf] %v2575
        %v2770 = vld [vmem:[%s2676 + $0x98] sm:$0x1]
        %v2771 = vsel %vm2685, %v2576, %v2770
        %2772 = vst [vmem:[%s2676 + $0x98] sm:$0x1] %v2771
        %v2773 = vld [vmem:[%s2676 + $0x9c] sm:$0xf]
        %v2774 = vsel %vm2679, %v2583, %v2773
        %2775 = vst [vmem:[%s2676 + $0x9c] sm:$0xf] %v2774
        %2776 = vst [vmem:[%s2676 + $0xa0] sm:$0xf] %v2592
        %v2777 = vld [vmem:[%s2676 + $0xa4] sm:$0x1]
        %v2778 = vsel %vm2685, %v2593, %v2777
        %2779 = vst [vmem:[%s2676 + $0xa4] sm:$0x1] %v2778
        %v2780 = vld [vmem:[%s2676 + $0xa8] sm:$0xf]
        %v2781 = vsel %vm2679, %v2600, %v2780
        %2782 = vst [vmem:[%s2676 + $0xa8] sm:$0xf] %v2781
        %2783 = vst [vmem:[%s2676 + $0xac] sm:$0xf] %v2609
        %v2784 = vld [vmem:[%s2676 + $0xb0] sm:$0x1]
        %v2785 = vsel %vm2685, %v2610, %v2784
        %2786 = vst [vmem:[%s2676 + $0xb0] sm:$0x1] %v2785
        %v2787 = vld [vmem:[%s2676 + $0xb4] sm:$0xf]
        %v2788 = vsel %vm2679, %v2617, %v2787
        %2789 = vst [vmem:[%s2676 + $0xb4] sm:$0xf] %v2788
        %2790 = vst [vmem:[%s2676 + $0xb8] sm:$0xf] %v2626
        %v2791 = vld [vmem:[%s2676 + $0xbc] sm:$0x1]
        %v2792 = vsel %vm2685, %v2627, %v2791
        %2793 = vst [vmem:[%s2676 + $0xbc] sm:$0x1] %v2792
        %v2794 = vld [vmem:[%s422 + $0x1] sm:$0xff]
        %v2795 = vld [vmem:[%s422 + $0x9] sm:$0xff]
        %v2796 = vld [vmem:[%s422 + $0x19] sm:$0xff]
        %v2797 = vld [vmem:[%s422 + $0x21] sm:$0xff]
        %v2798 = vld [vmem:[%s422 + $0x31] sm:$0xff]
        %v2799 = vld [vmem:[%s422 + $0x39] sm:$0xff]
        %v2800 = vld [vmem:[%s422 + $0x49] sm:$0xff]
        %v2801 = vld [vmem:[%s422 + $0x51] sm:$0xff]
        %v2802 = vld [vmem:[%s422 + $0x61] sm:$0xff]
        %v2803 = vld [vmem:[%s422 + $0x69] sm:$0xff]
        %v2804 = vld [vmem:[%s422 + $0x79] sm:$0xff]
        %v2805 = vld [vmem:[%s422 + $0x81] sm:$0xff]
        %v2806 = vld [vmem:[%s422 + $0x91] sm:$0xff]
        %v2807 = vld [vmem:[%s422 + $0x99] sm:$0xff]
        %v2808 = vld [vmem:[%s422 + $0xa9] sm:$0xff]
        %v2809 = vld [vmem:[%s422 + $0xb1] sm:$0xff]
        %v2810 = vld [vmem:[%s422 + $0xc1] sm:$0xff]
        %v2811 = vld [vmem:[%s422 + $0xc9] sm:$0xff]
        %v2812 = vld [vmem:[%s422 + $0xd9] sm:$0xff]
        %v2813 = vld [vmem:[%s422 + $0xe1] sm:$0xff]
        %v2814 = vld [vmem:[%s422 + $0xf1] sm:$0xff]
        %v2815 = vld [vmem:[%s422 + $0xf9] sm:$0xff]
        %v2816 = vld [vmem:[%s422 + $0x109] sm:$0xff]
        %v2817 = vld [vmem:[%s422 + $0x111] sm:$0xff]
        %v2818 = vld [vmem:[%s422 + $0x121] sm:$0xff]
        %v2819 = vld [vmem:[%s422 + $0x129] sm:$0xff]
        %v2820 = vld [vmem:[%s422 + $0x139] sm:$0xff]
        %v2821 = vld [vmem:[%s422 + $0x141] sm:$0xff]
        %v2822 = vld [vmem:[%s422 + $0x151] sm:$0xff]
        %v2823 = vld [vmem:[%s422 + $0x159] sm:$0xff]
        %v2824 = vld [vmem:[%s422 + $0x169] sm:$0xff]
        %v2825 = vld [vmem:[%s422 + $0x171] sm:$0xff]
        %v2826 = vld [vmem:[#allocation2] sm:$0xf]
        %v2827 = vld [vmem:[#allocation2 + $0x4] sm:$0xf]
        %v2828 = vld [vmem:[#allocation2 + $0xc] sm:$0xf]
        %v2829 = vld [vmem:[#allocation2 + $0x10] sm:$0xf]
        %v2830 = vld [vmem:[#allocation2 + $0x18] sm:$0xf]
        %v2831 = vld [vmem:[#allocation2 + $0x1c] sm:$0xf]
        %v2832 = vld [vmem:[#allocation2 + $0x24] sm:$0xf]
        %v2833 = vld [vmem:[#allocation2 + $0x28] sm:$0xf]
        %v2834 = vld [vmem:[#allocation2 + $0x30] sm:$0xf]
        %v2835 = vld [vmem:[#allocation2 + $0x34] sm:$0xf]
        %v2836 = vld [vmem:[#allocation2 + $0x3c] sm:$0xf]
        %v2837 = vld [vmem:[#allocation2 + $0x40] sm:$0xf]
        %v2838 = vld [vmem:[#allocation2 + $0x48] sm:$0xf]
        %v2839 = vld [vmem:[#allocation2 + $0x4c] sm:$0xf]
        %v2840 = vld [vmem:[#allocation2 + $0x54] sm:$0xf]
        %v2841 = vld [vmem:[#allocation2 + $0x58] sm:$0xf]
        %v2842 = vld [vmem:[#allocation2 + $0x60] sm:$0xf]
        %v2843 = vld [vmem:[#allocation2 + $0x64] sm:$0xf]
        %v2844 = vld [vmem:[#allocation2 + $0x6c] sm:$0xf]
        %v2845 = vld [vmem:[#allocation2 + $0x70] sm:$0xf]
        %v2846 = vld [vmem:[#allocation2 + $0x78] sm:$0xf]
        %v2847 = vld [vmem:[#allocation2 + $0x7c] sm:$0xf]
        %v2848 = vld [vmem:[#allocation2 + $0x84] sm:$0xf]
        %v2849 = vld [vmem:[#allocation2 + $0x88] sm:$0xf]
        %v2850 = vld [vmem:[#allocation2 + $0x90] sm:$0xf]
        %v2851 = vld [vmem:[#allocation2 + $0x94] sm:$0xf]
        %v2852 = vld [vmem:[#allocation2 + $0x9c] sm:$0xf]
        %v2853 = vld [vmem:[#allocation2 + $0xa0] sm:$0xf]
        %v2854 = vld [vmem:[#allocation2 + $0xa8] sm:$0xf]
        %v2855 = vld [vmem:[#allocation2 + $0xac] sm:$0xf]
        %v2856 = vld [vmem:[#allocation2 + $0xb4] sm:$0xf]
        %v2857 = vld [vmem:[#allocation2 + $0xb8] sm:$0xf]
        %v2858 = vld [vmem:[#allocation2 + $0x8] sm:$0x1]
        %v2859 = vld [vmem:[#allocation2 + $0x14] sm:$0x1]
        %v2860 = vld [vmem:[#allocation2 + $0x20] sm:$0x1]
        %v2861 = vld [vmem:[#allocation2 + $0x2c] sm:$0x1]
        %v2862 = vld [vmem:[#allocation2 + $0x38] sm:$0x1]
        %v2863 = vld [vmem:[#allocation2 + $0x44] sm:$0x1]
        %v2864 = vld [vmem:[#allocation2 + $0x50] sm:$0x1]
        %v2865 = vld [vmem:[#allocation2 + $0x5c] sm:$0x1]
        %v2866 = vld [vmem:[#allocation2 + $0x68] sm:$0x1]
        %v2867 = vld [vmem:[#allocation2 + $0x74] sm:$0x1]
        %v2868 = vld [vmem:[#allocation2 + $0x80] sm:$0x1]
        %v2869 = vld [vmem:[#allocation2 + $0x8c] sm:$0x1]
        %v2870 = vld [vmem:[#allocation2 + $0x98] sm:$0x1]
        %v2871 = vld [vmem:[#allocation2 + $0xa4] sm:$0x1]
        %v2872 = vld [vmem:[#allocation2 + $0xb0] sm:$0x1]
        %v2873 = vld [vmem:[#allocation2 + $0xbc] sm:$0x1]
        %vm2874 = vsmask.f32 3328
        %vm2875 = vsmask.f32 7440
        %vm2876 = vmor %vm2874, %vm2875
        %v2878 = vshrl.u32 %v2826, 16
        %v2880 = vrot.slane %v2878, 4
        %v2881 = vshll.u32 %v2826, 16
        %v2883 = vrot.slane %v2881, 5
        %v2884 = vor.u32 %v2880, %v2883
        %v2885 = vrot.slane %v2884, 4
        %v2887 = vshll.u32 %v2827, 16
        %v2889 = vrot.slane %v2887, 5
        %v2890 = vsel %vm2876, %v2885, %v2889
        %v2891 = vshrl.u32 %v2827, 16
        %v2893 = vrot.slane %v2891, 4
        %v2894 = vor.u32 %v2893, %v2889
        %v2895 = vrot.slane %v2894, 4
        %v2897 = vshll.u32 %v2858, 16
        %v2899 = vrot.slane %v2897, 5
        %v2900 = vsel %vm2876, %v2895, %v2899
        %v2902 = vshrl.u32 %v2828, 16
        %v2904 = vrot.slane %v2902, 4
        %v2905 = vshll.u32 %v2828, 16
        %v2907 = vrot.slane %v2905, 5
        %v2908 = vor.u32 %v2904, %v2907
        %v2909 = vrot.slane %v2908, 4
        %v2911 = vshll.u32 %v2829, 16
        %v2913 = vrot.slane %v2911, 5
        %v2914 = vsel %vm2876, %v2909, %v2913
        %v2915 = vshrl.u32 %v2829, 16
        %v2917 = vrot.slane %v2915, 4
        %v2918 = vor.u32 %v2917, %v2913
        %v2919 = vrot.slane %v2918, 4
        %v2921 = vshll.u32 %v2859, 16
        %v2923 = vrot.slane %v2921, 5
        %v2924 = vsel %vm2876, %v2919, %v2923
        %v2926 = vshrl.u32 %v2830, 16
        %v2928 = vrot.slane %v2926, 4
        %v2929 = vshll.u32 %v2830, 16
        %v2931 = vrot.slane %v2929, 5
        %v2932 = vor.u32 %v2928, %v2931
        %v2933 = vrot.slane %v2932, 4
        %v2935 = vshll.u32 %v2831, 16
        %v2937 = vrot.slane %v2935, 5
        %v2938 = vsel %vm2876, %v2933, %v2937
        %v2939 = vshrl.u32 %v2831, 16
        %v2941 = vrot.slane %v2939, 4
        %v2942 = vor.u32 %v2941, %v2937
        %v2943 = vrot.slane %v2942, 4
        %v2945 = vshll.u32 %v2860, 16
        %v2947 = vrot.slane %v2945, 5
        %v2948 = vsel %vm2876, %v2943, %v2947
        %v2950 = vshrl.u32 %v2832, 16
        %v2952 = vrot.slane %v2950, 4
        %v2953 = vshll.u32 %v2832, 16
        %v2955 = vrot.slane %v2953, 5
        %v2956 = vor.u32 %v2952, %v2955
        %v2957 = vrot.slane %v2956, 4
        %v2959 = vshll.u32 %v2833, 16
        %v2961 = vrot.slane %v2959, 5
        %v2962 = vsel %vm2876, %v2957, %v2961
        %v2963 = vshrl.u32 %v2833, 16
        %v2965 = vrot.slane %v2963, 4
        %v2966 = vor.u32 %v2965, %v2961
        %v2967 = vrot.slane %v2966, 4
        %v2969 = vshll.u32 %v2861, 16
        %v2971 = vrot.slane %v2969, 5
        %v2972 = vsel %vm2876, %v2967, %v2971
        %v2974 = vshrl.u32 %v2834, 16
        %v2976 = vrot.slane %v2974, 4
        %v2977 = vshll.u32 %v2834, 16
        %v2979 = vrot.slane %v2977, 5
        %v2980 = vor.u32 %v2976, %v2979
        %v2981 = vrot.slane %v2980, 4
        %v2983 = vshll.u32 %v2835, 16
        %v2985 = vrot.slane %v2983, 5
        %v2986 = vsel %vm2876, %v2981, %v2985
        %v2987 = vshrl.u32 %v2835, 16
        %v2989 = vrot.slane %v2987, 4
        %v2990 = vor.u32 %v2989, %v2985
        %v2991 = vrot.slane %v2990, 4
        %v2993 = vshll.u32 %v2862, 16
        %v2995 = vrot.slane %v2993, 5
        %v2996 = vsel %vm2876, %v2991, %v2995
        %v2998 = vshrl.u32 %v2836, 16
        %v3000 = vrot.slane %v2998, 4
        %v3001 = vshll.u32 %v2836, 16
        %v3003 = vrot.slane %v3001, 5
        %v3004 = vor.u32 %v3000, %v3003
        %v3005 = vrot.slane %v3004, 4
        %v3007 = vshll.u32 %v2837, 16
        %v3009 = vrot.slane %v3007, 5
        %v3010 = vsel %vm2876, %v3005, %v3009
        %v3011 = vshrl.u32 %v2837, 16
        %v3013 = vrot.slane %v3011, 4
        %v3014 = vor.u32 %v3013, %v3009
        %v3015 = vrot.slane %v3014, 4
        %v3017 = vshll.u32 %v2863, 16
        %v3019 = vrot.slane %v3017, 5
        %v3020 = vsel %vm2876, %v3015, %v3019
        %v3022 = vshrl.u32 %v2838, 16
        %v3024 = vrot.slane %v3022, 4
        %v3025 = vshll.u32 %v2838, 16
        %v3027 = vrot.slane %v3025, 5
        %v3028 = vor.u32 %v3024, %v3027
        %v3029 = vrot.slane %v3028, 4
        %v3031 = vshll.u32 %v2839, 16
        %v3033 = vrot.slane %v3031, 5
        %v3034 = vsel %vm2876, %v3029, %v3033
        %v3035 = vshrl.u32 %v2839, 16
        %v3037 = vrot.slane %v3035, 4
        %v3038 = vor.u32 %v3037, %v3033
        %v3039 = vrot.slane %v3038, 4
        %v3041 = vshll.u32 %v2864, 16
        %v3043 = vrot.slane %v3041, 5
        %v3044 = vsel %vm2876, %v3039, %v3043
        %v3046 = vshrl.u32 %v2840, 16
        %v3048 = vrot.slane %v3046, 4
        %v3049 = vshll.u32 %v2840, 16
        %v3051 = vrot.slane %v3049, 5
        %v3052 = vor.u32 %v3048, %v3051
        %v3053 = vrot.slane %v3052, 4
        %v3055 = vshll.u32 %v2841, 16
        %v3057 = vrot.slane %v3055, 5
        %v3058 = vsel %vm2876, %v3053, %v3057
        %v3059 = vshrl.u32 %v2841, 16
        %v3061 = vrot.slane %v3059, 4
        %v3062 = vor.u32 %v3061, %v3057
        %v3063 = vrot.slane %v3062, 4
        %v3065 = vshll.u32 %v2865, 16
        %v3067 = vrot.slane %v3065, 5
        %v3068 = vsel %vm2876, %v3063, %v3067
        %v3070 = vshrl.u32 %v2842, 16
        %v3072 = vrot.slane %v3070, 4
        %v3073 = vshll.u32 %v2842, 16
        %v3075 = vrot.slane %v3073, 5
        %v3076 = vor.u32 %v3072, %v3075
        %v3077 = vrot.slane %v3076, 4
        %v3079 = vshll.u32 %v2843, 16
        %v3081 = vrot.slane %v3079, 5
        %v3082 = vsel %vm2876, %v3077, %v3081
        %v3083 = vshrl.u32 %v2843, 16
        %v3085 = vrot.slane %v3083, 4
        %v3086 = vor.u32 %v3085, %v3081
        %v3087 = vrot.slane %v3086, 4
        %v3089 = vshll.u32 %v2866, 16
        %v3091 = vrot.slane %v3089, 5
        %v3092 = vsel %vm2876, %v3087, %v3091
        %v3094 = vshrl.u32 %v2844, 16
        %v3096 = vrot.slane %v3094, 4
        %v3097 = vshll.u32 %v2844, 16
        %v3099 = vrot.slane %v3097, 5
        %v3100 = vor.u32 %v3096, %v3099
        %v3101 = vrot.slane %v3100, 4
        %v3103 = vshll.u32 %v2845, 16
        %v3105 = vrot.slane %v3103, 5
        %v3106 = vsel %vm2876, %v3101, %v3105
        %v3107 = vshrl.u32 %v2845, 16
        %v3109 = vrot.slane %v3107, 4
        %v3110 = vor.u32 %v3109, %v3105
        %v3111 = vrot.slane %v3110, 4
        %v3113 = vshll.u32 %v2867, 16
        %v3115 = vrot.slane %v3113, 5
        %v3116 = vsel %vm2876, %v3111, %v3115
        %v3118 = vshrl.u32 %v2846, 16
        %v3120 = vrot.slane %v3118, 4
        %v3121 = vshll.u32 %v2846, 16
        %v3123 = vrot.slane %v3121, 5
        %v3124 = vor.u32 %v3120, %v3123
        %v3125 = vrot.slane %v3124, 4
        %v3127 = vshll.u32 %v2847, 16
        %v3129 = vrot.slane %v3127, 5
        %v3130 = vsel %vm2876, %v3125, %v3129
        %v3131 = vshrl.u32 %v2847, 16
        %v3133 = vrot.slane %v3131, 4
        %v3134 = vor.u32 %v3133, %v3129
        %v3135 = vrot.slane %v3134, 4
        %v3137 = vshll.u32 %v2868, 16
        %v3139 = vrot.slane %v3137, 5
        %v3140 = vsel %vm2876, %v3135, %v3139
        %v3142 = vshrl.u32 %v2848, 16
        %v3144 = vrot.slane %v3142, 4
        %v3145 = vshll.u32 %v2848, 16
        %v3147 = vrot.slane %v3145, 5
        %v3148 = vor.u32 %v3144, %v3147
        %v3149 = vrot.slane %v3148, 4
        %v3151 = vshll.u32 %v2849, 16
        %v3153 = vrot.slane %v3151, 5
        %v3154 = vsel %vm2876, %v3149, %v3153
        %v3155 = vshrl.u32 %v2849, 16
        %v3157 = vrot.slane %v3155, 4
        %v3158 = vor.u32 %v3157, %v3153
        %v3159 = vrot.slane %v3158, 4
        %v3161 = vshll.u32 %v2869, 16
        %v3163 = vrot.slane %v3161, 5
        %v3164 = vsel %vm2876, %v3159, %v3163
        %v3166 = vshrl.u32 %v2850, 16
        %v3168 = vrot.slane %v3166, 4
        %v3169 = vshll.u32 %v2850, 16
        %v3171 = vrot.slane %v3169, 5
        %v3172 = vor.u32 %v3168, %v3171
        %v3173 = vrot.slane %v3172, 4
        %v3175 = vshll.u32 %v2851, 16
        %v3177 = vrot.slane %v3175, 5
        %v3178 = vsel %vm2876, %v3173, %v3177
        %v3179 = vshrl.u32 %v2851, 16
        %v3181 = vrot.slane %v3179, 4
        %v3182 = vor.u32 %v3181, %v3177
        %v3183 = vrot.slane %v3182, 4
        %v3185 = vshll.u32 %v2870, 16
        %v3187 = vrot.slane %v3185, 5
        %v3188 = vsel %vm2876, %v3183, %v3187
        %v3190 = vshrl.u32 %v2852, 16
        %v3192 = vrot.slane %v3190, 4
        %v3193 = vshll.u32 %v2852, 16
        %v3195 = vrot.slane %v3193, 5
        %v3196 = vor.u32 %v3192, %v3195
        %v3197 = vrot.slane %v3196, 4
        %v3199 = vshll.u32 %v2853, 16
        %v3201 = vrot.slane %v3199, 5
        %v3202 = vsel %vm2876, %v3197, %v3201
        %v3203 = vshrl.u32 %v2853, 16
        %v3205 = vrot.slane %v3203, 4
        %v3206 = vor.u32 %v3205, %v3201
        %v3207 = vrot.slane %v3206, 4
        %v3209 = vshll.u32 %v2871, 16
        %v3211 = vrot.slane %v3209, 5
        %v3212 = vsel %vm2876, %v3207, %v3211
        %v3214 = vshrl.u32 %v2854, 16
        %v3216 = vrot.slane %v3214, 4
        %v3217 = vshll.u32 %v2854, 16
        %v3219 = vrot.slane %v3217, 5
        %v3220 = vor.u32 %v3216, %v3219
        %v3221 = vrot.slane %v3220, 4
        %v3223 = vshll.u32 %v2855, 16
        %v3225 = vrot.slane %v3223, 5
        %v3226 = vsel %vm2876, %v3221, %v3225
        %v3227 = vshrl.u32 %v2855, 16
        %v3229 = vrot.slane %v3227, 4
        %v3230 = vor.u32 %v3229, %v3225
        %v3231 = vrot.slane %v3230, 4
        %v3233 = vshll.u32 %v2872, 16
        %v3235 = vrot.slane %v3233, 5
        %v3236 = vsel %vm2876, %v3231, %v3235
        %v3238 = vshrl.u32 %v2856, 16
        %v3240 = vrot.slane %v3238, 4
        %v3241 = vshll.u32 %v2856, 16
        %v3243 = vrot.slane %v3241, 5
        %v3244 = vor.u32 %v3240, %v3243
        %v3245 = vrot.slane %v3244, 4
        %v3247 = vshll.u32 %v2857, 16
        %v3249 = vrot.slane %v3247, 5
        %v3250 = vsel %vm2876, %v3245, %v3249
        %v3251 = vshrl.u32 %v2857, 16
        %v3253 = vrot.slane %v3251, 4
        %v3254 = vor.u32 %v3253, %v3249
        %v3255 = vrot.slane %v3254, 4
        %v3257 = vshll.u32 %v2873, 16
        %v3259 = vrot.slane %v3257, 5
        %v3260 = vsel %vm2876, %v3255, %v3259
        %v3261 = vld [vmem:[#allocation2] sm:$0xe]
        %v3262 = vld [vmem:[#allocation2 + $0xc] sm:$0xe]
        %v3263 = vld [vmem:[#allocation2 + $0x18] sm:$0xe]
        %v3264 = vld [vmem:[#allocation2 + $0x24] sm:$0xe]
        %v3265 = vld [vmem:[#allocation2 + $0x30] sm:$0xe]
        %v3266 = vld [vmem:[#allocation2 + $0x3c] sm:$0xe]
        %v3267 = vld [vmem:[#allocation2 + $0x48] sm:$0xe]
        %v3268 = vld [vmem:[#allocation2 + $0x54] sm:$0xe]
        %v3269 = vld [vmem:[#allocation2 + $0x60] sm:$0xe]
        %v3270 = vld [vmem:[#allocation2 + $0x6c] sm:$0xe]
        %v3271 = vld [vmem:[#allocation2 + $0x78] sm:$0xe]
        %v3272 = vld [vmem:[#allocation2 + $0x84] sm:$0xe]
        %v3273 = vld [vmem:[#allocation2 + $0x90] sm:$0xe]
        %v3274 = vld [vmem:[#allocation2 + $0x9c] sm:$0xe]
        %v3275 = vld [vmem:[#allocation2 + $0xa8] sm:$0xe]
        %v3276 = vld [vmem:[#allocation2 + $0xb4] sm:$0xe]
        %vm3325 = vcmask 1042432
        %vm3326 = vcmask 1046532
        %vm3327 = vmor %vm3325, %vm3326
        %v3328 = vrot.slane %v3261, 5
        %v3329 = vrot.slane %v3328, 4
        %v3330 = vrot.slane %v2827, 5
        %v3331 = vsel %vm3327, %v3329, %v3330
        %v3332 = vrot.slane %v3330, 4
        %v3333 = vrot.slane %v2858, 5
        %v3334 = vsel %vm3327, %v3332, %v3333
        %v3335 = vrot.slane %v3262, 5
        %v3336 = vrot.slane %v3335, 4
        %v3337 = vrot.slane %v2829, 5
        %v3338 = vsel %vm3327, %v3336, %v3337
        %v3339 = vrot.slane %v3337, 4
        %v3340 = vrot.slane %v2859, 5
        %v3341 = vsel %vm3327, %v3339, %v3340
        %v3342 = vrot.slane %v3263, 5
        %v3343 = vrot.slane %v3342, 4
        %v3344 = vrot.slane %v2831, 5
        %v3345 = vsel %vm3327, %v3343, %v3344
        %v3346 = vrot.slane %v3344, 4
        %v3347 = vrot.slane %v2860, 5
        %v3348 = vsel %vm3327, %v3346, %v3347
        %v3349 = vrot.slane %v3264, 5
        %v3350 = vrot.slane %v3349, 4
        %v3351 = vrot.slane %v2833, 5
        %v3352 = vsel %vm3327, %v3350, %v3351
        %v3353 = vrot.slane %v3351, 4
        %v3354 = vrot.slane %v2861, 5
        %v3355 = vsel %vm3327, %v3353, %v3354
        %v3356 = vrot.slane %v3265, 5
        %v3357 = vrot.slane %v3356, 4
        %v3358 = vrot.slane %v2835, 5
        %v3359 = vsel %vm3327, %v3357, %v3358
        %v3360 = vrot.slane %v3358, 4
        %v3361 = vrot.slane %v2862, 5
        %v3362 = vsel %vm3327, %v3360, %v3361
        %v3363 = vrot.slane %v3266, 5
        %v3364 = vrot.slane %v3363, 4
        %v3365 = vrot.slane %v2837, 5
        %v3366 = vsel %vm3327, %v3364, %v3365
        %v3367 = vrot.slane %v3365, 4
        %v3368 = vrot.slane %v2863, 5
        %v3369 = vsel %vm3327, %v3367, %v3368
        %v3370 = vrot.slane %v3267, 5
        %v3371 = vrot.slane %v3370, 4
        %v3372 = vrot.slane %v2839, 5
        %v3373 = vsel %vm3327, %v3371, %v3372
        %v3374 = vrot.slane %v3372, 4
        %v3375 = vrot.slane %v2864, 5
        %v3376 = vsel %vm3327, %v3374, %v3375
        %v3377 = vrot.slane %v3268, 5
        %v3378 = vrot.slane %v3377, 4
        %v3379 = vrot.slane %v2841, 5
        %v3380 = vsel %vm3327, %v3378, %v3379
        %v3381 = vrot.slane %v3379, 4
        %v3382 = vrot.slane %v2865, 5
        %v3383 = vsel %vm3327, %v3381, %v3382
        %v3384 = vrot.slane %v3269, 5
        %v3385 = vrot.slane %v3384, 4
        %v3386 = vrot.slane %v2843, 5
        %v3387 = vsel %vm3327, %v3385, %v3386
        %v3388 = vrot.slane %v3386, 4
        %v3389 = vrot.slane %v2866, 5
        %v3390 = vsel %vm3327, %v3388, %v3389
        %v3391 = vrot.slane %v3270, 5
        %v3392 = vrot.slane %v3391, 4
        %v3393 = vrot.slane %v2845, 5
        %v3394 = vsel %vm3327, %v3392, %v3393
        %v3395 = vrot.slane %v3393, 4
        %v3396 = vrot.slane %v2867, 5
        %v3397 = vsel %vm3327, %v3395, %v3396
        %v3398 = vrot.slane %v3271, 5
        %v3399 = vrot.slane %v3398, 4
        %v3400 = vrot.slane %v2847, 5
        %v3401 = vsel %vm3327, %v3399, %v3400
        %v3402 = vrot.slane %v3400, 4
        %v3403 = vrot.slane %v2868, 5
        %v3404 = vsel %vm3327, %v3402, %v3403
        %v3405 = vrot.slane %v3272, 5
        %v3406 = vrot.slane %v3405, 4
        %v3407 = vrot.slane %v2849, 5
        %v3408 = vsel %vm3327, %v3406, %v3407
        %v3409 = vrot.slane %v3407, 4
        %v3410 = vrot.slane %v2869, 5
        %v3411 = vsel %vm3327, %v3409, %v3410
        %v3412 = vrot.slane %v3273, 5
        %v3413 = vrot.slane %v3412, 4
        %v3414 = vrot.slane %v2851, 5
        %v3415 = vsel %vm3327, %v3413, %v3414
        %v3416 = vrot.slane %v3414, 4
        %v3417 = vrot.slane %v2870, 5
        %v3418 = vsel %vm3327, %v3416, %v3417
        %v3419 = vrot.slane %v3274, 5
        %v3420 = vrot.slane %v3419, 4
        %v3421 = vrot.slane %v2853, 5
        %v3422 = vsel %vm3327, %v3420, %v3421
        %v3423 = vrot.slane %v3421, 4
        %v3424 = vrot.slane %v2871, 5
        %v3425 = vsel %vm3327, %v3423, %v3424
        %v3426 = vrot.slane %v3275, 5
        %v3427 = vrot.slane %v3426, 4
        %v3428 = vrot.slane %v2855, 5
        %v3429 = vsel %vm3327, %v3427, %v3428
        %v3430 = vrot.slane %v3428, 4
        %v3431 = vrot.slane %v2872, 5
        %v3432 = vsel %vm3327, %v3430, %v3431
        %v3433 = vrot.slane %v3276, 5
        %v3434 = vrot.slane %v3433, 4
        %v3435 = vrot.slane %v2857, 5
        %v3436 = vsel %vm3327, %v3434, %v3435
        %v3437 = vrot.slane %v3435, 4
        %v3438 = vrot.slane %v2873, 5
        %v3439 = vsel %vm3327, %v3437, %v3438
        %v3440 = vld [vmem:[%s2676] sm:$0xf]
        %v3441 = vld [vmem:[%s2676 + $0x4] sm:$0xf]
        %v3442 = vld [vmem:[%s2676 + $0xc] sm:$0xf]
        %v3443 = vld [vmem:[%s2676 + $0x10] sm:$0xf]
        %v3444 = vld [vmem:[%s2676 + $0x18] sm:$0xf]
        %v3445 = vld [vmem:[%s2676 + $0x1c] sm:$0xf]
        %v3446 = vld [vmem:[%s2676 + $0x24] sm:$0xf]
        %v3447 = vld [vmem:[%s2676 + $0x28] sm:$0xf]
        %v3448 = vld [vmem:[%s2676 + $0x30] sm:$0xf]
        %v3449 = vld [vmem:[%s2676 + $0x34] sm:$0xf]
        %v3450 = vld [vmem:[%s2676 + $0x3c] sm:$0xf]
        %v3451 = vld [vmem:[%s2676 + $0x40] sm:$0xf]
        %v3452 = vld [vmem:[%s2676 + $0x48] sm:$0xf]
        %v3453 = vld [vmem:[%s2676 + $0x4c] sm:$0xf]
        %v3454 = vld [vmem:[%s2676 + $0x54] sm:$0xf]
        %v3455 = vld [vmem:[%s2676 + $0x58] sm:$0xf]
        %v3456 = vld [vmem:[%s2676 + $0x60] sm:$0xf]
        %v3457 = vld [vmem:[%s2676 + $0x64] sm:$0xf]
        %v3458 = vld [vmem:[%s2676 + $0x6c] sm:$0xf]
        %v3459 = vld [vmem:[%s2676 + $0x70] sm:$0xf]
        %v3460 = vld [vmem:[%s2676 + $0x78] sm:$0xf]
        %v3461 = vld [vmem:[%s2676 + $0x7c] sm:$0xf]
        %v3462 = vld [vmem:[%s2676 + $0x84] sm:$0xf]
        %v3463 = vld [vmem:[%s2676 + $0x88] sm:$0xf]
        %v3464 = vld [vmem:[%s2676 + $0x90] sm:$0xf]
        %v3465 = vld [vmem:[%s2676 + $0x94] sm:$0xf]
        %v3466 = vld [vmem:[%s2676 + $0x9c] sm:$0xf]
        %v3467 = vld [vmem:[%s2676 + $0xa0] sm:$0xf]
        %v3468 = vld [vmem:[%s2676 + $0xa8] sm:$0xf]
        %v3469 = vld [vmem:[%s2676 + $0xac] sm:$0xf]
        %v3470 = vld [vmem:[%s2676 + $0xb4] sm:$0xf]
        %v3471 = vld [vmem:[%s2676 + $0xb8] sm:$0xf]
        %v3472 = vld [vmem:[%s2676 + $0x8] sm:$0x1]
        %v3473 = vld [vmem:[%s2676 + $0x14] sm:$0x1]
        %v3474 = vld [vmem:[%s2676 + $0x20] sm:$0x1]
        %v3475 = vld [vmem:[%s2676 + $0x2c] sm:$0x1]
        %v3476 = vld [vmem:[%s2676 + $0x38] sm:$0x1]
        %v3477 = vld [vmem:[%s2676 + $0x44] sm:$0x1]
        %v3478 = vld [vmem:[%s2676 + $0x50] sm:$0x1]
        %v3479 = vld [vmem:[%s2676 + $0x5c] sm:$0x1]
        %v3480 = vld [vmem:[%s2676 + $0x68] sm:$0x1]
        %v3481 = vld [vmem:[%s2676 + $0x74] sm:$0x1]
        %v3482 = vld [vmem:[%s2676 + $0x80] sm:$0x1]
        %v3483 = vld [vmem:[%s2676 + $0x8c] sm:$0x1]
        %v3484 = vld [vmem:[%s2676 + $0x98] sm:$0x1]
        %v3485 = vld [vmem:[%s2676 + $0xa4] sm:$0x1]
        %v3486 = vld [vmem:[%s2676 + $0xb0] sm:$0x1]
        %v3487 = vld [vmem:[%s2676 + $0xbc] sm:$0x1]
        %v3489 = vshrl.u32 %v3440, 16
        %v3491 = vrot.slane %v3489, 4
        %v3492 = vshll.u32 %v3440, 16
        %v3494 = vrot.slane %v3492, 5
        %v3495 = vor.u32 %v3491, %v3494
        %v3496 = vrot.slane %v3495, 4
        %v3498 = vshll.u32 %v3441, 16
        %v3500 = vrot.slane %v3498, 5
        %v3501 = vsel %vm2876, %v3496, %v3500
        %v3502 = vshrl.u32 %v3441, 16
        %v3504 = vrot.slane %v3502, 4
        %v3505 = vor.u32 %v3504, %v3500
        %v3506 = vrot.slane %v3505, 4
        %v3508 = vshll.u32 %v3472, 16
        %v3510 = vrot.slane %v3508, 5
        %v3511 = vsel %vm2876, %v3506, %v3510
        %v3513 = vshrl.u32 %v3442, 16
        %v3515 = vrot.slane %v3513, 4
        %v3516 = vshll.u32 %v3442, 16
        %v3518 = vrot.slane %v3516, 5
        %v3519 = vor.u32 %v3515, %v3518
        %v3520 = vrot.slane %v3519, 4
        %v3522 = vshll.u32 %v3443, 16
        %v3524 = vrot.slane %v3522, 5
        %v3525 = vsel %vm2876, %v3520, %v3524
        %v3526 = vshrl.u32 %v3443, 16
        %v3528 = vrot.slane %v3526, 4
        %v3529 = vor.u32 %v3528, %v3524
        %v3530 = vrot.slane %v3529, 4
        %v3532 = vshll.u32 %v3473, 16
        %v3534 = vrot.slane %v3532, 5
        %v3535 = vsel %vm2876, %v3530, %v3534
        %v3537 = vshrl.u32 %v3444, 16
        %v3539 = vrot.slane %v3537, 4
        %v3540 = vshll.u32 %v3444, 16
        %v3542 = vrot.slane %v3540, 5
        %v3543 = vor.u32 %v3539, %v3542
        %v3544 = vrot.slane %v3543, 4
        %v3546 = vshll.u32 %v3445, 16
        %v3548 = vrot.slane %v3546, 5
        %v3549 = vsel %vm2876, %v3544, %v3548
        %v3550 = vshrl.u32 %v3445, 16
        %v3552 = vrot.slane %v3550, 4
        %v3553 = vor.u32 %v3552, %v3548
        %v3554 = vrot.slane %v3553, 4
        %v3556 = vshll.u32 %v3474, 16
        %v3558 = vrot.slane %v3556, 5
        %v3559 = vsel %vm2876, %v3554, %v3558
        %v3561 = vshrl.u32 %v3446, 16
        %v3563 = vrot.slane %v3561, 4
        %v3564 = vshll.u32 %v3446, 16
        %v3566 = vrot.slane %v3564, 5
        %v3567 = vor.u32 %v3563, %v3566
        %v3568 = vrot.slane %v3567, 4
        %v3570 = vshll.u32 %v3447, 16
        %v3572 = vrot.slane %v3570, 5
        %v3573 = vsel %vm2876, %v3568, %v3572
        %v3574 = vshrl.u32 %v3447, 16
        %v3576 = vrot.slane %v3574, 4
        %v3577 = vor.u32 %v3576, %v3572
        %v3578 = vrot.slane %v3577, 4
        %v3580 = vshll.u32 %v3475, 16
        %v3582 = vrot.slane %v3580, 5
        %v3583 = vsel %vm2876, %v3578, %v3582
        %v3585 = vshrl.u32 %v3448, 16
        %v3587 = vrot.slane %v3585, 4
        %v3588 = vshll.u32 %v3448, 16
        %v3590 = vrot.slane %v3588, 5
        %v3591 = vor.u32 %v3587, %v3590
        %v3592 = vrot.slane %v3591, 4
        %v3594 = vshll.u32 %v3449, 16
        %v3596 = vrot.slane %v3594, 5
        %v3597 = vsel %vm2876, %v3592, %v3596
        %v3598 = vshrl.u32 %v3449, 16
        %v3600 = vrot.slane %v3598, 4
        %v3601 = vor.u32 %v3600, %v3596
        %v3602 = vrot.slane %v3601, 4
        %v3604 = vshll.u32 %v3476, 16
        %v3606 = vrot.slane %v3604, 5
        %v3607 = vsel %vm2876, %v3602, %v3606
        %v3609 = vshrl.u32 %v3450, 16
        %v3611 = vrot.slane %v3609, 4
        %v3612 = vshll.u32 %v3450, 16
        %v3614 = vrot.slane %v3612, 5
        %v3615 = vor.u32 %v3611, %v3614
        %v3616 = vrot.slane %v3615, 4
        %v3618 = vshll.u32 %v3451, 16
        %v3620 = vrot.slane %v3618, 5
        %v3621 = vsel %vm2876, %v3616, %v3620
        %v3622 = vshrl.u32 %v3451, 16
        %v3624 = vrot.slane %v3622, 4
        %v3625 = vor.u32 %v3624, %v3620
        %v3626 = vrot.slane %v3625, 4
        %v3628 = vshll.u32 %v3477, 16
        %v3630 = vrot.slane %v3628, 5
        %v3631 = vsel %vm2876, %v3626, %v3630
        %v3633 = vshrl.u32 %v3452, 16
        %v3635 = vrot.slane %v3633, 4
        %v3636 = vshll.u32 %v3452, 16
        %v3638 = vrot.slane %v3636, 5
        %v3639 = vor.u32 %v3635, %v3638
        %v3640 = vrot.slane %v3639, 4
        %v3642 = vshll.u32 %v3453, 16
        %v3644 = vrot.slane %v3642, 5
        %v3645 = vsel %vm2876, %v3640, %v3644
        %v3646 = vshrl.u32 %v3453, 16
        %v3648 = vrot.slane %v3646, 4
        %v3649 = vor.u32 %v3648, %v3644
        %v3650 = vrot.slane %v3649, 4
        %v3652 = vshll.u32 %v3478, 16
        %v3654 = vrot.slane %v3652, 5
        %v3655 = vsel %vm2876, %v3650, %v3654
        %v3657 = vshrl.u32 %v3454, 16
        %v3659 = vrot.slane %v3657, 4
        %v3660 = vshll.u32 %v3454, 16
        %v3662 = vrot.slane %v3660, 5
        %v3663 = vor.u32 %v3659, %v3662
        %v3664 = vrot.slane %v3663, 4
        %v3666 = vshll.u32 %v3455, 16
        %v3668 = vrot.slane %v3666, 5
        %v3669 = vsel %vm2876, %v3664, %v3668
        %v3670 = vshrl.u32 %v3455, 16
        %v3672 = vrot.slane %v3670, 4
        %v3673 = vor.u32 %v3672, %v3668
        %v3674 = vrot.slane %v3673, 4
        %v3676 = vshll.u32 %v3479, 16
        %v3678 = vrot.slane %v3676, 5
        %v3679 = vsel %vm2876, %v3674, %v3678
        %v3681 = vshrl.u32 %v3456, 16
        %v3683 = vrot.slane %v3681, 4
        %v3684 = vshll.u32 %v3456, 16
        %v3686 = vrot.slane %v3684, 5
        %v3687 = vor.u32 %v3683, %v3686
        %v3688 = vrot.slane %v3687, 4
        %v3690 = vshll.u32 %v3457, 16
        %v3692 = vrot.slane %v3690, 5
        %v3693 = vsel %vm2876, %v3688, %v3692
        %v3694 = vshrl.u32 %v3457, 16
        %v3696 = vrot.slane %v3694, 4
        %v3697 = vor.u32 %v3696, %v3692
        %v3698 = vrot.slane %v3697, 4
        %v3700 = vshll.u32 %v3480, 16
        %v3702 = vrot.slane %v3700, 5
        %v3703 = vsel %vm2876, %v3698, %v3702
        %v3705 = vshrl.u32 %v3458, 16
        %v3707 = vrot.slane %v3705, 4
        %v3708 = vshll.u32 %v3458, 16
        %v3710 = vrot.slane %v3708, 5
        %v3711 = vor.u32 %v3707, %v3710
        %v3712 = vrot.slane %v3711, 4
        %v3714 = vshll.u32 %v3459, 16
        %v3716 = vrot.slane %v3714, 5
        %v3717 = vsel %vm2876, %v3712, %v3716
        %v3718 = vshrl.u32 %v3459, 16
        %v3720 = vrot.slane %v3718, 4
        %v3721 = vor.u32 %v3720, %v3716
        %v3722 = vrot.slane %v3721, 4
        %v3724 = vshll.u32 %v3481, 16
        %v3726 = vrot.slane %v3724, 5
        %v3727 = vsel %vm2876, %v3722, %v3726
        %v3729 = vshrl.u32 %v3460, 16
        %v3731 = vrot.slane %v3729, 4
        %v3732 = vshll.u32 %v3460, 16
        %v3734 = vrot.slane %v3732, 5
        %v3735 = vor.u32 %v3731, %v3734
        %v3736 = vrot.slane %v3735, 4
        %v3738 = vshll.u32 %v3461, 16
        %v3740 = vrot.slane %v3738, 5
        %v3741 = vsel %vm2876, %v3736, %v3740
        %v3742 = vshrl.u32 %v3461, 16
        %v3744 = vrot.slane %v3742, 4
        %v3745 = vor.u32 %v3744, %v3740
        %v3746 = vrot.slane %v3745, 4
        %v3748 = vshll.u32 %v3482, 16
        %v3750 = vrot.slane %v3748, 5
        %v3751 = vsel %vm2876, %v3746, %v3750
        %v3753 = vshrl.u32 %v3462, 16
        %v3755 = vrot.slane %v3753, 4
        %v3756 = vshll.u32 %v3462, 16
        %v3758 = vrot.slane %v3756, 5
        %v3759 = vor.u32 %v3755, %v3758
        %v3760 = vrot.slane %v3759, 4
        %v3762 = vshll.u32 %v3463, 16
        %v3764 = vrot.slane %v3762, 5
        %v3765 = vsel %vm2876, %v3760, %v3764
        %v3766 = vshrl.u32 %v3463, 16
        %v3768 = vrot.slane %v3766, 4
        %v3769 = vor.u32 %v3768, %v3764
        %v3770 = vrot.slane %v3769, 4
        %v3772 = vshll.u32 %v3483, 16
        %v3774 = vrot.slane %v3772, 5
        %v3775 = vsel %vm2876, %v3770, %v3774
        %v3777 = vshrl.u32 %v3464, 16
        %v3779 = vrot.slane %v3777, 4
        %v3780 = vshll.u32 %v3464, 16
        %v3782 = vrot.slane %v3780, 5
        %v3783 = vor.u32 %v3779, %v3782
        %v3784 = vrot.slane %v3783, 4
        %v3786 = vshll.u32 %v3465, 16
        %v3788 = vrot.slane %v3786, 5
        %v3789 = vsel %vm2876, %v3784, %v3788
        %v3790 = vshrl.u32 %v3465, 16
        %v3792 = vrot.slane %v3790, 4
        %v3793 = vor.u32 %v3792, %v3788
        %v3794 = vrot.slane %v3793, 4
        %v3796 = vshll.u32 %v3484, 16
        %v3798 = vrot.slane %v3796, 5
        %v3799 = vsel %vm2876, %v3794, %v3798
        %v3801 = vshrl.u32 %v3466, 16
        %v3803 = vrot.slane %v3801, 4
        %v3804 = vshll.u32 %v3466, 16
        %v3806 = vrot.slane %v3804, 5
        %v3807 = vor.u32 %v3803, %v3806
        %v3808 = vrot.slane %v3807, 4
        %v3810 = vshll.u32 %v3467, 16
        %v3812 = vrot.slane %v3810, 5
        %v3813 = vsel %vm2876, %v3808, %v3812
        %v3814 = vshrl.u32 %v3467, 16
        %v3816 = vrot.slane %v3814, 4
        %v3817 = vor.u32 %v3816, %v3812
        %v3818 = vrot.slane %v3817, 4
        %v3820 = vshll.u32 %v3485, 16
        %v3822 = vrot.slane %v3820, 5
        %v3823 = vsel %vm2876, %v3818, %v3822
        %v3825 = vshrl.u32 %v3468, 16
        %v3827 = vrot.slane %v3825, 4
        %v3828 = vshll.u32 %v3468, 16
        %v3830 = vrot.slane %v3828, 5
        %v3831 = vor.u32 %v3827, %v3830
        %v3832 = vrot.slane %v3831, 4
        %v3834 = vshll.u32 %v3469, 16
        %v3836 = vrot.slane %v3834, 5
        %v3837 = vsel %vm2876, %v3832, %v3836
        %v3838 = vshrl.u32 %v3469, 16
        %v3840 = vrot.slane %v3838, 4
        %v3841 = vor.u32 %v3840, %v3836
        %v3842 = vrot.slane %v3841, 4
        %v3844 = vshll.u32 %v3486, 16
        %v3846 = vrot.slane %v3844, 5
        %v3847 = vsel %vm2876, %v3842, %v3846
        %v3849 = vshrl.u32 %v3470, 16
        %v3851 = vrot.slane %v3849, 4
        %v3852 = vshll.u32 %v3470, 16
        %v3854 = vrot.slane %v3852, 5
        %v3855 = vor.u32 %v3851, %v3854
        %v3856 = vrot.slane %v3855, 4
        %v3858 = vshll.u32 %v3471, 16
        %v3860 = vrot.slane %v3858, 5
        %v3861 = vsel %vm2876, %v3856, %v3860
        %v3862 = vshrl.u32 %v3471, 16
        %v3864 = vrot.slane %v3862, 4
        %v3865 = vor.u32 %v3864, %v3860
        %v3866 = vrot.slane %v3865, 4
        %v3868 = vshll.u32 %v3487, 16
        %v3870 = vrot.slane %v3868, 5
        %v3871 = vsel %vm2876, %v3866, %v3870
        %v3872 = vld [vmem:[%s2676] sm:$0xe]
        %v3873 = vld [vmem:[%s2676 + $0xc] sm:$0xe]
        %v3874 = vld [vmem:[%s2676 + $0x18] sm:$0xe]
        %v3875 = vld [vmem:[%s2676 + $0x24] sm:$0xe]
        %v3876 = vld [vmem:[%s2676 + $0x30] sm:$0xe]
        %v3877 = vld [vmem:[%s2676 + $0x3c] sm:$0xe]
        %v3878 = vld [vmem:[%s2676 + $0x48] sm:$0xe]
        %v3879 = vld [vmem:[%s2676 + $0x54] sm:$0xe]
        %v3880 = vld [vmem:[%s2676 + $0x60] sm:$0xe]
        %v3881 = vld [vmem:[%s2676 + $0x6c] sm:$0xe]
        %v3882 = vld [vmem:[%s2676 + $0x78] sm:$0xe]
        %v3883 = vld [vmem:[%s2676 + $0x84] sm:$0xe]
        %v3884 = vld [vmem:[%s2676 + $0x90] sm:$0xe]
        %v3885 = vld [vmem:[%s2676 + $0x9c] sm:$0xe]
        %v3886 = vld [vmem:[%s2676 + $0xa8] sm:$0xe]
        %v3887 = vld [vmem:[%s2676 + $0xb4] sm:$0xe]
        %v3936 = vrot.slane %v3872, 5
        %v3937 = vrot.slane %v3936, 4
        %v3938 = vrot.slane %v3441, 5
        %v3939 = vsel %vm3327, %v3937, %v3938
        %v3940 = vrot.slane %v3938, 4
        %v3941 = vrot.slane %v3472, 5
        %v3942 = vsel %vm3327, %v3940, %v3941
        %v3943 = vrot.slane %v3873, 5
        %v3944 = vrot.slane %v3943, 4
        %v3945 = vrot.slane %v3443, 5
        %v3946 = vsel %vm3327, %v3944, %v3945
        %v3947 = vrot.slane %v3945, 4
        %v3948 = vrot.slane %v3473, 5
        %v3949 = vsel %vm3327, %v3947, %v3948
        %v3950 = vrot.slane %v3874, 5
        %v3951 = vrot.slane %v3950, 4
        %v3952 = vrot.slane %v3445, 5
        %v3953 = vsel %vm3327, %v3951, %v3952
        %v3954 = vrot.slane %v3952, 4
        %v3955 = vrot.slane %v3474, 5
        %v3956 = vsel %vm3327, %v3954, %v3955
        %v3957 = vrot.slane %v3875, 5
        %v3958 = vrot.slane %v3957, 4
        %v3959 = vrot.slane %v3447, 5
        %v3960 = vsel %vm3327, %v3958, %v3959
        %v3961 = vrot.slane %v3959, 4
        %v3962 = vrot.slane %v3475, 5
        %v3963 = vsel %vm3327, %v3961, %v3962
        %v3964 = vrot.slane %v3876, 5
        %v3965 = vrot.slane %v3964, 4
        %v3966 = vrot.slane %v3449, 5
        %v3967 = vsel %vm3327, %v3965, %v3966
        %v3968 = vrot.slane %v3966, 4
        %v3969 = vrot.slane %v3476, 5
        %v3970 = vsel %vm3327, %v3968, %v3969
        %v3971 = vrot.slane %v3877, 5
        %v3972 = vrot.slane %v3971, 4
        %v3973 = vrot.slane %v3451, 5
        %v3974 = vsel %vm3327, %v3972, %v3973
        %v3975 = vrot.slane %v3973, 4
        %v3976 = vrot.slane %v3477, 5
        %v3977 = vsel %vm3327, %v3975, %v3976
        %v3978 = vrot.slane %v3878, 5
        %v3979 = vrot.slane %v3978, 4
        %v3980 = vrot.slane %v3453, 5
        %v3981 = vsel %vm3327, %v3979, %v3980
        %v3982 = vrot.slane %v3980, 4
        %v3983 = vrot.slane %v3478, 5
        %v3984 = vsel %vm3327, %v3982, %v3983
        %v3985 = vrot.slane %v3879, 5
        %v3986 = vrot.slane %v3985, 4
        %v3987 = vrot.slane %v3455, 5
        %v3988 = vsel %vm3327, %v3986, %v3987
        %v3989 = vrot.slane %v3987, 4
        %v3990 = vrot.slane %v3479, 5
        %v3991 = vsel %vm3327, %v3989, %v3990
        %v3992 = vrot.slane %v3880, 5
        %v3993 = vrot.slane %v3992, 4
        %v3994 = vrot.slane %v3457, 5
        %v3995 = vsel %vm3327, %v3993, %v3994
        %v3996 = vrot.slane %v3994, 4
        %v3997 = vrot.slane %v3480, 5
        %v3998 = vsel %vm3327, %v3996, %v3997
        %v3999 = vrot.slane %v3881, 5
        %v4000 = vrot.slane %v3999, 4
        %v4001 = vrot.slane %v3459, 5
        %v4002 = vsel %vm3327, %v4000, %v4001
        %v4003 = vrot.slane %v4001, 4
        %v4004 = vrot.slane %v3481, 5
        %v4005 = vsel %vm3327, %v4003, %v4004
        %v4006 = vrot.slane %v3882, 5
        %v4007 = vrot.slane %v4006, 4
        %v4008 = vrot.slane %v3461, 5
        %v4009 = vsel %vm3327, %v4007, %v4008
        %v4010 = vrot.slane %v4008, 4
        %v4011 = vrot.slane %v3482, 5
        %v4012 = vsel %vm3327, %v4010, %v4011
        %v4013 = vrot.slane %v3883, 5
        %v4014 = vrot.slane %v4013, 4
        %v4015 = vrot.slane %v3463, 5
        %v4016 = vsel %vm3327, %v4014, %v4015
        %v4017 = vrot.slane %v4015, 4
        %v4018 = vrot.slane %v3483, 5
        %v4019 = vsel %vm3327, %v4017, %v4018
        %v4020 = vrot.slane %v3884, 5
        %v4021 = vrot.slane %v4020, 4
        %v4022 = vrot.slane %v3465, 5
        %v4023 = vsel %vm3327, %v4021, %v4022
        %v4024 = vrot.slane %v4022, 4
        %v4025 = vrot.slane %v3484, 5
        %v4026 = vsel %vm3327, %v4024, %v4025
        %v4027 = vrot.slane %v3885, 5
        %v4028 = vrot.slane %v4027, 4
        %v4029 = vrot.slane %v3467, 5
        %v4030 = vsel %vm3327, %v4028, %v4029
        %v4031 = vrot.slane %v4029, 4
        %v4032 = vrot.slane %v3485, 5
        %v4033 = vsel %vm3327, %v4031, %v4032
        %v4034 = vrot.slane %v3886, 5
        %v4035 = vrot.slane %v4034, 4
        %v4036 = vrot.slane %v3469, 5
        %v4037 = vsel %vm3327, %v4035, %v4036
        %v4038 = vrot.slane %v4036, 4
        %v4039 = vrot.slane %v3486, 5
        %v4040 = vsel %vm3327, %v4038, %v4039
        %v4041 = vrot.slane %v3887, 5
        %v4042 = vrot.slane %v4041, 4
        %v4043 = vrot.slane %v3471, 5
        %v4044 = vsel %vm3327, %v4042, %v4043
        %v4045 = vrot.slane %v4043, 4
        %v4046 = vrot.slane %v3487, 5
        %v4047 = vsel %vm3327, %v4045, %v4046
        %s4048 = scalar_lea.vmem [#allocation2], 24
        %v4049 = vld [vmem:[%s4048] sm:$0xf]
        %v4050 = vld [vmem:[%s4048 + $0x4] sm:$0xf]
        %v4051 = vld [vmem:[%s4048 + $0xc] sm:$0xf]
        %v4052 = vld [vmem:[%s4048 + $0x10] sm:$0xf]
        %v4053 = vld [vmem:[%s4048 + $0x18] sm:$0xf]
        %v4054 = vld [vmem:[%s4048 + $0x1c] sm:$0xf]
        %v4055 = vld [vmem:[%s4048 + $0x24] sm:$0xf]
        %v4056 = vld [vmem:[%s4048 + $0x28] sm:$0xf]
        %v4057 = vld [vmem:[%s4048 + $0x30] sm:$0xf]
        %v4058 = vld [vmem:[%s4048 + $0x34] sm:$0xf]
        %v4059 = vld [vmem:[%s4048 + $0x3c] sm:$0xf]
        %v4060 = vld [vmem:[%s4048 + $0x40] sm:$0xf]
        %v4061 = vld [vmem:[%s4048 + $0x48] sm:$0xf]
        %v4062 = vld [vmem:[%s4048 + $0x4c] sm:$0xf]
        %v4063 = vld [vmem:[%s4048 + $0x54] sm:$0xf]
        %v4064 = vld [vmem:[%s4048 + $0x58] sm:$0xf]
        %v4065 = vld [vmem:[%s4048 + $0x60] sm:$0xf]
        %v4066 = vld [vmem:[%s4048 + $0x64] sm:$0xf]
        %v4067 = vld [vmem:[%s4048 + $0x6c] sm:$0xf]
        %v4068 = vld [vmem:[%s4048 + $0x70] sm:$0xf]
        %v4069 = vld [vmem:[%s4048 + $0x78] sm:$0xf]
        %v4070 = vld [vmem:[%s4048 + $0x7c] sm:$0xf]
        %v4071 = vld [vmem:[%s4048 + $0x84] sm:$0xf]
        %v4072 = vld [vmem:[%s4048 + $0x88] sm:$0xf]
        %v4073 = vld [vmem:[%s4048 + $0x90] sm:$0xf]
        %v4074 = vld [vmem:[%s4048 + $0x94] sm:$0xf]
        %v4075 = vld [vmem:[%s4048 + $0x9c] sm:$0xf]
        %v4076 = vld [vmem:[%s4048 + $0xa0] sm:$0xf]
        %v4077 = vld [vmem:[%s4048 + $0xa8] sm:$0xf]
        %v4078 = vld [vmem:[%s4048 + $0xac] sm:$0xf]
        %v4079 = vld [vmem:[%s4048 + $0xb4] sm:$0xf]
        %v4080 = vld [vmem:[%s4048 + $0xb8] sm:$0xf]
        %v4081 = vld [vmem:[%s4048 + $0x8] sm:$0x1]
        %v4082 = vld [vmem:[%s4048 + $0x14] sm:$0x1]
        %v4083 = vld [vmem:[%s4048 + $0x20] sm:$0x1]
        %v4084 = vld [vmem:[%s4048 + $0x2c] sm:$0x1]
        %v4085 = vld [vmem:[%s4048 + $0x38] sm:$0x1]
        %v4086 = vld [vmem:[%s4048 + $0x44] sm:$0x1]
        %v4087 = vld [vmem:[%s4048 + $0x50] sm:$0x1]
        %v4088 = vld [vmem:[%s4048 + $0x5c] sm:$0x1]
        %v4089 = vld [vmem:[%s4048 + $0x68] sm:$0x1]
        %v4090 = vld [vmem:[%s4048 + $0x74] sm:$0x1]
        %v4091 = vld [vmem:[%s4048 + $0x80] sm:$0x1]
        %v4092 = vld [vmem:[%s4048 + $0x8c] sm:$0x1]
        %v4093 = vld [vmem:[%s4048 + $0x98] sm:$0x1]
        %v4094 = vld [vmem:[%s4048 + $0xa4] sm:$0x1]
        %v4095 = vld [vmem:[%s4048 + $0xb0] sm:$0x1]
        %v4096 = vld [vmem:[%s4048 + $0xbc] sm:$0x1]
        %v4098 = vshrl.u32 %v4049, 16
        %v4100 = vrot.slane %v4098, 4
        %v4101 = vshll.u32 %v4049, 16
        %v4103 = vrot.slane %v4101, 5
        %v4104 = vor.u32 %v4100, %v4103
        %v4105 = vrot.slane %v4104, 4
        %v4107 = vshll.u32 %v4050, 16
        %v4109 = vrot.slane %v4107, 5
        %v4110 = vsel %vm2876, %v4105, %v4109
        %v4111 = vshrl.u32 %v4050, 16
        %v4113 = vrot.slane %v4111, 4
        %v4114 = vor.u32 %v4113, %v4109
        %v4115 = vrot.slane %v4114, 4
        %v4117 = vshll.u32 %v4081, 16
        %v4119 = vrot.slane %v4117, 5
        %v4120 = vsel %vm2876, %v4115, %v4119
        %v4122 = vshrl.u32 %v4051, 16
        %v4124 = vrot.slane %v4122, 4
        %v4125 = vshll.u32 %v4051, 16
        %v4127 = vrot.slane %v4125, 5
        %v4128 = vor.u32 %v4124, %v4127
        %v4129 = vrot.slane %v4128, 4
        %v4131 = vshll.u32 %v4052, 16
        %v4133 = vrot.slane %v4131, 5
        %v4134 = vsel %vm2876, %v4129, %v4133
        %v4135 = vshrl.u32 %v4052, 16
        %v4137 = vrot.slane %v4135, 4
        %v4138 = vor.u32 %v4137, %v4133
        %v4139 = vrot.slane %v4138, 4
        %v4141 = vshll.u32 %v4082, 16
        %v4143 = vrot.slane %v4141, 5
        %v4144 = vsel %vm2876, %v4139, %v4143
        %v4146 = vshrl.u32 %v4053, 16
        %v4148 = vrot.slane %v4146, 4
        %v4149 = vshll.u32 %v4053, 16
        %v4151 = vrot.slane %v4149, 5
        %v4152 = vor.u32 %v4148, %v4151
        %v4153 = vrot.slane %v4152, 4
        %v4155 = vshll.u32 %v4054, 16
        %v4157 = vrot.slane %v4155, 5
        %v4158 = vsel %vm2876, %v4153, %v4157
        %v4159 = vshrl.u32 %v4054, 16
        %v4161 = vrot.slane %v4159, 4
        %v4162 = vor.u32 %v4161, %v4157
        %v4163 = vrot.slane %v4162, 4
        %v4165 = vshll.u32 %v4083, 16
        %v4167 = vrot.slane %v4165, 5
        %v4168 = vsel %vm2876, %v4163, %v4167
        %v4170 = vshrl.u32 %v4055, 16
        %v4172 = vrot.slane %v4170, 4
        %v4173 = vshll.u32 %v4055, 16
        %v4175 = vrot.slane %v4173, 5
        %v4176 = vor.u32 %v4172, %v4175
        %v4177 = vrot.slane %v4176, 4
        %v4179 = vshll.u32 %v4056, 16
        %v4181 = vrot.slane %v4179, 5
        %v4182 = vsel %vm2876, %v4177, %v4181
        %v4183 = vshrl.u32 %v4056, 16
        %v4185 = vrot.slane %v4183, 4
        %v4186 = vor.u32 %v4185, %v4181
        %v4187 = vrot.slane %v4186, 4
        %v4189 = vshll.u32 %v4084, 16
        %v4191 = vrot.slane %v4189, 5
        %v4192 = vsel %vm2876, %v4187, %v4191
        %v4194 = vshrl.u32 %v4057, 16
        %v4196 = vrot.slane %v4194, 4
        %v4197 = vshll.u32 %v4057, 16
        %v4199 = vrot.slane %v4197, 5
        %v4200 = vor.u32 %v4196, %v4199
        %v4201 = vrot.slane %v4200, 4
        %v4203 = vshll.u32 %v4058, 16
        %v4205 = vrot.slane %v4203, 5
        %v4206 = vsel %vm2876, %v4201, %v4205
        %v4207 = vshrl.u32 %v4058, 16
        %v4209 = vrot.slane %v4207, 4
        %v4210 = vor.u32 %v4209, %v4205
        %v4211 = vrot.slane %v4210, 4
        %v4213 = vshll.u32 %v4085, 16
        %v4215 = vrot.slane %v4213, 5
        %v4216 = vsel %vm2876, %v4211, %v4215
        %v4218 = vshrl.u32 %v4059, 16
        %v4220 = vrot.slane %v4218, 4
        %v4221 = vshll.u32 %v4059, 16
        %v4223 = vrot.slane %v4221, 5
        %v4224 = vor.u32 %v4220, %v4223
        %v4225 = vrot.slane %v4224, 4
        %v4227 = vshll.u32 %v4060, 16
        %v4229 = vrot.slane %v4227, 5
        %v4230 = vsel %vm2876, %v4225, %v4229
        %v4231 = vshrl.u32 %v4060, 16
        %v4233 = vrot.slane %v4231, 4
        %v4234 = vor.u32 %v4233, %v4229
        %v4235 = vrot.slane %v4234, 4
        %v4237 = vshll.u32 %v4086, 16
        %v4239 = vrot.slane %v4237, 5
        %v4240 = vsel %vm2876, %v4235, %v4239
        %v4242 = vshrl.u32 %v4061, 16
        %v4244 = vrot.slane %v4242, 4
        %v4245 = vshll.u32 %v4061, 16
        %v4247 = vrot.slane %v4245, 5
        %v4248 = vor.u32 %v4244, %v4247
        %v4249 = vrot.slane %v4248, 4
        %v4251 = vshll.u32 %v4062, 16
        %v4253 = vrot.slane %v4251, 5
        %v4254 = vsel %vm2876, %v4249, %v4253
        %v4255 = vshrl.u32 %v4062, 16
        %v4257 = vrot.slane %v4255, 4
        %v4258 = vor.u32 %v4257, %v4253
        %v4259 = vrot.slane %v4258, 4
        %v4261 = vshll.u32 %v4087, 16
        %v4263 = vrot.slane %v4261, 5
        %v4264 = vsel %vm2876, %v4259, %v4263
        %v4266 = vshrl.u32 %v4063, 16
        %v4268 = vrot.slane %v4266, 4
        %v4269 = vshll.u32 %v4063, 16
        %v4271 = vrot.slane %v4269, 5
        %v4272 = vor.u32 %v4268, %v4271
        %v4273 = vrot.slane %v4272, 4
        %v4275 = vshll.u32 %v4064, 16
        %v4277 = vrot.slane %v4275, 5
        %v4278 = vsel %vm2876, %v4273, %v4277
        %v4279 = vshrl.u32 %v4064, 16
        %v4281 = vrot.slane %v4279, 4
        %v4282 = vor.u32 %v4281, %v4277
        %v4283 = vrot.slane %v4282, 4
        %v4285 = vshll.u32 %v4088, 16
        %v4287 = vrot.slane %v4285, 5
        %v4288 = vsel %vm2876, %v4283, %v4287
        %v4290 = vshrl.u32 %v4065, 16
        %v4292 = vrot.slane %v4290, 4
        %v4293 = vshll.u32 %v4065, 16
        %v4295 = vrot.slane %v4293, 5
        %v4296 = vor.u32 %v4292, %v4295
        %v4297 = vrot.slane %v4296, 4
        %v4299 = vshll.u32 %v4066, 16
        %v4301 = vrot.slane %v4299, 5
        %v4302 = vsel %vm2876, %v4297, %v4301
        %v4303 = vshrl.u32 %v4066, 16
        %v4305 = vrot.slane %v4303, 4
        %v4306 = vor.u32 %v4305, %v4301
        %v4307 = vrot.slane %v4306, 4
        %v4309 = vshll.u32 %v4089, 16
        %v4311 = vrot.slane %v4309, 5
        %v4312 = vsel %vm2876, %v4307, %v4311
        %v4314 = vshrl.u32 %v4067, 16
        %v4316 = vrot.slane %v4314, 4
        %v4317 = vshll.u32 %v4067, 16
        %v4319 = vrot.slane %v4317, 5
        %v4320 = vor.u32 %v4316, %v4319
        %v4321 = vrot.slane %v4320, 4
        %v4323 = vshll.u32 %v4068, 16
        %v4325 = vrot.slane %v4323, 5
        %v4326 = vsel %vm2876, %v4321, %v4325
        %v4327 = vshrl.u32 %v4068, 16
        %v4329 = vrot.slane %v4327, 4
        %v4330 = vor.u32 %v4329, %v4325
        %v4331 = vrot.slane %v4330, 4
        %v4333 = vshll.u32 %v4090, 16
        %v4335 = vrot.slane %v4333, 5
        %v4336 = vsel %vm2876, %v4331, %v4335
        %v4338 = vshrl.u32 %v4069, 16
        %v4340 = vrot.slane %v4338, 4
        %v4341 = vshll.u32 %v4069, 16
        %v4343 = vrot.slane %v4341, 5
        %v4344 = vor.u32 %v4340, %v4343
        %v4345 = vrot.slane %v4344, 4
        %v4347 = vshll.u32 %v4070, 16
        %v4349 = vrot.slane %v4347, 5
        %v4350 = vsel %vm2876, %v4345, %v4349
        %v4351 = vshrl.u32 %v4070, 16
        %v4353 = vrot.slane %v4351, 4
        %v4354 = vor.u32 %v4353, %v4349
        %v4355 = vrot.slane %v4354, 4
        %v4357 = vshll.u32 %v4091, 16
        %v4359 = vrot.slane %v4357, 5
        %v4360 = vsel %vm2876, %v4355, %v4359
        %v4362 = vshrl.u32 %v4071, 16
        %v4364 = vrot.slane %v4362, 4
        %v4365 = vshll.u32 %v4071, 16
        %v4367 = vrot.slane %v4365, 5
        %v4368 = vor.u32 %v4364, %v4367
        %v4369 = vrot.slane %v4368, 4
        %v4371 = vshll.u32 %v4072, 16
        %v4373 = vrot.slane %v4371, 5
        %v4374 = vsel %vm2876, %v4369, %v4373
        %v4375 = vshrl.u32 %v4072, 16
        %v4377 = vrot.slane %v4375, 4
        %v4378 = vor.u32 %v4377, %v4373
        %v4379 = vrot.slane %v4378, 4
        %v4381 = vshll.u32 %v4092, 16
        %v4383 = vrot.slane %v4381, 5
        %v4384 = vsel %vm2876, %v4379, %v4383
        %v4386 = vshrl.u32 %v4073, 16
        %v4388 = vrot.slane %v4386, 4
        %v4389 = vshll.u32 %v4073, 16
        %v4391 = vrot.slane %v4389, 5
        %v4392 = vor.u32 %v4388, %v4391
        %v4393 = vrot.slane %v4392, 4
        %v4395 = vshll.u32 %v4074, 16
        %v4397 = vrot.slane %v4395, 5
        %v4398 = vsel %vm2876, %v4393, %v4397
        %v4399 = vshrl.u32 %v4074, 16
        %v4401 = vrot.slane %v4399, 4
        %v4402 = vor.u32 %v4401, %v4397
        %v4403 = vrot.slane %v4402, 4
        %v4405 = vshll.u32 %v4093, 16
        %v4407 = vrot.slane %v4405, 5
        %v4408 = vsel %vm2876, %v4403, %v4407
        %v4410 = vshrl.u32 %v4075, 16
        %v4412 = vrot.slane %v4410, 4
        %v4413 = vshll.u32 %v4075, 16
        %v4415 = vrot.slane %v4413, 5
        %v4416 = vor.u32 %v4412, %v4415
        %v4417 = vrot.slane %v4416, 4
        %v4419 = vshll.u32 %v4076, 16
        %v4421 = vrot.slane %v4419, 5
        %v4422 = vsel %vm2876, %v4417, %v4421
        %v4423 = vshrl.u32 %v4076, 16
        %v4425 = vrot.slane %v4423, 4
        %v4426 = vor.u32 %v4425, %v4421
        %v4427 = vrot.slane %v4426, 4
        %v4429 = vshll.u32 %v4094, 16
        %v4431 = vrot.slane %v4429, 5
        %v4432 = vsel %vm2876, %v4427, %v4431
        %v4434 = vshrl.u32 %v4077, 16
        %v4436 = vrot.slane %v4434, 4
        %v4437 = vshll.u32 %v4077, 16
        %v4439 = vrot.slane %v4437, 5
        %v4440 = vor.u32 %v4436, %v4439
        %v4441 = vrot.slane %v4440, 4
        %v4443 = vshll.u32 %v4078, 16
        %v4445 = vrot.slane %v4443, 5
        %v4446 = vsel %vm2876, %v4441, %v4445
        %v4447 = vshrl.u32 %v4078, 16
        %v4449 = vrot.slane %v4447, 4
        %v4450 = vor.u32 %v4449, %v4445
        %v4451 = vrot.slane %v4450, 4
        %v4453 = vshll.u32 %v4095, 16
        %v4455 = vrot.slane %v4453, 5
        %v4456 = vsel %vm2876, %v4451, %v4455
        %v4458 = vshrl.u32 %v4079, 16
        %v4460 = vrot.slane %v4458, 4
        %v4461 = vshll.u32 %v4079, 16
        %v4463 = vrot.slane %v4461, 5
        %v4464 = vor.u32 %v4460, %v4463
        %v4465 = vrot.slane %v4464, 4
        %v4467 = vshll.u32 %v4080, 16
        %v4469 = vrot.slane %v4467, 5
        %v4470 = vsel %vm2876, %v4465, %v4469
        %v4471 = vshrl.u32 %v4080, 16
        %v4473 = vrot.slane %v4471, 4
        %v4474 = vor.u32 %v4473, %v4469
        %v4475 = vrot.slane %v4474, 4
        %v4477 = vshll.u32 %v4096, 16
        %v4479 = vrot.slane %v4477, 5
        %v4480 = vsel %vm2876, %v4475, %v4479
        %v4481 = vld [vmem:[%s4048] sm:$0xe]
        %v4482 = vld [vmem:[%s4048 + $0xc] sm:$0xe]
        %v4483 = vld [vmem:[%s4048 + $0x18] sm:$0xe]
        %v4484 = vld [vmem:[%s4048 + $0x24] sm:$0xe]
        %v4485 = vld [vmem:[%s4048 + $0x30] sm:$0xe]
        %v4486 = vld [vmem:[%s4048 + $0x3c] sm:$0xe]
        %v4487 = vld [vmem:[%s4048 + $0x48] sm:$0xe]
        %v4488 = vld [vmem:[%s4048 + $0x54] sm:$0xe]
        %v4489 = vld [vmem:[%s4048 + $0x60] sm:$0xe]
        %v4490 = vld [vmem:[%s4048 + $0x6c] sm:$0xe]
        %v4491 = vld [vmem:[%s4048 + $0x78] sm:$0xe]
        %v4492 = vld [vmem:[%s4048 + $0x84] sm:$0xe]
        %v4493 = vld [vmem:[%s4048 + $0x90] sm:$0xe]
        %v4494 = vld [vmem:[%s4048 + $0x9c] sm:$0xe]
        %v4495 = vld [vmem:[%s4048 + $0xa8] sm:$0xe]
        %v4496 = vld [vmem:[%s4048 + $0xb4] sm:$0xe]
        %v4545 = vrot.slane %v4481, 5
        %v4546 = vrot.slane %v4545, 4
        %v4547 = vrot.slane %v4050, 5
        %v4548 = vsel %vm3327, %v4546, %v4547
        %v4549 = vrot.slane %v4547, 4
        %v4550 = vrot.slane %v4081, 5
        %v4551 = vsel %vm3327, %v4549, %v4550
        %v4552 = vrot.slane %v4482, 5
        %v4553 = vrot.slane %v4552, 4
        %v4554 = vrot.slane %v4052, 5
        %v4555 = vsel %vm3327, %v4553, %v4554
        %v4556 = vrot.slane %v4554, 4
        %v4557 = vrot.slane %v4082, 5
        %v4558 = vsel %vm3327, %v4556, %v4557
        %v4559 = vrot.slane %v4483, 5
        %v4560 = vrot.slane %v4559, 4
        %v4561 = vrot.slane %v4054, 5
        %v4562 = vsel %vm3327, %v4560, %v4561
        %v4563 = vrot.slane %v4561, 4
        %v4564 = vrot.slane %v4083, 5
        %v4565 = vsel %vm3327, %v4563, %v4564
        %v4566 = vrot.slane %v4484, 5
        %v4567 = vrot.slane %v4566, 4
        %v4568 = vrot.slane %v4056, 5
        %v4569 = vsel %vm3327, %v4567, %v4568
        %v4570 = vrot.slane %v4568, 4
        %v4571 = vrot.slane %v4084, 5
        %v4572 = vsel %vm3327, %v4570, %v4571
        %v4573 = vrot.slane %v4485, 5
        %v4574 = vrot.slane %v4573, 4
        %v4575 = vrot.slane %v4058, 5
        %v4576 = vsel %vm3327, %v4574, %v4575
        %v4577 = vrot.slane %v4575, 4
        %v4578 = vrot.slane %v4085, 5
        %v4579 = vsel %vm3327, %v4577, %v4578
        %v4580 = vrot.slane %v4486, 5
        %v4581 = vrot.slane %v4580, 4
        %v4582 = vrot.slane %v4060, 5
        %v4583 = vsel %vm3327, %v4581, %v4582
        %v4584 = vrot.slane %v4582, 4
        %v4585 = vrot.slane %v4086, 5
        %v4586 = vsel %vm3327, %v4584, %v4585
        %v4587 = vrot.slane %v4487, 5
        %v4588 = vrot.slane %v4587, 4
        %v4589 = vrot.slane %v4062, 5
        %v4590 = vsel %vm3327, %v4588, %v4589
        %v4591 = vrot.slane %v4589, 4
        %v4592 = vrot.slane %v4087, 5
        %v4593 = vsel %vm3327, %v4591, %v4592
        %v4594 = vrot.slane %v4488, 5
        %v4595 = vrot.slane %v4594, 4
        %v4596 = vrot.slane %v4064, 5
        %v4597 = vsel %vm3327, %v4595, %v4596
        %v4598 = vrot.slane %v4596, 4
        %v4599 = vrot.slane %v4088, 5
        %v4600 = vsel %vm3327, %v4598, %v4599
        %v4601 = vrot.slane %v4489, 5
        %v4602 = vrot.slane %v4601, 4
        %v4603 = vrot.slane %v4066, 5
        %v4604 = vsel %vm3327, %v4602, %v4603
        %v4605 = vrot.slane %v4603, 4
        %v4606 = vrot.slane %v4089, 5
        %v4607 = vsel %vm3327, %v4605, %v4606
        %v4608 = vrot.slane %v4490, 5
        %v4609 = vrot.slane %v4608, 4
        %v4610 = vrot.slane %v4068, 5
        %v4611 = vsel %vm3327, %v4609, %v4610
        %v4612 = vrot.slane %v4610, 4
        %v4613 = vrot.slane %v4090, 5
        %v4614 = vsel %vm3327, %v4612, %v4613
        %v4615 = vrot.slane %v4491, 5
        %v4616 = vrot.slane %v4615, 4
        %v4617 = vrot.slane %v4070, 5
        %v4618 = vsel %vm3327, %v4616, %v4617
        %v4619 = vrot.slane %v4617, 4
        %v4620 = vrot.slane %v4091, 5
        %v4621 = vsel %vm3327, %v4619, %v4620
        %v4622 = vrot.slane %v4492, 5
        %v4623 = vrot.slane %v4622, 4
        %v4624 = vrot.slane %v4072, 5
        %v4625 = vsel %vm3327, %v4623, %v4624
        %v4626 = vrot.slane %v4624, 4
        %v4627 = vrot.slane %v4092, 5
        %v4628 = vsel %vm3327, %v4626, %v4627
        %v4629 = vrot.slane %v4493, 5
        %v4630 = vrot.slane %v4629, 4
        %v4631 = vrot.slane %v4074, 5
        %v4632 = vsel %vm3327, %v4630, %v4631
        %v4633 = vrot.slane %v4631, 4
        %v4634 = vrot.slane %v4093, 5
        %v4635 = vsel %vm3327, %v4633, %v4634
        %v4636 = vrot.slane %v4494, 5
        %v4637 = vrot.slane %v4636, 4
        %v4638 = vrot.slane %v4076, 5
        %v4639 = vsel %vm3327, %v4637, %v4638
        %v4640 = vrot.slane %v4638, 4
        %v4641 = vrot.slane %v4094, 5
        %v4642 = vsel %vm3327, %v4640, %v4641
        %v4643 = vrot.slane %v4495, 5
        %v4644 = vrot.slane %v4643, 4
        %v4645 = vrot.slane %v4078, 5
        %v4646 = vsel %vm3327, %v4644, %v4645
        %v4647 = vrot.slane %v4645, 4
        %v4648 = vrot.slane %v4095, 5
        %v4649 = vsel %vm3327, %v4647, %v4648
        %v4650 = vrot.slane %v4496, 5
        %v4651 = vrot.slane %v4650, 4
        %v4652 = vrot.slane %v4080, 5
        %v4653 = vsel %vm3327, %v4651, %v4652
        %v4654 = vrot.slane %v4652, 4
        %v4655 = vrot.slane %v4096, 5
        %v4656 = vsel %vm3327, %v4654, %v4655
        %v4673 = vunpack.c.l.b16 %v2826
        %v4674 = vunpack.c.l.b16 %v2827
        %v4675 = vunpack.c.l.b16 %v2828
        %v4676 = vunpack.c.l.b16 %v2829
        %v4677 = vunpack.c.l.b16 %v2830
        %v4678 = vunpack.c.l.b16 %v2831
        %v4679 = vunpack.c.l.b16 %v2832
        %v4680 = vunpack.c.l.b16 %v2833
        %v4681 = vunpack.c.l.b16 %v2834
        %v4682 = vunpack.c.l.b16 %v2835
        %v4683 = vunpack.c.l.b16 %v2836
        %v4684 = vunpack.c.l.b16 %v2837
        %v4685 = vunpack.c.l.b16 %v2838
        %v4686 = vunpack.c.l.b16 %v2839
        %v4687 = vunpack.c.l.b16 %v2840
        %v4688 = vunpack.c.l.b16 %v2841
        %v4689 = vunpack.c.l.b16 %v2842
        %v4690 = vunpack.c.l.b16 %v2843
        %v4691 = vunpack.c.l.b16 %v2844
        %v4692 = vunpack.c.l.b16 %v2845
        %v4693 = vunpack.c.l.b16 %v2846
        %v4694 = vunpack.c.l.b16 %v2847
        %v4695 = vunpack.c.l.b16 %v2848
        %v4696 = vunpack.c.l.b16 %v2849
        %v4697 = vunpack.c.l.b16 %v2850
        %v4698 = vunpack.c.l.b16 %v2851
        %v4699 = vunpack.c.l.b16 %v2852
        %v4700 = vunpack.c.l.b16 %v2853
        %v4701 = vunpack.c.l.b16 %v2854
        %v4702 = vunpack.c.l.b16 %v2855
        %v4703 = vunpack.c.l.b16 %v2856
        %v4704 = vunpack.c.l.b16 %v2857
        %v4705 = vpack.c.b16 %v4674, %v4673
        %v4706 = vpack.c.b16 %v4676, %v4675
        %v4707 = vpack.c.b16 %v4678, %v4677
        %v4708 = vpack.c.b16 %v4680, %v4679
        %v4709 = vpack.c.b16 %v4682, %v4681
        %v4710 = vpack.c.b16 %v4684, %v4683
        %v4711 = vpack.c.b16 %v4686, %v4685
        %v4712 = vpack.c.b16 %v4688, %v4687
        %v4713 = vpack.c.b16 %v4690, %v4689
        %v4714 = vpack.c.b16 %v4692, %v4691
        %v4715 = vpack.c.b16 %v4694, %v4693
        %v4716 = vpack.c.b16 %v4696, %v4695
        %v4717 = vpack.c.b16 %v4698, %v4697
        %v4718 = vpack.c.b16 %v4700, %v4699
        %v4719 = vpack.c.b16 %v4702, %v4701
        %v4720 = vpack.c.b16 %v4704, %v4703
        %v4737 = vunpack.c.l.b16 %v2890
        %v4738 = vunpack.c.l.b16 %v2900
        %v4739 = vunpack.c.l.b16 %v2914
        %v4740 = vunpack.c.l.b16 %v2924
        %v4741 = vunpack.c.l.b16 %v2938
        %v4742 = vunpack.c.l.b16 %v2948
        %v4743 = vunpack.c.l.b16 %v2962
        %v4744 = vunpack.c.l.b16 %v2972
        %v4745 = vunpack.c.l.b16 %v2986
        %v4746 = vunpack.c.l.b16 %v2996
        %v4747 = vunpack.c.l.b16 %v3010
        %v4748 = vunpack.c.l.b16 %v3020
        %v4749 = vunpack.c.l.b16 %v3034
        %v4750 = vunpack.c.l.b16 %v3044
        %v4751 = vunpack.c.l.b16 %v3058
        %v4752 = vunpack.c.l.b16 %v3068
        %v4753 = vunpack.c.l.b16 %v3082
        %v4754 = vunpack.c.l.b16 %v3092
        %v4755 = vunpack.c.l.b16 %v3106
        %v4756 = vunpack.c.l.b16 %v3116
        %v4757 = vunpack.c.l.b16 %v3130
        %v4758 = vunpack.c.l.b16 %v3140
        %v4759 = vunpack.c.l.b16 %v3154
        %v4760 = vunpack.c.l.b16 %v3164
        %v4761 = vunpack.c.l.b16 %v3178
        %v4762 = vunpack.c.l.b16 %v3188
        %v4763 = vunpack.c.l.b16 %v3202
        %v4764 = vunpack.c.l.b16 %v3212
        %v4765 = vunpack.c.l.b16 %v3226
        %v4766 = vunpack.c.l.b16 %v3236
        %v4767 = vunpack.c.l.b16 %v3250
        %v4768 = vunpack.c.l.b16 %v3260
        %v4769 = vpack.c.b16 %v4738, %v4737
        %v4770 = vpack.c.b16 %v4740, %v4739
        %v4771 = vpack.c.b16 %v4742, %v4741
        %v4772 = vpack.c.b16 %v4744, %v4743
        %v4773 = vpack.c.b16 %v4746, %v4745
        %v4774 = vpack.c.b16 %v4748, %v4747
        %v4775 = vpack.c.b16 %v4750, %v4749
        %v4776 = vpack.c.b16 %v4752, %v4751
        %v4777 = vpack.c.b16 %v4754, %v4753
        %v4778 = vpack.c.b16 %v4756, %v4755
        %v4779 = vpack.c.b16 %v4758, %v4757
        %v4780 = vpack.c.b16 %v4760, %v4759
        %v4781 = vpack.c.b16 %v4762, %v4761
        %v4782 = vpack.c.b16 %v4764, %v4763
        %v4783 = vpack.c.b16 %v4766, %v4765
        %v4784 = vpack.c.b16 %v4768, %v4767
        %v4801 = vunpack.c.l.b16 %v3331
        %v4802 = vunpack.c.l.b16 %v3334
        %v4803 = vunpack.c.l.b16 %v3338
        %v4804 = vunpack.c.l.b16 %v3341
        %v4805 = vunpack.c.l.b16 %v3345
        %v4806 = vunpack.c.l.b16 %v3348
        %v4807 = vunpack.c.l.b16 %v3352
        %v4808 = vunpack.c.l.b16 %v3355
        %v4809 = vunpack.c.l.b16 %v3359
        %v4810 = vunpack.c.l.b16 %v3362
        %v4811 = vunpack.c.l.b16 %v3366
        %v4812 = vunpack.c.l.b16 %v3369
        %v4813 = vunpack.c.l.b16 %v3373
        %v4814 = vunpack.c.l.b16 %v3376
        %v4815 = vunpack.c.l.b16 %v3380
        %v4816 = vunpack.c.l.b16 %v3383
        %v4817 = vunpack.c.l.b16 %v3387
        %v4818 = vunpack.c.l.b16 %v3390
        %v4819 = vunpack.c.l.b16 %v3394
        %v4820 = vunpack.c.l.b16 %v3397
        %v4821 = vunpack.c.l.b16 %v3401
        %v4822 = vunpack.c.l.b16 %v3404
        %v4823 = vunpack.c.l.b16 %v3408
        %v4824 = vunpack.c.l.b16 %v3411
        %v4825 = vunpack.c.l.b16 %v3415
        %v4826 = vunpack.c.l.b16 %v3418
        %v4827 = vunpack.c.l.b16 %v3422
        %v4828 = vunpack.c.l.b16 %v3425
        %v4829 = vunpack.c.l.b16 %v3429
        %v4830 = vunpack.c.l.b16 %v3432
        %v4831 = vunpack.c.l.b16 %v3436
        %v4832 = vunpack.c.l.b16 %v3439
        %v4833 = vpack.c.b16 %v4802, %v4801
        %v4834 = vpack.c.b16 %v4804, %v4803
        %v4835 = vpack.c.b16 %v4806, %v4805
        %v4836 = vpack.c.b16 %v4808, %v4807
        %v4837 = vpack.c.b16 %v4810, %v4809
        %v4838 = vpack.c.b16 %v4812, %v4811
        %v4839 = vpack.c.b16 %v4814, %v4813
        %v4840 = vpack.c.b16 %v4816, %v4815
        %v4841 = vpack.c.b16 %v4818, %v4817
        %v4842 = vpack.c.b16 %v4820, %v4819
        %v4843 = vpack.c.b16 %v4822, %v4821
        %v4844 = vpack.c.b16 %v4824, %v4823
        %v4845 = vpack.c.b16 %v4826, %v4825
        %v4846 = vpack.c.b16 %v4828, %v4827
        %v4847 = vpack.c.b16 %v4830, %v4829
        %v4848 = vpack.c.b16 %v4832, %v4831
        %v4881 = vunpack.c.l.b16 %v3440
        %v4882 = vunpack.c.l.b16 %v3441
        %v4883 = vunpack.c.l.b16 %v3442
        %v4884 = vunpack.c.l.b16 %v3443
        %v4885 = vunpack.c.l.b16 %v3444
        %v4886 = vunpack.c.l.b16 %v3445
        %v4887 = vunpack.c.l.b16 %v3446
        %v4888 = vunpack.c.l.b16 %v3447
        %v4889 = vunpack.c.l.b16 %v3448
        %v4890 = vunpack.c.l.b16 %v3449
        %v4891 = vunpack.c.l.b16 %v3450
        %v4892 = vunpack.c.l.b16 %v3451
        %v4893 = vunpack.c.l.b16 %v3452
        %v4894 = vunpack.c.l.b16 %v3453
        %v4895 = vunpack.c.l.b16 %v3454
        %v4896 = vunpack.c.l.b16 %v3455
        %v4897 = vunpack.c.l.b16 %v3456
        %v4898 = vunpack.c.l.b16 %v3457
        %v4899 = vunpack.c.l.b16 %v3458
        %v4900 = vunpack.c.l.b16 %v3459
        %v4901 = vunpack.c.l.b16 %v3460
        %v4902 = vunpack.c.l.b16 %v3461
        %v4903 = vunpack.c.l.b16 %v3462
        %v4904 = vunpack.c.l.b16 %v3463
        %v4905 = vunpack.c.l.b16 %v3464
        %v4906 = vunpack.c.l.b16 %v3465
        %v4907 = vunpack.c.l.b16 %v3466
        %v4908 = vunpack.c.l.b16 %v3467
        %v4909 = vunpack.c.l.b16 %v3468
        %v4910 = vunpack.c.l.b16 %v3469
        %v4911 = vunpack.c.l.b16 %v3470
        %v4912 = vunpack.c.l.b16 %v3471
        %v4913 = vpack.c.b16 %v4882, %v4881
        %v4914 = vpack.c.b16 %v4884, %v4883
        %v4915 = vpack.c.b16 %v4886, %v4885
        %v4916 = vpack.c.b16 %v4888, %v4887
        %v4917 = vpack.c.b16 %v4890, %v4889
        %v4918 = vpack.c.b16 %v4892, %v4891
        %v4919 = vpack.c.b16 %v4894, %v4893
        %v4920 = vpack.c.b16 %v4896, %v4895
        %v4921 = vpack.c.b16 %v4898, %v4897
        %v4922 = vpack.c.b16 %v4900, %v4899
        %v4923 = vpack.c.b16 %v4902, %v4901
        %v4924 = vpack.c.b16 %v4904, %v4903
        %v4925 = vpack.c.b16 %v4906, %v4905
        %v4926 = vpack.c.b16 %v4908, %v4907
        %v4927 = vpack.c.b16 %v4910, %v4909
        %v4928 = vpack.c.b16 %v4912, %v4911
        %v4945 = vunpack.c.l.b16 %v3501
        %v4946 = vunpack.c.l.b16 %v3511
        %v4947 = vunpack.c.l.b16 %v3525
        %v4948 = vunpack.c.l.b16 %v3535
        %v4949 = vunpack.c.l.b16 %v3549
        %v4950 = vunpack.c.l.b16 %v3559
        %v4951 = vunpack.c.l.b16 %v3573
        %v4952 = vunpack.c.l.b16 %v3583
        %v4953 = vunpack.c.l.b16 %v3597
        %v4954 = vunpack.c.l.b16 %v3607
        %v4955 = vunpack.c.l.b16 %v3621
        %v4956 = vunpack.c.l.b16 %v3631
        %v4957 = vunpack.c.l.b16 %v3645
        %v4958 = vunpack.c.l.b16 %v3655
        %v4959 = vunpack.c.l.b16 %v3669
        %v4960 = vunpack.c.l.b16 %v3679
        %v4961 = vunpack.c.l.b16 %v3693
        %v4962 = vunpack.c.l.b16 %v3703
        %v4963 = vunpack.c.l.b16 %v3717
        %v4964 = vunpack.c.l.b16 %v3727
        %v4965 = vunpack.c.l.b16 %v3741
        %v4966 = vunpack.c.l.b16 %v3751
        %v4967 = vunpack.c.l.b16 %v3765
        %v4968 = vunpack.c.l.b16 %v3775
        %v4969 = vunpack.c.l.b16 %v3789
        %v4970 = vunpack.c.l.b16 %v3799
        %v4971 = vunpack.c.l.b16 %v3813
        %v4972 = vunpack.c.l.b16 %v3823
        %v4973 = vunpack.c.l.b16 %v3837
        %v4974 = vunpack.c.l.b16 %v3847
        %v4975 = vunpack.c.l.b16 %v3861
        %v4976 = vunpack.c.l.b16 %v3871
        %v4977 = vpack.c.b16 %v4946, %v4945
        %v4978 = vpack.c.b16 %v4948, %v4947
        %v4979 = vpack.c.b16 %v4950, %v4949
        %v4980 = vpack.c.b16 %v4952, %v4951
        %v4981 = vpack.c.b16 %v4954, %v4953
        %v4982 = vpack.c.b16 %v4956, %v4955
        %v4983 = vpack.c.b16 %v4958, %v4957
        %v4984 = vpack.c.b16 %v4960, %v4959
        %v4985 = vpack.c.b16 %v4962, %v4961
        %v4986 = vpack.c.b16 %v4964, %v4963
        %v4987 = vpack.c.b16 %v4966, %v4965
        %v4988 = vpack.c.b16 %v4968, %v4967
        %v4989 = vpack.c.b16 %v4970, %v4969
        %v4990 = vpack.c.b16 %v4972, %v4971
        %v4991 = vpack.c.b16 %v4974, %v4973
        %v4992 = vpack.c.b16 %v4976, %v4975
        %v5009 = vunpack.c.l.b16 %v3939
        %v5010 = vunpack.c.l.b16 %v3942
        %v5011 = vunpack.c.l.b16 %v3946
        %v5012 = vunpack.c.l.b16 %v3949
        %v5013 = vunpack.c.l.b16 %v3953
        %v5014 = vunpack.c.l.b16 %v3956
        %v5015 = vunpack.c.l.b16 %v3960
        %v5016 = vunpack.c.l.b16 %v3963
        %v5017 = vunpack.c.l.b16 %v3967
        %v5018 = vunpack.c.l.b16 %v3970
        %v5019 = vunpack.c.l.b16 %v3974
        %v5020 = vunpack.c.l.b16 %v3977
        %v5021 = vunpack.c.l.b16 %v3981
        %v5022 = vunpack.c.l.b16 %v3984
        %v5023 = vunpack.c.l.b16 %v3988
        %v5024 = vunpack.c.l.b16 %v3991
        %v5025 = vunpack.c.l.b16 %v3995
        %v5026 = vunpack.c.l.b16 %v3998
        %v5027 = vunpack.c.l.b16 %v4002
        %v5028 = vunpack.c.l.b16 %v4005
        %v5029 = vunpack.c.l.b16 %v4009
        %v5030 = vunpack.c.l.b16 %v4012
        %v5031 = vunpack.c.l.b16 %v4016
        %v5032 = vunpack.c.l.b16 %v4019
        %v5033 = vunpack.c.l.b16 %v4023
        %v5034 = vunpack.c.l.b16 %v4026
        %v5035 = vunpack.c.l.b16 %v4030
        %v5036 = vunpack.c.l.b16 %v4033
        %v5037 = vunpack.c.l.b16 %v4037
        %v5038 = vunpack.c.l.b16 %v4040
        %v5039 = vunpack.c.l.b16 %v4044
        %v5040 = vunpack.c.l.b16 %v4047
        %v5041 = vpack.c.b16 %v5010, %v5009
        %v5042 = vpack.c.b16 %v5012, %v5011
        %v5043 = vpack.c.b16 %v5014, %v5013
        %v5044 = vpack.c.b16 %v5016, %v5015
        %v5045 = vpack.c.b16 %v5018, %v5017
        %v5046 = vpack.c.b16 %v5020, %v5019
        %v5047 = vpack.c.b16 %v5022, %v5021
        %v5048 = vpack.c.b16 %v5024, %v5023
        %v5049 = vpack.c.b16 %v5026, %v5025
        %v5050 = vpack.c.b16 %v5028, %v5027
        %v5051 = vpack.c.b16 %v5030, %v5029
        %v5052 = vpack.c.b16 %v5032, %v5031
        %v5053 = vpack.c.b16 %v5034, %v5033
        %v5054 = vpack.c.b16 %v5036, %v5035
        %v5055 = vpack.c.b16 %v5038, %v5037
        %v5056 = vpack.c.b16 %v5040, %v5039
        %v5089 = vunpack.c.l.b16 %v4049
        %v5090 = vunpack.c.l.b16 %v4050
        %v5091 = vunpack.c.l.b16 %v4051
        %v5092 = vunpack.c.l.b16 %v4052
        %v5093 = vunpack.c.l.b16 %v4053
        %v5094 = vunpack.c.l.b16 %v4054
        %v5095 = vunpack.c.l.b16 %v4055
        %v5096 = vunpack.c.l.b16 %v4056
        %v5097 = vunpack.c.l.b16 %v4057
        %v5098 = vunpack.c.l.b16 %v4058
        %v5099 = vunpack.c.l.b16 %v4059
        %v5100 = vunpack.c.l.b16 %v4060
        %v5101 = vunpack.c.l.b16 %v4061
        %v5102 = vunpack.c.l.b16 %v4062
        %v5103 = vunpack.c.l.b16 %v4063
        %v5104 = vunpack.c.l.b16 %v4064
        %v5105 = vunpack.c.l.b16 %v4065
        %v5106 = vunpack.c.l.b16 %v4066
        %v5107 = vunpack.c.l.b16 %v4067
        %v5108 = vunpack.c.l.b16 %v4068
        %v5109 = vunpack.c.l.b16 %v4069
        %v5110 = vunpack.c.l.b16 %v4070
        %v5111 = vunpack.c.l.b16 %v4071
        %v5112 = vunpack.c.l.b16 %v4072
        %v5113 = vunpack.c.l.b16 %v4073
        %v5114 = vunpack.c.l.b16 %v4074
        %v5115 = vunpack.c.l.b16 %v4075
        %v5116 = vunpack.c.l.b16 %v4076
        %v5117 = vunpack.c.l.b16 %v4077
        %v5118 = vunpack.c.l.b16 %v4078
        %v5119 = vunpack.c.l.b16 %v4079
        %v5120 = vunpack.c.l.b16 %v4080
        %v5121 = vpack.c.b16 %v5090, %v5089
        %v5122 = vpack.c.b16 %v5092, %v5091
        %v5123 = vpack.c.b16 %v5094, %v5093
        %v5124 = vpack.c.b16 %v5096, %v5095
        %v5125 = vpack.c.b16 %v5098, %v5097
        %v5126 = vpack.c.b16 %v5100, %v5099
        %v5127 = vpack.c.b16 %v5102, %v5101
        %v5128 = vpack.c.b16 %v5104, %v5103
        %v5129 = vpack.c.b16 %v5106, %v5105
        %v5130 = vpack.c.b16 %v5108, %v5107
        %v5131 = vpack.c.b16 %v5110, %v5109
        %v5132 = vpack.c.b16 %v5112, %v5111
        %v5133 = vpack.c.b16 %v5114, %v5113
        %v5134 = vpack.c.b16 %v5116, %v5115
        %v5135 = vpack.c.b16 %v5118, %v5117
        %v5136 = vpack.c.b16 %v5120, %v5119
        %v5153 = vunpack.c.l.b16 %v4110
        %v5154 = vunpack.c.l.b16 %v4120
        %v5155 = vunpack.c.l.b16 %v4134
        %v5156 = vunpack.c.l.b16 %v4144
        %v5157 = vunpack.c.l.b16 %v4158
        %v5158 = vunpack.c.l.b16 %v4168
        %v5159 = vunpack.c.l.b16 %v4182
        %v5160 = vunpack.c.l.b16 %v4192
        %v5161 = vunpack.c.l.b16 %v4206
        %v5162 = vunpack.c.l.b16 %v4216
        %v5163 = vunpack.c.l.b16 %v4230
        %v5164 = vunpack.c.l.b16 %v4240
        %v5165 = vunpack.c.l.b16 %v4254
        %v5166 = vunpack.c.l.b16 %v4264
        %v5167 = vunpack.c.l.b16 %v4278
        %v5168 = vunpack.c.l.b16 %v4288
        %v5169 = vunpack.c.l.b16 %v4302
        %v5170 = vunpack.c.l.b16 %v4312
        %v5171 = vunpack.c.l.b16 %v4326
        %v5172 = vunpack.c.l.b16 %v4336
        %v5173 = vunpack.c.l.b16 %v4350
        %v5174 = vunpack.c.l.b16 %v4360
        %v5175 = vunpack.c.l.b16 %v4374
        %v5176 = vunpack.c.l.b16 %v4384
        %v5177 = vunpack.c.l.b16 %v4398
        %v5178 = vunpack.c.l.b16 %v4408
        %v5179 = vunpack.c.l.b16 %v4422
        %v5180 = vunpack.c.l.b16 %v4432
        %v5181 = vunpack.c.l.b16 %v4446
        %v5182 = vunpack.c.l.b16 %v4456
        %v5183 = vunpack.c.l.b16 %v4470
        %v5184 = vunpack.c.l.b16 %v4480
        %v5185 = vpack.c.b16 %v5154, %v5153
        %v5186 = vpack.c.b16 %v5156, %v5155
        %v5187 = vpack.c.b16 %v5158, %v5157
        %v5188 = vpack.c.b16 %v5160, %v5159
        %v5189 = vpack.c.b16 %v5162, %v5161
        %v5190 = vpack.c.b16 %v5164, %v5163
        %v5191 = vpack.c.b16 %v5166, %v5165
        %v5192 = vpack.c.b16 %v5168, %v5167
        %v5193 = vpack.c.b16 %v5170, %v5169
        %v5194 = vpack.c.b16 %v5172, %v5171
        %v5195 = vpack.c.b16 %v5174, %v5173
        %v5196 = vpack.c.b16 %v5176, %v5175
        %v5197 = vpack.c.b16 %v5178, %v5177
        %v5198 = vpack.c.b16 %v5180, %v5179
        %v5199 = vpack.c.b16 %v5182, %v5181
        %v5200 = vpack.c.b16 %v5184, %v5183
        %v5217 = vunpack.c.l.b16 %v4548
        %v5218 = vunpack.c.l.b16 %v4551
        %v5219 = vunpack.c.l.b16 %v4555
        %v5220 = vunpack.c.l.b16 %v4558
        %v5221 = vunpack.c.l.b16 %v4562
        %v5222 = vunpack.c.l.b16 %v4565
        %v5223 = vunpack.c.l.b16 %v4569
        %v5224 = vunpack.c.l.b16 %v4572
        %v5225 = vunpack.c.l.b16 %v4576
        %v5226 = vunpack.c.l.b16 %v4579
        %v5227 = vunpack.c.l.b16 %v4583
        %v5228 = vunpack.c.l.b16 %v4586
        %v5229 = vunpack.c.l.b16 %v4590
        %v5230 = vunpack.c.l.b16 %v4593
        %v5231 = vunpack.c.l.b16 %v4597
        %v5232 = vunpack.c.l.b16 %v4600
        %v5233 = vunpack.c.l.b16 %v4604
        %v5234 = vunpack.c.l.b16 %v4607
        %v5235 = vunpack.c.l.b16 %v4611
        %v5236 = vunpack.c.l.b16 %v4614
        %v5237 = vunpack.c.l.b16 %v4618
        %v5238 = vunpack.c.l.b16 %v4621
        %v5239 = vunpack.c.l.b16 %v4625
        %v5240 = vunpack.c.l.b16 %v4628
        %v5241 = vunpack.c.l.b16 %v4632
        %v5242 = vunpack.c.l.b16 %v4635
        %v5243 = vunpack.c.l.b16 %v4639
        %v5244 = vunpack.c.l.b16 %v4642
        %v5245 = vunpack.c.l.b16 %v4646
        %v5246 = vunpack.c.l.b16 %v4649
        %v5247 = vunpack.c.l.b16 %v4653
        %v5248 = vunpack.c.l.b16 %v4656
        %v5249 = vpack.c.b16 %v5218, %v5217
        %v5250 = vpack.c.b16 %v5220, %v5219
        %v5251 = vpack.c.b16 %v5222, %v5221
        %v5252 = vpack.c.b16 %v5224, %v5223
        %v5253 = vpack.c.b16 %v5226, %v5225
        %v5254 = vpack.c.b16 %v5228, %v5227
        %v5255 = vpack.c.b16 %v5230, %v5229
        %v5256 = vpack.c.b16 %v5232, %v5231
        %v5257 = vpack.c.b16 %v5234, %v5233
        %v5258 = vpack.c.b16 %v5236, %v5235
        %v5259 = vpack.c.b16 %v5238, %v5237
        %v5260 = vpack.c.b16 %v5240, %v5239
        %v5261 = vpack.c.b16 %v5242, %v5241
        %v5262 = vpack.c.b16 %v5244, %v5243
        %v5263 = vpack.c.b16 %v5246, %v5245
        %v5264 = vpack.c.b16 %v5248, %v5247
        %v5281 = vld [vmem:[%s4] sm:$0xf]
        %v5282 = vld [vmem:[%s4 + $0x4] sm:$0xf]
        %v5283 = vld [vmem:[%s4 + $0x8] sm:$0xf]
        %v5284 = vld [vmem:[%s4 + $0xc] sm:$0xf]
        %v5285 = vld [vmem:[%s4 + $0x10] sm:$0xf]
        %v5286 = vld [vmem:[%s4 + $0x14] sm:$0xf]
        %v5287 = vld [vmem:[%s4 + $0x18] sm:$0xf]
        %v5288 = vld [vmem:[%s4 + $0x1c] sm:$0xf]
        %v5289 = vld [vmem:[%s4 + $0x20] sm:$0xf]
        %v5290 = vld [vmem:[%s4 + $0x24] sm:$0xf]
        %v5291 = vld [vmem:[%s4 + $0x28] sm:$0xf]
        %v5292 = vld [vmem:[%s4 + $0x2c] sm:$0xf]
        %v5293 = vld [vmem:[%s4 + $0x30] sm:$0xf]
        %v5294 = vld [vmem:[%s4 + $0x34] sm:$0xf]
        %v5295 = vld [vmem:[%s4 + $0x38] sm:$0xf]
        %v5296 = vld [vmem:[%s4 + $0x3c] sm:$0xf]
        %v5297 = vld [vmem:[%s4 + $0x40] sm:$0xf]
        %v5298 = vld [vmem:[%s4 + $0x44] sm:$0xf]
        %v5299 = vld [vmem:[%s4 + $0x48] sm:$0xf]
        %v5300 = vld [vmem:[%s4 + $0x4c] sm:$0xf]
        %v5301 = vld [vmem:[%s4 + $0x50] sm:$0xf]
        %v5302 = vld [vmem:[%s4 + $0x54] sm:$0xf]
        %v5303 = vld [vmem:[%s4 + $0x58] sm:$0xf]
        %v5304 = vld [vmem:[%s4 + $0x5c] sm:$0xf]
        %v5305 = vld [vmem:[%s4 + $0x60] sm:$0xf]
        %v5306 = vld [vmem:[%s4 + $0x64] sm:$0xf]
        %v5307 = vld [vmem:[%s4 + $0x68] sm:$0xf]
        %v5308 = vld [vmem:[%s4 + $0x6c] sm:$0xf]
        %v5309 = vld [vmem:[%s4 + $0x70] sm:$0xf]
        %v5310 = vld [vmem:[%s4 + $0x74] sm:$0xf]
        %v5311 = vld [vmem:[%s4 + $0x78] sm:$0xf]
        %v5312 = vld [vmem:[%s4 + $0x7c] sm:$0xf]
        %v5313 = vld [vmem:[%s4 + $0x80] sm:$0xf]
        %v5314 = vld [vmem:[%s4 + $0x84] sm:$0xf]
        %v5315 = vld [vmem:[%s4 + $0x88] sm:$0xf]
        %v5316 = vld [vmem:[%s4 + $0x8c] sm:$0xf]
        %v5317 = vld [vmem:[%s4 + $0x90] sm:$0xf]
        %v5318 = vld [vmem:[%s4 + $0x94] sm:$0xf]
        %v5319 = vld [vmem:[%s4 + $0x98] sm:$0xf]
        %v5320 = vld [vmem:[%s4 + $0x9c] sm:$0xf]
        %v5321 = vld [vmem:[%s4 + $0xa0] sm:$0xf]
        %v5322 = vld [vmem:[%s4 + $0xa4] sm:$0xf]
        %v5323 = vld [vmem:[%s4 + $0xa8] sm:$0xf]
        %v5324 = vld [vmem:[%s4 + $0xac] sm:$0xf]
        %v5325 = vld [vmem:[%s4 + $0xb0] sm:$0xf]
        %v5326 = vld [vmem:[%s4 + $0xb4] sm:$0xf]
        %v5327 = vld [vmem:[%s4 + $0xb8] sm:$0xf]
        %v5328 = vld [vmem:[%s4 + $0xbc] sm:$0xf]
        %v5329 = vld [vmem:[%s4 + $0xc0] sm:$0xf]
        %v5330 = vld [vmem:[%s4 + $0xc4] sm:$0xf]
        %v5331 = vld [vmem:[%s4 + $0xc8] sm:$0xf]
        %v5332 = vld [vmem:[%s4 + $0xcc] sm:$0xf]
        %v5333 = vld [vmem:[%s4 + $0xd0] sm:$0xf]
        %v5334 = vld [vmem:[%s4 + $0xd4] sm:$0xf]
        %v5335 = vld [vmem:[%s4 + $0xd8] sm:$0xf]
        %v5336 = vld [vmem:[%s4 + $0xdc] sm:$0xf]
        %v5337 = vld [vmem:[%s4 + $0xe0] sm:$0xf]
        %v5338 = vld [vmem:[%s4 + $0xe4] sm:$0xf]
        %v5339 = vld [vmem:[%s4 + $0xe8] sm:$0xf]
        %v5340 = vld [vmem:[%s4 + $0xec] sm:$0xf]
        %v5341 = vld [vmem:[%s4 + $0xf0] sm:$0xf]
        %v5342 = vld [vmem:[%s4 + $0xf4] sm:$0xf]
        %v5343 = vld [vmem:[%s4 + $0xf8] sm:$0xf]
        %v5344 = vld [vmem:[%s4 + $0xfc] sm:$0xf]
        %v5345 = vld [vmem:[%s4 + $0x100] sm:$0xf]
        %v5346 = vld [vmem:[%s4 + $0x104] sm:$0xf]
        %v5347 = vld [vmem:[%s4 + $0x108] sm:$0xf]
        %v5348 = vld [vmem:[%s4 + $0x10c] sm:$0xf]
        %v5349 = vld [vmem:[%s4 + $0x110] sm:$0xf]
        %v5350 = vld [vmem:[%s4 + $0x114] sm:$0xf]
        %v5351 = vld [vmem:[%s4 + $0x118] sm:$0xf]
        %v5352 = vld [vmem:[%s4 + $0x11c] sm:$0xf]
        %v5353 = vld [vmem:[%s4 + $0x120] sm:$0xf]
        %v5354 = vld [vmem:[%s4 + $0x124] sm:$0xf]
        %v5355 = vld [vmem:[%s4 + $0x128] sm:$0xf]
        %v5356 = vld [vmem:[%s4 + $0x12c] sm:$0xf]
        %v5357 = vld [vmem:[%s4 + $0x130] sm:$0xf]
        %v5358 = vld [vmem:[%s4 + $0x134] sm:$0xf]
        %v5359 = vld [vmem:[%s4 + $0x138] sm:$0xf]
        %v5360 = vld [vmem:[%s4 + $0x13c] sm:$0xf]
        %v5361 = vld [vmem:[%s4 + $0x140] sm:$0xf]
        %v5362 = vld [vmem:[%s4 + $0x144] sm:$0xf]
        %v5363 = vld [vmem:[%s4 + $0x148] sm:$0xf]
        %v5364 = vld [vmem:[%s4 + $0x14c] sm:$0xf]
        %v5365 = vld [vmem:[%s4 + $0x150] sm:$0xf]
        %v5366 = vld [vmem:[%s4 + $0x154] sm:$0xf]
        %v5367 = vld [vmem:[%s4 + $0x158] sm:$0xf]
        %v5368 = vld [vmem:[%s4 + $0x15c] sm:$0xf]
        %v5369 = vld [vmem:[%s4 + $0x160] sm:$0xf]
        %v5370 = vld [vmem:[%s4 + $0x164] sm:$0xf]
        %v5371 = vld [vmem:[%s4 + $0x168] sm:$0xf]
        %v5372 = vld [vmem:[%s4 + $0x16c] sm:$0xf]
        %v5373 = vld [vmem:[%s4 + $0x170] sm:$0xf]
        %v5374 = vld [vmem:[%s4 + $0x174] sm:$0xf]
        %v5375 = vld [vmem:[%s4 + $0x178] sm:$0xf]
        %v5376 = vld [vmem:[%s4 + $0x17c] sm:$0xf]
        %v5377 = vld [vmem:[%s4 + $0x180] sm:$0xf]
        %v5378 = vld [vmem:[%s4 + $0x184] sm:$0xf]
        %v5379 = vld [vmem:[%s4 + $0x188] sm:$0xf]
        %v5380 = vld [vmem:[%s4 + $0x18c] sm:$0xf]
        %v5381 = vld [vmem:[%s4 + $0x190] sm:$0xf]
        %v5382 = vld [vmem:[%s4 + $0x194] sm:$0xf]
        %v5383 = vld [vmem:[%s4 + $0x198] sm:$0xf]
        %v5384 = vld [vmem:[%s4 + $0x19c] sm:$0xf]
        %v5385 = vld [vmem:[%s4 + $0x1a0] sm:$0xf]
        %v5386 = vld [vmem:[%s4 + $0x1a4] sm:$0xf]
        %v5387 = vld [vmem:[%s4 + $0x1a8] sm:$0xf]
        %v5388 = vld [vmem:[%s4 + $0x1ac] sm:$0xf]
        %v5389 = vld [vmem:[%s4 + $0x1b0] sm:$0xf]
        %v5390 = vld [vmem:[%s4 + $0x1b4] sm:$0xf]
        %v5391 = vld [vmem:[%s4 + $0x1b8] sm:$0xf]
        %v5392 = vld [vmem:[%s4 + $0x1bc] sm:$0xf]
        %v5393 = vld [vmem:[%s4 + $0x1c0] sm:$0xf]
        %v5394 = vld [vmem:[%s4 + $0x1c4] sm:$0xf]
        %v5395 = vld [vmem:[%s4 + $0x1c8] sm:$0xf]
        %v5396 = vld [vmem:[%s4 + $0x1cc] sm:$0xf]
        %v5397 = vld [vmem:[%s4 + $0x1d0] sm:$0xf]
        %v5398 = vld [vmem:[%s4 + $0x1d4] sm:$0xf]
        %v5399 = vld [vmem:[%s4 + $0x1d8] sm:$0xf]
        %v5400 = vld [vmem:[%s4 + $0x1dc] sm:$0xf]
        %v5401 = vld [vmem:[%s4 + $0x1e0] sm:$0xf]
        %v5402 = vld [vmem:[%s4 + $0x1e4] sm:$0xf]
        %v5403 = vld [vmem:[%s4 + $0x1e8] sm:$0xf]
        %v5404 = vld [vmem:[%s4 + $0x1ec] sm:$0xf]
        %v5405 = vld [vmem:[%s4 + $0x1f0] sm:$0xf]
        %v5406 = vld [vmem:[%s4 + $0x1f4] sm:$0xf]
        %v5407 = vld [vmem:[%s4 + $0x1f8] sm:$0xf]
        %v5408 = vld [vmem:[%s4 + $0x1fc] sm:$0xf]
        %v5409 = vld [vmem:[%s4 + $0x200] sm:$0xf]
        %v5410 = vld [vmem:[%s4 + $0x204] sm:$0xf]
        %v5411 = vld [vmem:[%s4 + $0x208] sm:$0xf]
        %v5412 = vld [vmem:[%s4 + $0x20c] sm:$0xf]
        %v5413 = vld [vmem:[%s4 + $0x210] sm:$0xf]
        %v5414 = vld [vmem:[%s4 + $0x214] sm:$0xf]
        %v5415 = vld [vmem:[%s4 + $0x218] sm:$0xf]
        %v5416 = vld [vmem:[%s4 + $0x21c] sm:$0xf]
        %v5417 = vld [vmem:[%s4 + $0x220] sm:$0xf]
        %v5418 = vld [vmem:[%s4 + $0x224] sm:$0xf]
        %v5419 = vld [vmem:[%s4 + $0x228] sm:$0xf]
        %v5420 = vld [vmem:[%s4 + $0x22c] sm:$0xf]
        %v5421 = vld [vmem:[%s4 + $0x230] sm:$0xf]
        %v5422 = vld [vmem:[%s4 + $0x234] sm:$0xf]
        %v5423 = vld [vmem:[%s4 + $0x238] sm:$0xf]
        %v5424 = vld [vmem:[%s4 + $0x23c] sm:$0xf]
        %v5569 = vunpack.c.l.b16 %v5281
        %v5570 = vunpack.c.l.b16 %v5282
        %v5571 = vunpack.c.l.b16 %v5283
        %v5572 = vunpack.c.l.b16 %v5284
        %v5573 = vunpack.c.l.b16 %v5285
        %v5574 = vunpack.c.l.b16 %v5286
        %v5575 = vunpack.c.l.b16 %v5287
        %v5576 = vunpack.c.l.b16 %v5288
        %v5577 = vunpack.c.l.b16 %v5289
        %v5578 = vunpack.c.l.b16 %v5290
        %v5579 = vunpack.c.l.b16 %v5291
        %v5580 = vunpack.c.l.b16 %v5292
        %v5581 = vunpack.c.l.b16 %v5293
        %v5582 = vunpack.c.l.b16 %v5294
        %v5583 = vunpack.c.l.b16 %v5295
        %v5584 = vunpack.c.l.b16 %v5296
        %v5585 = vunpack.c.l.b16 %v5297
        %v5586 = vunpack.c.l.b16 %v5298
        %v5587 = vunpack.c.l.b16 %v5299
        %v5588 = vunpack.c.l.b16 %v5300
        %v5589 = vunpack.c.l.b16 %v5301
        %v5590 = vunpack.c.l.b16 %v5302
        %v5591 = vunpack.c.l.b16 %v5303
        %v5592 = vunpack.c.l.b16 %v5304
        %v5593 = vunpack.c.l.b16 %v5305
        %v5594 = vunpack.c.l.b16 %v5306
        %v5595 = vunpack.c.l.b16 %v5307
        %v5596 = vunpack.c.l.b16 %v5308
        %v5597 = vunpack.c.l.b16 %v5309
        %v5598 = vunpack.c.l.b16 %v5310
        %v5599 = vunpack.c.l.b16 %v5311
        %v5600 = vunpack.c.l.b16 %v5312
        %v5601 = vunpack.c.l.b16 %v5313
        %v5602 = vunpack.c.l.b16 %v5314
        %v5603 = vunpack.c.l.b16 %v5315
        %v5604 = vunpack.c.l.b16 %v5316
        %v5605 = vunpack.c.l.b16 %v5317
        %v5606 = vunpack.c.l.b16 %v5318
        %v5607 = vunpack.c.l.b16 %v5319
        %v5608 = vunpack.c.l.b16 %v5320
        %v5609 = vunpack.c.l.b16 %v5321
        %v5610 = vunpack.c.l.b16 %v5322
        %v5611 = vunpack.c.l.b16 %v5323
        %v5612 = vunpack.c.l.b16 %v5324
        %v5613 = vunpack.c.l.b16 %v5325
        %v5614 = vunpack.c.l.b16 %v5326
        %v5615 = vunpack.c.l.b16 %v5327
        %v5616 = vunpack.c.l.b16 %v5328
        %v5617 = vunpack.c.l.b16 %v5329
        %v5618 = vunpack.c.l.b16 %v5330
        %v5619 = vunpack.c.l.b16 %v5331
        %v5620 = vunpack.c.l.b16 %v5332
        %v5621 = vunpack.c.l.b16 %v5333
        %v5622 = vunpack.c.l.b16 %v5334
        %v5623 = vunpack.c.l.b16 %v5335
        %v5624 = vunpack.c.l.b16 %v5336
        %v5625 = vunpack.c.l.b16 %v5337
        %v5626 = vunpack.c.l.b16 %v5338
        %v5627 = vunpack.c.l.b16 %v5339
        %v5628 = vunpack.c.l.b16 %v5340
        %v5629 = vunpack.c.l.b16 %v5341
        %v5630 = vunpack.c.l.b16 %v5342
        %v5631 = vunpack.c.l.b16 %v5343
        %v5632 = vunpack.c.l.b16 %v5344
        %v5633 = vunpack.c.l.b16 %v5345
        %v5634 = vunpack.c.l.b16 %v5346
        %v5635 = vunpack.c.l.b16 %v5347
        %v5636 = vunpack.c.l.b16 %v5348
        %v5637 = vunpack.c.l.b16 %v5349
        %v5638 = vunpack.c.l.b16 %v5350
        %v5639 = vunpack.c.l.b16 %v5351
        %v5640 = vunpack.c.l.b16 %v5352
        %v5641 = vunpack.c.l.b16 %v5353
        %v5642 = vunpack.c.l.b16 %v5354
        %v5643 = vunpack.c.l.b16 %v5355
        %v5644 = vunpack.c.l.b16 %v5356
        %v5645 = vunpack.c.l.b16 %v5357
        %v5646 = vunpack.c.l.b16 %v5358
        %v5647 = vunpack.c.l.b16 %v5359
        %v5648 = vunpack.c.l.b16 %v5360
        %v5649 = vunpack.c.l.b16 %v5361
        %v5650 = vunpack.c.l.b16 %v5362
        %v5651 = vunpack.c.l.b16 %v5363
        %v5652 = vunpack.c.l.b16 %v5364
        %v5653 = vunpack.c.l.b16 %v5365
        %v5654 = vunpack.c.l.b16 %v5366
        %v5655 = vunpack.c.l.b16 %v5367
        %v5656 = vunpack.c.l.b16 %v5368
        %v5657 = vunpack.c.l.b16 %v5369
        %v5658 = vunpack.c.l.b16 %v5370
        %v5659 = vunpack.c.l.b16 %v5371
        %v5660 = vunpack.c.l.b16 %v5372
        %v5661 = vunpack.c.l.b16 %v5373
        %v5662 = vunpack.c.l.b16 %v5374
        %v5663 = vunpack.c.l.b16 %v5375
        %v5664 = vunpack.c.l.b16 %v5376
        %v5665 = vunpack.c.l.b16 %v5377
        %v5666 = vunpack.c.l.b16 %v5378
        %v5667 = vunpack.c.l.b16 %v5379
        %v5668 = vunpack.c.l.b16 %v5380
        %v5669 = vunpack.c.l.b16 %v5381
        %v5670 = vunpack.c.l.b16 %v5382
        %v5671 = vunpack.c.l.b16 %v5383
        %v5672 = vunpack.c.l.b16 %v5384
        %v5673 = vunpack.c.l.b16 %v5385
        %v5674 = vunpack.c.l.b16 %v5386
        %v5675 = vunpack.c.l.b16 %v5387
        %v5676 = vunpack.c.l.b16 %v5388
        %v5677 = vunpack.c.l.b16 %v5389
        %v5678 = vunpack.c.l.b16 %v5390
        %v5679 = vunpack.c.l.b16 %v5391
        %v5680 = vunpack.c.l.b16 %v5392
        %v5681 = vunpack.c.l.b16 %v5393
        %v5682 = vunpack.c.l.b16 %v5394
        %v5683 = vunpack.c.l.b16 %v5395
        %v5684 = vunpack.c.l.b16 %v5396
        %v5685 = vunpack.c.l.b16 %v5397
        %v5686 = vunpack.c.l.b16 %v5398
        %v5687 = vunpack.c.l.b16 %v5399
        %v5688 = vunpack.c.l.b16 %v5400
        %v5689 = vunpack.c.l.b16 %v5401
        %v5690 = vunpack.c.l.b16 %v5402
        %v5691 = vunpack.c.l.b16 %v5403
        %v5692 = vunpack.c.l.b16 %v5404
        %v5693 = vunpack.c.l.b16 %v5405
        %v5694 = vunpack.c.l.b16 %v5406
        %v5695 = vunpack.c.l.b16 %v5407
        %v5696 = vunpack.c.l.b16 %v5408
        %v5697 = vunpack.c.l.b16 %v5409
        %v5698 = vunpack.c.l.b16 %v5410
        %v5699 = vunpack.c.l.b16 %v5411
        %v5700 = vunpack.c.l.b16 %v5412
        %v5701 = vunpack.c.l.b16 %v5413
        %v5702 = vunpack.c.l.b16 %v5414
        %v5703 = vunpack.c.l.b16 %v5415
        %v5704 = vunpack.c.l.b16 %v5416
        %v5705 = vunpack.c.l.b16 %v5417
        %v5706 = vunpack.c.l.b16 %v5418
        %v5707 = vunpack.c.l.b16 %v5419
        %v5708 = vunpack.c.l.b16 %v5420
        %v5709 = vunpack.c.l.b16 %v5421
        %v5710 = vunpack.c.l.b16 %v5422
        %v5711 = vunpack.c.l.b16 %v5423
        %v5712 = vunpack.c.l.b16 %v5424
        %v5713 = vpack.c.b16 %v5570, %v5569
        %v5714 = vpack.c.b16 %v5572, %v5571
        %v5715 = vpack.c.b16 %v5574, %v5573
        %v5716 = vpack.c.b16 %v5576, %v5575
        %v5717 = vpack.c.b16 %v5578, %v5577
        %v5718 = vpack.c.b16 %v5580, %v5579
        %v5719 = vpack.c.b16 %v5582, %v5581
        %v5720 = vpack.c.b16 %v5584, %v5583
        %v5721 = vpack.c.b16 %v5586, %v5585
        %v5722 = vpack.c.b16 %v5588, %v5587
        %v5723 = vpack.c.b16 %v5590, %v5589
        %v5724 = vpack.c.b16 %v5592, %v5591
        %v5725 = vpack.c.b16 %v5594, %v5593
        %v5726 = vpack.c.b16 %v5596, %v5595
        %v5727 = vpack.c.b16 %v5598, %v5597
        %v5728 = vpack.c.b16 %v5600, %v5599
        %v5729 = vpack.c.b16 %v5602, %v5601
        %v5730 = vpack.c.b16 %v5604, %v5603
        %v5731 = vpack.c.b16 %v5606, %v5605
        %v5732 = vpack.c.b16 %v5608, %v5607
        %v5733 = vpack.c.b16 %v5610, %v5609
        %v5734 = vpack.c.b16 %v5612, %v5611
        %v5735 = vpack.c.b16 %v5614, %v5613
        %v5736 = vpack.c.b16 %v5616, %v5615
        %v5737 = vpack.c.b16 %v5618, %v5617
        %v5738 = vpack.c.b16 %v5620, %v5619
        %v5739 = vpack.c.b16 %v5622, %v5621
        %v5740 = vpack.c.b16 %v5624, %v5623
        %v5741 = vpack.c.b16 %v5626, %v5625
        %v5742 = vpack.c.b16 %v5628, %v5627
        %v5743 = vpack.c.b16 %v5630, %v5629
        %v5744 = vpack.c.b16 %v5632, %v5631
        %v5745 = vpack.c.b16 %v5634, %v5633
        %v5746 = vpack.c.b16 %v5636, %v5635
        %v5747 = vpack.c.b16 %v5638, %v5637
        %v5748 = vpack.c.b16 %v5640, %v5639
        %v5749 = vpack.c.b16 %v5642, %v5641
        %v5750 = vpack.c.b16 %v5644, %v5643
        %v5751 = vpack.c.b16 %v5646, %v5645
        %v5752 = vpack.c.b16 %v5648, %v5647
        %v5753 = vpack.c.b16 %v5650, %v5649
        %v5754 = vpack.c.b16 %v5652, %v5651
        %v5755 = vpack.c.b16 %v5654, %v5653
        %v5756 = vpack.c.b16 %v5656, %v5655
        %v5757 = vpack.c.b16 %v5658, %v5657
        %v5758 = vpack.c.b16 %v5660, %v5659
        %v5759 = vpack.c.b16 %v5662, %v5661
        %v5760 = vpack.c.b16 %v5664, %v5663
        %v5761 = vpack.c.b16 %v5666, %v5665
        %v5762 = vpack.c.b16 %v5668, %v5667
        %v5763 = vpack.c.b16 %v5670, %v5669
        %v5764 = vpack.c.b16 %v5672, %v5671
        %v5765 = vpack.c.b16 %v5674, %v5673
        %v5766 = vpack.c.b16 %v5676, %v5675
        %v5767 = vpack.c.b16 %v5678, %v5677
        %v5768 = vpack.c.b16 %v5680, %v5679
        %v5769 = vpack.c.b16 %v5682, %v5681
        %v5770 = vpack.c.b16 %v5684, %v5683
        %v5771 = vpack.c.b16 %v5686, %v5685
        %v5772 = vpack.c.b16 %v5688, %v5687
        %v5773 = vpack.c.b16 %v5690, %v5689
        %v5774 = vpack.c.b16 %v5692, %v5691
        %v5775 = vpack.c.b16 %v5694, %v5693
        %v5776 = vpack.c.b16 %v5696, %v5695
        %v5777 = vpack.c.b16 %v5698, %v5697
        %v5778 = vpack.c.b16 %v5700, %v5699
        %v5779 = vpack.c.b16 %v5702, %v5701
        %v5780 = vpack.c.b16 %v5704, %v5703
        %v5781 = vpack.c.b16 %v5706, %v5705
        %v5782 = vpack.c.b16 %v5708, %v5707
        %v5783 = vpack.c.b16 %v5710, %v5709
        %v5784 = vpack.c.b16 %v5712, %v5711
        %5857 = vmatprep.subr.bf16.mxu0 0
        %5858 = vmatpush1.bf16.msra.mxu0 %v5713
        %5859 = vmatprep.subr.bf16.mxu0 0
        %5860 = vmatpush1.bf16.msra.mxu0 %v5714
        %5861 = vmatprep.subr.bf16.mxu0 0
        %5862 = vmatpush1.bf16.msra.mxu0 %v5715
        %5863 = vmatprep.subr.bf16.mxu0 0
        %5864 = vmatpush1.bf16.msra.mxu0 %v5716
        %5865 = vmatprep.subr.bf16.mxu0 0
        %5866 = vmatpush1.bf16.msra.mxu0 %v5717
        %5867 = vmatprep.subr.bf16.mxu0 0
        %5868 = vmatpush1.bf16.msra.mxu0 %v5718
        %5869 = vmatprep.subr.bf16.mxu0 0
        %5870 = vmatpush1.bf16.msra.mxu0 %v5719
        %5871 = vmatprep.subr.bf16.mxu0 0
        %5872 = vmatpush1.bf16.msra.mxu0 %v5720
        %5873 = vmatprep.subr.bf16.mxu0 0
        %5874 = vmatpush1.bf16.msra.mxu0 %v5721
        %5875 = vmatprep.subr.bf16.mxu0 0
        %5876 = vmatpush1.bf16.msra.mxu0 %v5722
        %5877 = vmatprep.subr.bf16.mxu0 0
        %5878 = vmatpush1.bf16.msra.mxu0 %v5723
        %5879 = vmatprep.subr.bf16.mxu0 0
        %5880 = vmatpush1.bf16.msra.mxu0 %v5724
        %5881 = vmatprep.subr.bf16.mxu0 0
        %5882 = vmatpush1.bf16.msra.mxu0 %v5725
        %5883 = vmatprep.subr.bf16.mxu0 0
        %5884 = vmatpush1.bf16.msra.mxu0 %v5726
        %5885 = vmatprep.subr.bf16.mxu0 0
        %5886 = vmatpush1.bf16.msra.mxu0 %v5727
        %5887 = vmatprep.subr.bf16.mxu0 0
        %5888 = vmatpush1.bf16.msra.mxu0 %v5728
        %5889 = vmatprep.mubr.bf16.mxu0 %v4769
        %5890 = vmatmul.mubr.bf16.gmra.mrb[0].mxu0 %v4705
        %v5891 = vpop.f32.mrb[0].mxu0
        %v5892 = vadd.f32 0.0, %v5891
        %v5893 = vpop.f32.mrb[0].mxu0
        %v5894 = vpop.f32.mrb[0].mxu0
        %v5895 = vadd.f32 0.0, %v5894
        %v5896 = vpop.f32.mrb[0].mxu0
        %5897 = vmatprep.mubr.bf16.mxu0 %v4770
        %5898 = vmatmul.mubr.bf16.gmra.mrb[0].mxu0 %v4706
        %v5899 = vpop.f32.mrb[0].mxu0
        %v5900 = vadd.f32 0.0, %v5899
        %v5901 = vpop.f32.mrb[0].mxu0
        %v5902 = vpop.f32.mrb[0].mxu0
        %v5903 = vadd.f32 0.0, %v5902
        %v5904 = vpop.f32.mrb[0].mxu0
        %5905 = vmatprep.mubr.bf16.mxu0 %v4771
        %5906 = vmatmul.mubr.bf16.gmra.mrb[0].mxu0 %v4707
        %v5907 = vpop.f32.mrb[0].mxu0
        %v5908 = vadd.f32 0.0, %v5907
        %v5909 = vpop.f32.mrb[0].mxu0
        %v5910 = vpop.f32.mrb[0].mxu0
        %v5911 = vadd.f32 0.0, %v5910
        %v5912 = vpop.f32.mrb[0].mxu0
        %5913 = vmatprep.mubr.bf16.mxu0 %v4772
        %5914 = vmatmul.mubr.bf16.gmra.mrb[0].mxu0 %v4708
        %v5915 = vpop.f32.mrb[0].mxu0
        %v5916 = vadd.f32 0.0, %v5915
        %v5917 = vpop.f32.mrb[0].mxu0
        %v5918 = vpop.f32.mrb[0].mxu0
        %v5919 = vadd.f32 0.0, %v5918
        %v5920 = vpop.f32.mrb[0].mxu0
        %5921 = vmatprep.mubr.bf16.mxu0 %v4773
        %5922 = vmatmul.mubr.bf16.gmra.mrb[0].mxu0 %v4709
        %v5923 = vpop.f32.mrb[0].mxu0
        %v5924 = vadd.f32 0.0, %v5923
        %v5925 = vpop.f32.mrb[0].mxu0
        %v5926 = vpop.f32.mrb[0].mxu0
        %v5927 = vadd.f32 0.0, %v5926
        %v5928 = vpop.f32.mrb[0].mxu0
        %5929 = vmatprep.mubr.bf16.mxu0 %v4774
        %5930 = vmatmul.mubr.bf16.gmra.mrb[0].mxu0 %v4710
        %v5931 = vpop.f32.mrb[0].mxu0
        %v5932 = vadd.f32 0.0, %v5931
        %v5933 = vpop.f32.mrb[0].mxu0
        %v5934 = vpop.f32.mrb[0].mxu0
        %v5935 = vadd.f32 0.0, %v5934
        %v5936 = vpop.f32.mrb[0].mxu0
        %5937 = vmatprep.mubr.bf16.mxu0 %v4775
        %5938 = vmatmul.mubr.bf16.gmra.mrb[0].mxu0 %v4711
        %v5939 = vpop.f32.mrb[0].mxu0
        %v5940 = vadd.f32 0.0, %v5939
        %v5941 = vpop.f32.mrb[0].mxu0
        %v5942 = vpop.f32.mrb[0].mxu0
        %v5943 = vadd.f32 0.0, %v5942
        %v5944 = vpop.f32.mrb[0].mxu0
        %5945 = vmatprep.mubr.bf16.mxu0 %v4776
        %5946 = vmatmul.mubr.bf16.gmra.mrb[0].mxu0 %v4712
        %v5947 = vpop.f32.mrb[0].mxu0
        %v5948 = vadd.f32 0.0, %v5947
        %v5949 = vpop.f32.mrb[0].mxu0
        %v5950 = vpop.f32.mrb[0].mxu0
        %v5951 = vadd.f32 0.0, %v5950
        %v5952 = vpop.f32.mrb[0].mxu0
        %5953 = vmatprep.mubr.bf16.mxu0 %v4777
        %5954 = vmatmul.mubr.bf16.gmra.mrb[0].mxu0 %v4713
        %v5955 = vpop.f32.mrb[0].mxu0
        %v5956 = vadd.f32 0.0, %v5955
        %v5957 = vpop.f32.mrb[0].mxu0
        %v5958 = vpop.f32.mrb[0].mxu0
        %v5959 = vadd.f32 0.0, %v5958
        %v5960 = vpop.f32.mrb[0].mxu0
        %5961 = vmatprep.mubr.bf16.mxu0 %v4778
        %5962 = vmatmul.mubr.bf16.gmra.mrb[0].mxu0 %v4714
        %v5963 = vpop.f32.mrb[0].mxu0
        %v5964 = vadd.f32 0.0, %v5963
        %v5965 = vpop.f32.mrb[0].mxu0
        %v5966 = vpop.f32.mrb[0].mxu0
        %v5967 = vadd.f32 0.0, %v5966
        %v5968 = vpop.f32.mrb[0].mxu0
        %5969 = vmatprep.mubr.bf16.mxu0 %v4779
        %5970 = vmatmul.mubr.bf16.gmra.mrb[0].mxu0 %v4715
        %v5971 = vpop.f32.mrb[0].mxu0
        %v5972 = vadd.f32 0.0, %v5971
        %v5973 = vpop.f32.mrb[0].mxu0
        %v5974 = vpop.f32.mrb[0].mxu0
        %v5975 = vadd.f32 0.0, %v5974
        %v5976 = vpop.f32.mrb[0].mxu0
        %5977 = vmatprep.mubr.bf16.mxu0 %v4780
        %5978 = vmatmul.mubr.bf16.gmra.mrb[0].mxu0 %v4716
        %v5979 = vpop.f32.mrb[0].mxu0
        %v5980 = vadd.f32 0.0, %v5979
        %v5981 = vpop.f32.mrb[0].mxu0
        %v5982 = vpop.f32.mrb[0].mxu0
        %v5983 = vadd.f32 0.0, %v5982
        %v5984 = vpop.f32.mrb[0].mxu0
        %5985 = vmatprep.mubr.bf16.mxu0 %v4781
        %5986 = vmatmul.mubr.bf16.gmra.mrb[0].mxu0 %v4717
        %v5987 = vpop.f32.mrb[0].mxu0
        %v5988 = vadd.f32 0.0, %v5987
        %v5989 = vpop.f32.mrb[0].mxu0
        %v5990 = vpop.f32.mrb[0].mxu0
        %v5991 = vadd.f32 0.0, %v5990
        %v5992 = vpop.f32.mrb[0].mxu0
        %5993 = vmatprep.mubr.bf16.mxu0 %v4782
        %5994 = vmatmul.mubr.bf16.gmra.mrb[0].mxu0 %v4718
        %v5995 = vpop.f32.mrb[0].mxu0
        %v5996 = vadd.f32 0.0, %v5995
        %v5997 = vpop.f32.mrb[0].mxu0
        %v5998 = vpop.f32.mrb[0].mxu0
        %v5999 = vadd.f32 0.0, %v5998
        %v6000 = vpop.f32.mrb[0].mxu0
        %6001 = vmatprep.mubr.bf16.mxu0 %v4783
        %6002 = vmatmul.mubr.bf16.gmra.mrb[0].mxu0 %v4719
        %v6003 = vpop.f32.mrb[0].mxu0
        %v6004 = vadd.f32 0.0, %v6003
        %v6005 = vpop.f32.mrb[0].mxu0
        %v6006 = vpop.f32.mrb[0].mxu0
        %v6007 = vadd.f32 0.0, %v6006
        %v6008 = vpop.f32.mrb[0].mxu0
        %6009 = vmatprep.mubr.bf16.mxu0 %v4784
        %6010 = vmatmul.mubr.bf16.gmra.mrb[0].mxu0 %v4720
        %v6011 = vpop.f32.mrb[0].mxu0
        %v6012 = vadd.f32 0.0, %v6011
        %v6013 = vpop.f32.mrb[0].mxu0
        %v6014 = vpop.f32.mrb[0].mxu0
        %v6015 = vadd.f32 0.0, %v6014
        %v6016 = vpop.f32.mrb[0].mxu0
        %6017 = vdwg.mxu0
        %6018 = vmatprep.subr.bf16.mxu0 0
        %6019 = vmatpush1.bf16.msra.mxu0 %v5729
        %6020 = vmatprep.subr.bf16.mxu0 0
        %6021 = vmatpush1.bf16.msra.mxu0 %v5730
        %6022 = vmatprep.subr.bf16.mxu0 0
        %6023 = vmatpush1.bf16.msra.mxu0 %v5731
        %6024 = vmatprep.subr.bf16.mxu0 0
        %6025 = vmatpush1.bf16.msra.mxu0 %v5732
        %6026 = vmatprep.subr.bf16.mxu0 0
        %6027 = vmatpush1.bf16.msra.mxu0 %v5733
        %6028 = vmatprep.subr.bf16.mxu0 0
        %6029 = vmatpush1.bf16.msra.mxu0 %v5734
        %6030 = vmatprep.subr.bf16.mxu0 0
        %6031 = vmatpush1.bf16.msra.mxu0 %v5735
        %6032 = vmatprep.subr.bf16.mxu0 0
        %6033 = vmatpush1.bf16.msra.mxu0 %v5736
        %6034 = vmatprep.subr.bf16.mxu0 0
        %6035 = vmatpush1.bf16.msra.mxu0 %v5737
        %6036 = vmatprep.subr.bf16.mxu0 0
        %6037 = vmatpush1.bf16.msra.mxu0 %v5738
        %6038 = vmatprep.subr.bf16.mxu0 0
        %6039 = vmatpush1.bf16.msra.mxu0 %v5739
        %6040 = vmatprep.subr.bf16.mxu0 0
        %6041 = vmatpush1.bf16.msra.mxu0 %v5740
        %6042 = vmatprep.subr.bf16.mxu0 0
        %6043 = vmatpush1.bf16.msra.mxu0 %v5741
        %6044 = vmatprep.subr.bf16.mxu0 0
        %6045 = vmatpush1.bf16.msra.mxu0 %v5742
        %6046 = vmatprep.subr.bf16.mxu0 0
        %6047 = vmatpush1.bf16.msra.mxu0 %v5743
        %6048 = vmatprep.subr.bf16.mxu0 0
        %6049 = vmatpush1.bf16.msra.mxu0 %v5744
        %6050 = vmatprep.mubr.bf16.mxu0 %v4913
        %6051 = vmatmul.mubr.bf16.gmra.mrb[0].mxu0 %v4833
        %v6052 = vpop.f32.mrb[0].mxu0
        %v6053 = vadd.f32 %v5892, %v6052
        %v6054 = vpop.f32.mrb[0].mxu0
        %v6055 = vpop.f32.mrb[0].mxu0
        %v6056 = vadd.f32 %v5895, %v6055
        %v6057 = vpop.f32.mrb[0].mxu0
        %6058 = vmatprep.mubr.bf16.mxu0 %v4914
        %6059 = vmatmul.mubr.bf16.gmra.mrb[0].mxu0 %v4834
        %v6060 = vpop.f32.mrb[0].mxu0
        %v6061 = vadd.f32 %v5900, %v6060
        %v6062 = vpop.f32.mrb[0].mxu0
        %v6063 = vpop.f32.mrb[0].mxu0
        %v6064 = vadd.f32 %v5903, %v6063
        %v6065 = vpop.f32.mrb[0].mxu0
        %6066 = vmatprep.mubr.bf16.mxu0 %v4915
        %6067 = vmatmul.mubr.bf16.gmra.mrb[0].mxu0 %v4835
        %v6068 = vpop.f32.mrb[0].mxu0
        %v6069 = vadd.f32 %v5908, %v6068
        %v6070 = vpop.f32.mrb[0].mxu0
        %v6071 = vpop.f32.mrb[0].mxu0
        %v6072 = vadd.f32 %v5911, %v6071
        %v6073 = vpop.f32.mrb[0].mxu0
        %6074 = vmatprep.mubr.bf16.mxu0 %v4916
        %6075 = vmatmul.mubr.bf16.gmra.mrb[0].mxu0 %v4836
        %v6076 = vpop.f32.mrb[0].mxu0
        %v6077 = vadd.f32 %v5916, %v6076
        %v6078 = vpop.f32.mrb[0].mxu0
        %v6079 = vpop.f32.mrb[0].mxu0
        %v6080 = vadd.f32 %v5919, %v6079
        %v6081 = vpop.f32.mrb[0].mxu0
        %6082 = vmatprep.mubr.bf16.mxu0 %v4917
        %6083 = vmatmul.mubr.bf16.gmra.mrb[0].mxu0 %v4837
        %v6084 = vpop.f32.mrb[0].mxu0
        %v6085 = vadd.f32 %v5924, %v6084
        %v6086 = vpop.f32.mrb[0].mxu0
        %v6087 = vpop.f32.mrb[0].mxu0
        %v6088 = vadd.f32 %v5927, %v6087
        %v6089 = vpop.f32.mrb[0].mxu0
        %6090 = vmatprep.mubr.bf16.mxu0 %v4918
        %6091 = vmatmul.mubr.bf16.gmra.mrb[0].mxu0 %v4838
        %v6092 = vpop.f32.mrb[0].mxu0
        %v6093 = vadd.f32 %v5932, %v6092
        %v6094 = vpop.f32.mrb[0].mxu0
        %v6095 = vpop.f32.mrb[0].mxu0
        %v6096 = vadd.f32 %v5935, %v6095
        %v6097 = vpop.f32.mrb[0].mxu0
        %6098 = vmatprep.mubr.bf16.mxu0 %v4919
        %6099 = vmatmul.mubr.bf16.gmra.mrb[0].mxu0 %v4839
        %v6100 = vpop.f32.mrb[0].mxu0
        %v6101 = vadd.f32 %v5940, %v6100
        %v6102 = vpop.f32.mrb[0].mxu0
        %v6103 = vpop.f32.mrb[0].mxu0
        %v6104 = vadd.f32 %v5943, %v6103
        %v6105 = vpop.f32.mrb[0].mxu0
        %6106 = vmatprep.mubr.bf16.mxu0 %v4920
        %6107 = vmatmul.mubr.bf16.gmra.mrb[0].mxu0 %v4840
        %v6108 = vpop.f32.mrb[0].mxu0
        %v6109 = vadd.f32 %v5948, %v6108
        %v6110 = vpop.f32.mrb[0].mxu0
        %v6111 = vpop.f32.mrb[0].mxu0
        %v6112 = vadd.f32 %v5951, %v6111
        %v6113 = vpop.f32.mrb[0].mxu0
        %6114 = vmatprep.mubr.bf16.mxu0 %v4921
        %6115 = vmatmul.mubr.bf16.gmra.mrb[0].mxu0 %v4841
        %v6116 = vpop.f32.mrb[0].mxu0
        %v6117 = vadd.f32 %v5956, %v6116
        %v6118 = vpop.f32.mrb[0].mxu0
        %v6119 = vpop.f32.mrb[0].mxu0
        %v6120 = vadd.f32 %v5959, %v6119
        %v6121 = vpop.f32.mrb[0].mxu0
        %6122 = vmatprep.mubr.bf16.mxu0 %v4922
        %6123 = vmatmul.mubr.bf16.gmra.mrb[0].mxu0 %v4842
        %v6124 = vpop.f32.mrb[0].mxu0
        %v6125 = vadd.f32 %v5964, %v6124
        %v6126 = vpop.f32.mrb[0].mxu0
        %v6127 = vpop.f32.mrb[0].mxu0
        %v6128 = vadd.f32 %v5967, %v6127
        %v6129 = vpop.f32.mrb[0].mxu0
        %6130 = vmatprep.mubr.bf16.mxu0 %v4923
        %6131 = vmatmul.mubr.bf16.gmra.mrb[0].mxu0 %v4843
        %v6132 = vpop.f32.mrb[0].mxu0
        %v6133 = vadd.f32 %v5972, %v6132
        %v6134 = vpop.f32.mrb[0].mxu0
        %v6135 = vpop.f32.mrb[0].mxu0
        %v6136 = vadd.f32 %v5975, %v6135
        %v6137 = vpop.f32.mrb[0].mxu0
        %6138 = vmatprep.mubr.bf16.mxu0 %v4924
        %6139 = vmatmul.mubr.bf16.gmra.mrb[0].mxu0 %v4844
        %v6140 = vpop.f32.mrb[0].mxu0
        %v6141 = vadd.f32 %v5980, %v6140
        %v6142 = vpop.f32.mrb[0].mxu0
        %v6143 = vpop.f32.mrb[0].mxu0
        %v6144 = vadd.f32 %v5983, %v6143
        %v6145 = vpop.f32.mrb[0].mxu0
        %6146 = vmatprep.mubr.bf16.mxu0 %v4925
        %6147 = vmatmul.mubr.bf16.gmra.mrb[0].mxu0 %v4845
        %v6148 = vpop.f32.mrb[0].mxu0
        %v6149 = vadd.f32 %v5988, %v6148
        %v6150 = vpop.f32.mrb[0].mxu0
        %v6151 = vpop.f32.mrb[0].mxu0
        %v6152 = vadd.f32 %v5991, %v6151
        %v6153 = vpop.f32.mrb[0].mxu0
        %6154 = vmatprep.mubr.bf16.mxu0 %v4926
        %6155 = vmatmul.mubr.bf16.gmra.mrb[0].mxu0 %v4846
        %v6156 = vpop.f32.mrb[0].mxu0
        %v6157 = vadd.f32 %v5996, %v6156
        %v6158 = vpop.f32.mrb[0].mxu0
        %v6159 = vpop.f32.mrb[0].mxu0
        %v6160 = vadd.f32 %v5999, %v6159
        %v6161 = vpop.f32.mrb[0].mxu0
        %6162 = vmatprep.mubr.bf16.mxu0 %v4927
        %6163 = vmatmul.mubr.bf16.gmra.mrb[0].mxu0 %v4847
        %v6164 = vpop.f32.mrb[0].mxu0
        %v6165 = vadd.f32 %v6004, %v6164
        %v6166 = vpop.f32.mrb[0].mxu0
        %v6167 = vpop.f32.mrb[0].mxu0
        %v6168 = vadd.f32 %v6007, %v6167
        %v6169 = vpop.f32.mrb[0].mxu0
        %6170 = vmatprep.mubr.bf16.mxu0 %v4928
        %6171 = vmatmul.mubr.bf16.gmra.mrb[0].mxu0 %v4848
        %v6172 = vpop.f32.mrb[0].mxu0
        %v6173 = vadd.f32 %v6012, %v6172
        %v6174 = vpop.f32.mrb[0].mxu0
        %v6175 = vpop.f32.mrb[0].mxu0
        %v6176 = vadd.f32 %v6015, %v6175
        %v6177 = vpop.f32.mrb[0].mxu0
        %6178 = vdwg.mxu0
        %6179 = vmatprep.subr.bf16.mxu0 0
        %6180 = vmatpush1.bf16.msra.mxu0 %v5745
        %6181 = vmatprep.subr.bf16.mxu0 0
        %6182 = vmatpush1.bf16.msra.mxu0 %v5746
        %6183 = vmatprep.subr.bf16.mxu0 0
        %6184 = vmatpush1.bf16.msra.mxu0 %v5747
        %6185 = vmatprep.subr.bf16.mxu0 0
        %6186 = vmatpush1.bf16.msra.mxu0 %v5748
        %6187 = vmatprep.subr.bf16.mxu0 0
        %6188 = vmatpush1.bf16.msra.mxu0 %v5749
        %6189 = vmatprep.subr.bf16.mxu0 0
        %6190 = vmatpush1.bf16.msra.mxu0 %v5750
        %6191 = vmatprep.subr.bf16.mxu0 0
        %6192 = vmatpush1.bf16.msra.mxu0 %v5751
        %6193 = vmatprep.subr.bf16.mxu0 0
        %6194 = vmatpush1.bf16.msra.mxu0 %v5752
        %6195 = vmatprep.subr.bf16.mxu0 0
        %6196 = vmatpush1.bf16.msra.mxu0 %v5753
        %6197 = vmatprep.subr.bf16.mxu0 0
        %6198 = vmatpush1.bf16.msra.mxu0 %v5754
        %6199 = vmatprep.subr.bf16.mxu0 0
        %6200 = vmatpush1.bf16.msra.mxu0 %v5755
        %6201 = vmatprep.subr.bf16.mxu0 0
        %6202 = vmatpush1.bf16.msra.mxu0 %v5756
        %6203 = vmatprep.subr.bf16.mxu0 0
        %6204 = vmatpush1.bf16.msra.mxu0 %v5757
        %6205 = vmatprep.subr.bf16.mxu0 0
        %6206 = vmatpush1.bf16.msra.mxu0 %v5758
        %6207 = vmatprep.subr.bf16.mxu0 0
        %6208 = vmatpush1.bf16.msra.mxu0 %v5759
        %6209 = vmatprep.subr.bf16.mxu0 0
        %6210 = vmatpush1.bf16.msra.mxu0 %v5760
        %6211 = vmatprep.mubr.bf16.mxu0 %v5041
        %6212 = vmatmul.mubr.bf16.gmra.mrb[0].mxu0 %v4977
        %v6213 = vpop.f32.mrb[0].mxu0
        %v6214 = vadd.f32 %v6053, %v6213
        %v6215 = vpop.f32.mrb[0].mxu0
        %v6216 = vpop.f32.mrb[0].mxu0
        %v6217 = vadd.f32 %v6056, %v6216
        %v6218 = vpop.f32.mrb[0].mxu0
        %6219 = vmatprep.mubr.bf16.mxu0 %v5042
        %6220 = vmatmul.mubr.bf16.gmra.mrb[0].mxu0 %v4978
        %v6221 = vpop.f32.mrb[0].mxu0
        %v6222 = vadd.f32 %v6061, %v6221
        %v6223 = vpop.f32.mrb[0].mxu0
        %v6224 = vpop.f32.mrb[0].mxu0
        %v6225 = vadd.f32 %v6064, %v6224
        %v6226 = vpop.f32.mrb[0].mxu0
        %6227 = vmatprep.mubr.bf16.mxu0 %v5043
        %6228 = vmatmul.mubr.bf16.gmra.mrb[0].mxu0 %v4979
        %v6229 = vpop.f32.mrb[0].mxu0
        %v6230 = vadd.f32 %v6069, %v6229
        %v6231 = vpop.f32.mrb[0].mxu0
        %v6232 = vpop.f32.mrb[0].mxu0
        %v6233 = vadd.f32 %v6072, %v6232
        %v6234 = vpop.f32.mrb[0].mxu0
        %6235 = vmatprep.mubr.bf16.mxu0 %v5044
        %6236 = vmatmul.mubr.bf16.gmra.mrb[0].mxu0 %v4980
        %v6237 = vpop.f32.mrb[0].mxu0
        %v6238 = vadd.f32 %v6077, %v6237
        %v6239 = vpop.f32.mrb[0].mxu0
        %v6240 = vpop.f32.mrb[0].mxu0
        %v6241 = vadd.f32 %v6080, %v6240
        %v6242 = vpop.f32.mrb[0].mxu0
        %6243 = vmatprep.mubr.bf16.mxu0 %v5045
        %6244 = vmatmul.mubr.bf16.gmra.mrb[0].mxu0 %v4981
        %v6245 = vpop.f32.mrb[0].mxu0
        %v6246 = vadd.f32 %v6085, %v6245
        %v6247 = vpop.f32.mrb[0].mxu0
        %v6248 = vpop.f32.mrb[0].mxu0
        %v6249 = vadd.f32 %v6088, %v6248
        %v6250 = vpop.f32.mrb[0].mxu0
        %6251 = vmatprep.mubr.bf16.mxu0 %v5046
        %6252 = vmatmul.mubr.bf16.gmra.mrb[0].mxu0 %v4982
        %v6253 = vpop.f32.mrb[0].mxu0
        %v6254 = vadd.f32 %v6093, %v6253
        %v6255 = vpop.f32.mrb[0].mxu0
        %v6256 = vpop.f32.mrb[0].mxu0
        %v6257 = vadd.f32 %v6096, %v6256
        %v6258 = vpop.f32.mrb[0].mxu0
        %6259 = vmatprep.mubr.bf16.mxu0 %v5047
        %6260 = vmatmul.mubr.bf16.gmra.mrb[0].mxu0 %v4983
        %v6261 = vpop.f32.mrb[0].mxu0
        %v6262 = vadd.f32 %v6101, %v6261
        %v6263 = vpop.f32.mrb[0].mxu0
        %v6264 = vpop.f32.mrb[0].mxu0
        %v6265 = vadd.f32 %v6104, %v6264
        %v6266 = vpop.f32.mrb[0].mxu0
        %6267 = vmatprep.mubr.bf16.mxu0 %v5048
        %6268 = vmatmul.mubr.bf16.gmra.mrb[0].mxu0 %v4984
        %v6269 = vpop.f32.mrb[0].mxu0
        %v6270 = vadd.f32 %v6109, %v6269
        %v6271 = vpop.f32.mrb[0].mxu0
        %v6272 = vpop.f32.mrb[0].mxu0
        %v6273 = vadd.f32 %v6112, %v6272
        %v6274 = vpop.f32.mrb[0].mxu0
        %6275 = vmatprep.mubr.bf16.mxu0 %v5049
        %6276 = vmatmul.mubr.bf16.gmra.mrb[0].mxu0 %v4985
        %v6277 = vpop.f32.mrb[0].mxu0
        %v6278 = vadd.f32 %v6117, %v6277
        %v6279 = vpop.f32.mrb[0].mxu0
        %v6280 = vpop.f32.mrb[0].mxu0
        %v6281 = vadd.f32 %v6120, %v6280
        %v6282 = vpop.f32.mrb[0].mxu0
        %6283 = vmatprep.mubr.bf16.mxu0 %v5050
        %6284 = vmatmul.mubr.bf16.gmra.mrb[0].mxu0 %v4986
        %v6285 = vpop.f32.mrb[0].mxu0
        %v6286 = vadd.f32 %v6125, %v6285
        %v6287 = vpop.f32.mrb[0].mxu0
        %v6288 = vpop.f32.mrb[0].mxu0
        %v6289 = vadd.f32 %v6128, %v6288
        %v6290 = vpop.f32.mrb[0].mxu0
        %6291 = vmatprep.mubr.bf16.mxu0 %v5051
        %6292 = vmatmul.mubr.bf16.gmra.mrb[0].mxu0 %v4987
        %v6293 = vpop.f32.mrb[0].mxu0
        %v6294 = vadd.f32 %v6133, %v6293
        %v6295 = vpop.f32.mrb[0].mxu0
        %v6296 = vpop.f32.mrb[0].mxu0
        %v6297 = vadd.f32 %v6136, %v6296
        %v6298 = vpop.f32.mrb[0].mxu0
        %6299 = vmatprep.mubr.bf16.mxu0 %v5052
        %6300 = vmatmul.mubr.bf16.gmra.mrb[0].mxu0 %v4988
        %v6301 = vpop.f32.mrb[0].mxu0
        %v6302 = vadd.f32 %v6141, %v6301
        %v6303 = vpop.f32.mrb[0].mxu0
        %v6304 = vpop.f32.mrb[0].mxu0
        %v6305 = vadd.f32 %v6144, %v6304
        %v6306 = vpop.f32.mrb[0].mxu0
        %6307 = vmatprep.mubr.bf16.mxu0 %v5053
        %6308 = vmatmul.mubr.bf16.gmra.mrb[0].mxu0 %v4989
        %v6309 = vpop.f32.mrb[0].mxu0
        %v6310 = vadd.f32 %v6149, %v6309
        %v6311 = vpop.f32.mrb[0].mxu0
        %v6312 = vpop.f32.mrb[0].mxu0
        %v6313 = vadd.f32 %v6152, %v6312
        %v6314 = vpop.f32.mrb[0].mxu0
        %6315 = vmatprep.mubr.bf16.mxu0 %v5054
        %6316 = vmatmul.mubr.bf16.gmra.mrb[0].mxu0 %v4990
        %v6317 = vpop.f32.mrb[0].mxu0
        %v6318 = vadd.f32 %v6157, %v6317
        %v6319 = vpop.f32.mrb[0].mxu0
        %v6320 = vpop.f32.mrb[0].mxu0
        %v6321 = vadd.f32 %v6160, %v6320
        %v6322 = vpop.f32.mrb[0].mxu0
        %6323 = vmatprep.mubr.bf16.mxu0 %v5055
        %6324 = vmatmul.mubr.bf16.gmra.mrb[0].mxu0 %v4991
        %v6325 = vpop.f32.mrb[0].mxu0
        %v6326 = vadd.f32 %v6165, %v6325
        %v6327 = vpop.f32.mrb[0].mxu0
        %v6328 = vpop.f32.mrb[0].mxu0
        %v6329 = vadd.f32 %v6168, %v6328
        %v6330 = vpop.f32.mrb[0].mxu0
        %6331 = vmatprep.mubr.bf16.mxu0 %v5056
        %6332 = vmatmul.mubr.bf16.gmra.mrb[0].mxu0 %v4992
        %v6333 = vpop.f32.mrb[0].mxu0
        %v6334 = vadd.f32 %v6173, %v6333
        %v6335 = vpop.f32.mrb[0].mxu0
        %v6336 = vpop.f32.mrb[0].mxu0
        %v6337 = vadd.f32 %v6176, %v6336
        %v6338 = vpop.f32.mrb[0].mxu0
        %6339 = vdwg.mxu0
        %6340 = vmatprep.subr.bf16.mxu0 0
        %6341 = vmatpush1.bf16.msra.mxu0 %v5761
        %6342 = vmatprep.subr.bf16.mxu0 0
        %6343 = vmatpush1.bf16.msra.mxu0 %v5762
        %6344 = vmatprep.subr.bf16.mxu0 0
        %6345 = vmatpush1.bf16.msra.mxu0 %v5763
        %6346 = vmatprep.subr.bf16.mxu0 0
        %6347 = vmatpush1.bf16.msra.mxu0 %v5764
        %6348 = vmatprep.subr.bf16.mxu0 0
        %6349 = vmatpush1.bf16.msra.mxu0 %v5765
        %6350 = vmatprep.subr.bf16.mxu0 0
        %6351 = vmatpush1.bf16.msra.mxu0 %v5766
        %6352 = vmatprep.subr.bf16.mxu0 0
        %6353 = vmatpush1.bf16.msra.mxu0 %v5767
        %6354 = vmatprep.subr.bf16.mxu0 0
        %6355 = vmatpush1.bf16.msra.mxu0 %v5768
        %6356 = vmatprep.subr.bf16.mxu0 0
        %6357 = vmatpush1.bf16.msra.mxu0 %v5769
        %6358 = vmatprep.subr.bf16.mxu0 0
        %6359 = vmatpush1.bf16.msra.mxu0 %v5770
        %6360 = vmatprep.subr.bf16.mxu0 0
        %6361 = vmatpush1.bf16.msra.mxu0 %v5771
        %6362 = vmatprep.subr.bf16.mxu0 0
        %6363 = vmatpush1.bf16.msra.mxu0 %v5772
        %6364 = vmatprep.subr.bf16.mxu0 0
        %6365 = vmatpush1.bf16.msra.mxu0 %v5773
        %6366 = vmatprep.subr.bf16.mxu0 0
        %6367 = vmatpush1.bf16.msra.mxu0 %v5774
        %6368 = vmatprep.subr.bf16.mxu0 0
        %6369 = vmatpush1.bf16.msra.mxu0 %v5775
        %6370 = vmatprep.subr.bf16.mxu0 0
        %6371 = vmatpush1.bf16.msra.mxu0 %v5776
        %6372 = vmatprep.mubr.bf16.mxu0 %v5185
        %6373 = vmatmul.mubr.bf16.gmra.mrb[0].mxu0 %v5121
        %v6374 = vpop.f32.mrb[0].mxu0
        %v6375 = vadd.f32 %v6214, %v6374
        %v6376 = vpop.f32.mrb[0].mxu0
        %v6377 = vpop.f32.mrb[0].mxu0
        %v6378 = vadd.f32 %v6217, %v6377
        %v6379 = vpop.f32.mrb[0].mxu0
        %6380 = vmatprep.mubr.bf16.mxu0 %v5186
        %6381 = vmatmul.mubr.bf16.gmra.mrb[0].mxu0 %v5122
        %v6382 = vpop.f32.mrb[0].mxu0
        %v6383 = vadd.f32 %v6222, %v6382
        %v6384 = vpop.f32.mrb[0].mxu0
        %v6385 = vpop.f32.mrb[0].mxu0
        %v6386 = vadd.f32 %v6225, %v6385
        %v6387 = vpop.f32.mrb[0].mxu0
        %6388 = vmatprep.mubr.bf16.mxu0 %v5187
        %6389 = vmatmul.mubr.bf16.gmra.mrb[0].mxu0 %v5123
        %v6390 = vpop.f32.mrb[0].mxu0
        %v6391 = vadd.f32 %v6230, %v6390
        %v6392 = vpop.f32.mrb[0].mxu0
        %v6393 = vpop.f32.mrb[0].mxu0
        %v6394 = vadd.f32 %v6233, %v6393
        %v6395 = vpop.f32.mrb[0].mxu0
        %6396 = vmatprep.mubr.bf16.mxu0 %v5188
        %6397 = vmatmul.mubr.bf16.gmra.mrb[0].mxu0 %v5124
        %v6398 = vpop.f32.mrb[0].mxu0
        %v6399 = vadd.f32 %v6238, %v6398
        %v6400 = vpop.f32.mrb[0].mxu0
        %v6401 = vpop.f32.mrb[0].mxu0
        %v6402 = vadd.f32 %v6241, %v6401
        %v6403 = vpop.f32.mrb[0].mxu0
        %6404 = vmatprep.mubr.bf16.mxu0 %v5189
        %6405 = vmatmul.mubr.bf16.gmra.mrb[0].mxu0 %v5125
        %v6406 = vpop.f32.mrb[0].mxu0
        %v6407 = vadd.f32 %v6246, %v6406
        %v6408 = vpop.f32.mrb[0].mxu0
        %v6409 = vpop.f32.mrb[0].mxu0
        %v6410 = vadd.f32 %v6249, %v6409
        %v6411 = vpop.f32.mrb[0].mxu0
        %6412 = vmatprep.mubr.bf16.mxu0 %v5190
        %6413 = vmatmul.mubr.bf16.gmra.mrb[0].mxu0 %v5126
        %v6414 = vpop.f32.mrb[0].mxu0
        %v6415 = vadd.f32 %v6254, %v6414
        %v6416 = vpop.f32.mrb[0].mxu0
        %v6417 = vpop.f32.mrb[0].mxu0
        %v6418 = vadd.f32 %v6257, %v6417
        %v6419 = vpop.f32.mrb[0].mxu0
        %6420 = vmatprep.mubr.bf16.mxu0 %v5191
        %6421 = vmatmul.mubr.bf16.gmra.mrb[0].mxu0 %v5127
        %v6422 = vpop.f32.mrb[0].mxu0
        %v6423 = vadd.f32 %v6262, %v6422
        %v6424 = vpop.f32.mrb[0].mxu0
        %v6425 = vpop.f32.mrb[0].mxu0
        %v6426 = vadd.f32 %v6265, %v6425
        %v6427 = vpop.f32.mrb[0].mxu0
        %6428 = vmatprep.mubr.bf16.mxu0 %v5192
        %6429 = vmatmul.mubr.bf16.gmra.mrb[0].mxu0 %v5128
        %v6430 = vpop.f32.mrb[0].mxu0
        %v6431 = vadd.f32 %v6270, %v6430
        %v6432 = vpop.f32.mrb[0].mxu0
        %v6433 = vpop.f32.mrb[0].mxu0
        %v6434 = vadd.f32 %v6273, %v6433
        %v6435 = vpop.f32.mrb[0].mxu0
        %6436 = vmatprep.mubr.bf16.mxu0 %v5193
        %6437 = vmatmul.mubr.bf16.gmra.mrb[0].mxu0 %v5129
        %v6438 = vpop.f32.mrb[0].mxu0
        %v6439 = vadd.f32 %v6278, %v6438
        %v6440 = vpop.f32.mrb[0].mxu0
        %v6441 = vpop.f32.mrb[0].mxu0
        %v6442 = vadd.f32 %v6281, %v6441
        %v6443 = vpop.f32.mrb[0].mxu0
        %6444 = vmatprep.mubr.bf16.mxu0 %v5194
        %6445 = vmatmul.mubr.bf16.gmra.mrb[0].mxu0 %v5130
        %v6446 = vpop.f32.mrb[0].mxu0
        %v6447 = vadd.f32 %v6286, %v6446
        %v6448 = vpop.f32.mrb[0].mxu0
        %v6449 = vpop.f32.mrb[0].mxu0
        %v6450 = vadd.f32 %v6289, %v6449
        %v6451 = vpop.f32.mrb[0].mxu0
        %6452 = vmatprep.mubr.bf16.mxu0 %v5195
        %6453 = vmatmul.mubr.bf16.gmra.mrb[0].mxu0 %v5131
        %v6454 = vpop.f32.mrb[0].mxu0
        %v6455 = vadd.f32 %v6294, %v6454
        %v6456 = vpop.f32.mrb[0].mxu0
        %v6457 = vpop.f32.mrb[0].mxu0
        %v6458 = vadd.f32 %v6297, %v6457
        %v6459 = vpop.f32.mrb[0].mxu0
        %6460 = vmatprep.mubr.bf16.mxu0 %v5196
        %6461 = vmatmul.mubr.bf16.gmra.mrb[0].mxu0 %v5132
        %v6462 = vpop.f32.mrb[0].mxu0
        %v6463 = vadd.f32 %v6302, %v6462
        %v6464 = vpop.f32.mrb[0].mxu0
        %v6465 = vpop.f32.mrb[0].mxu0
        %v6466 = vadd.f32 %v6305, %v6465
        %v6467 = vpop.f32.mrb[0].mxu0
        %6468 = vmatprep.mubr.bf16.mxu0 %v5197
        %6469 = vmatmul.mubr.bf16.gmra.mrb[0].mxu0 %v5133
        %v6470 = vpop.f32.mrb[0].mxu0
        %v6471 = vadd.f32 %v6310, %v6470
        %v6472 = vpop.f32.mrb[0].mxu0
        %v6473 = vpop.f32.mrb[0].mxu0
        %v6474 = vadd.f32 %v6313, %v6473
        %v6475 = vpop.f32.mrb[0].mxu0
        %6476 = vmatprep.mubr.bf16.mxu0 %v5198
        %6477 = vmatmul.mubr.bf16.gmra.mrb[0].mxu0 %v5134
        %v6478 = vpop.f32.mrb[0].mxu0
        %v6479 = vadd.f32 %v6318, %v6478
        %v6480 = vpop.f32.mrb[0].mxu0
        %v6481 = vpop.f32.mrb[0].mxu0
        %v6482 = vadd.f32 %v6321, %v6481
        %v6483 = vpop.f32.mrb[0].mxu0
        %6484 = vmatprep.mubr.bf16.mxu0 %v5199
        %6485 = vmatmul.mubr.bf16.gmra.mrb[0].mxu0 %v5135
        %v6486 = vpop.f32.mrb[0].mxu0
        %v6487 = vadd.f32 %v6326, %v6486
        %v6488 = vpop.f32.mrb[0].mxu0
        %v6489 = vpop.f32.mrb[0].mxu0
        %v6490 = vadd.f32 %v6329, %v6489
        %v6491 = vpop.f32.mrb[0].mxu0
        %6492 = vmatprep.mubr.bf16.mxu0 %v5200
        %6493 = vmatmul.mubr.bf16.gmra.mrb[0].mxu0 %v5136
        %v6494 = vpop.f32.mrb[0].mxu0
        %v6495 = vadd.f32 %v6334, %v6494
        %v6496 = vpop.f32.mrb[0].mxu0
        %v6497 = vpop.f32.mrb[0].mxu0
        %v6498 = vadd.f32 %v6337, %v6497
        %v6499 = vpop.f32.mrb[0].mxu0
        %6500 = vdwg.mxu0
        %6501 = vmatprep.subr.bf16.mxu0 0
        %6502 = vmatpush1.bf16.msra.mxu0 %v5777
        %6503 = vmatprep.subr.bf16.mxu0 0
        %6504 = vmatpush1.bf16.msra.mxu0 %v5778
        %6505 = vmatprep.subr.bf16.mxu0 0
        %6506 = vmatpush1.bf16.msra.mxu0 %v5779
        %6507 = vmatprep.subr.bf16.mxu0 0
        %6508 = vmatpush1.bf16.msra.mxu0 %v5780
        %6509 = vmatprep.subr.bf16.mxu0 0
        %6510 = vmatpush1.bf16.msra.mxu0 %v5781
        %6511 = vmatprep.subr.bf16.mxu0 0
        %6512 = vmatpush1.bf16.msra.mxu0 %v5782
        %6513 = vmatprep.subr.bf16.mxu0 0
        %6514 = vmatpush1.bf16.msra.mxu0 %v5783
        %6515 = vmatprep.subr.bf16.mxu0 0
        %6516 = vmatpush1.bf16.msra.mxu0 %v5784
        %6517 = vmatprep.subr.bf16.mxu0 0
        %6518 = vmatpush1.bf16.msra.mxu0 0
        %6519 = vmatprep.subr.bf16.mxu0 0
        %6520 = vmatpush1.bf16.msra.mxu0 0
        %6521 = vmatprep.subr.bf16.mxu0 0
        %6522 = vmatpush1.bf16.msra.mxu0 0
        %6523 = vmatprep.subr.bf16.mxu0 0
        %6524 = vmatpush1.bf16.msra.mxu0 0
        %6525 = vmatprep.subr.bf16.mxu0 0
        %6526 = vmatpush1.bf16.msra.mxu0 0
        %6527 = vmatprep.subr.bf16.mxu0 0
        %6528 = vmatpush1.bf16.msra.mxu0 0
        %6529 = vmatprep.subr.bf16.mxu0 0
        %6530 = vmatpush1.bf16.msra.mxu0 0
        %6531 = vmatprep.subr.bf16.mxu0 0
        %6532 = vmatpush1.bf16.msra.mxu0 0
        %6533 = vmatprep.mubr.bf16.mxu0 0
        %6534 = vmatmul.mubr.bf16.gmra.mrb[0].mxu0 %v5249
        %v6535 = vpop.f32.mrb[0].mxu0
        %v6536 = vadd.f32 %v6375, %v6535
        %v6537 = vpop.f32.mrb[0].mxu0
        %v6538 = vpop.f32.mrb[0].mxu0
        %v6539 = vadd.f32 %v6378, %v6538
        %v6540 = vpop.f32.mrb[0].mxu0
        %6541 = vmatprep.mubr.bf16.mxu0 0
        %6542 = vmatmul.mubr.bf16.gmra.mrb[0].mxu0 %v5250
        %v6543 = vpop.f32.mrb[0].mxu0
        %v6544 = vadd.f32 %v6383, %v6543
        %v6545 = vpop.f32.mrb[0].mxu0
        %v6546 = vpop.f32.mrb[0].mxu0
        %v6547 = vadd.f32 %v6386, %v6546
        %v6548 = vpop.f32.mrb[0].mxu0
        %6549 = vmatprep.mubr.bf16.mxu0 0
        %6550 = vmatmul.mubr.bf16.gmra.mrb[0].mxu0 %v5251
        %v6551 = vpop.f32.mrb[0].mxu0
        %v6552 = vadd.f32 %v6391, %v6551
        %v6553 = vpop.f32.mrb[0].mxu0
        %v6554 = vpop.f32.mrb[0].mxu0
        %v6555 = vadd.f32 %v6394, %v6554
        %v6556 = vpop.f32.mrb[0].mxu0
        %6557 = vmatprep.mubr.bf16.mxu0 0
        %6558 = vmatmul.mubr.bf16.gmra.mrb[0].mxu0 %v5252
        %v6559 = vpop.f32.mrb[0].mxu0
        %v6560 = vadd.f32 %v6399, %v6559
        %v6561 = vpop.f32.mrb[0].mxu0
        %v6562 = vpop.f32.mrb[0].mxu0
        %v6563 = vadd.f32 %v6402, %v6562
        %v6564 = vpop.f32.mrb[0].mxu0
        %6565 = vmatprep.mubr.bf16.mxu0 0
        %6566 = vmatmul.mubr.bf16.gmra.mrb[0].mxu0 %v5253
        %v6567 = vpop.f32.mrb[0].mxu0
        %v6568 = vadd.f32 %v6407, %v6567
        %v6569 = vpop.f32.mrb[0].mxu0
        %v6570 = vpop.f32.mrb[0].mxu0
        %v6571 = vadd.f32 %v6410, %v6570
        %v6572 = vpop.f32.mrb[0].mxu0
        %6573 = vmatprep.mubr.bf16.mxu0 0
        %6574 = vmatmul.mubr.bf16.gmra.mrb[0].mxu0 %v5254
        %v6575 = vpop.f32.mrb[0].mxu0
        %v6576 = vadd.f32 %v6415, %v6575
        %v6577 = vpop.f32.mrb[0].mxu0
        %v6578 = vpop.f32.mrb[0].mxu0
        %v6579 = vadd.f32 %v6418, %v6578
        %v6580 = vpop.f32.mrb[0].mxu0
        %6581 = vmatprep.mubr.bf16.mxu0 0
        %6582 = vmatmul.mubr.bf16.gmra.mrb[0].mxu0 %v5255
        %v6583 = vpop.f32.mrb[0].mxu0
        %v6584 = vadd.f32 %v6423, %v6583
        %v6585 = vpop.f32.mrb[0].mxu0
        %v6586 = vpop.f32.mrb[0].mxu0
        %v6587 = vadd.f32 %v6426, %v6586
        %v6588 = vpop.f32.mrb[0].mxu0
        %6589 = vmatprep.mubr.bf16.mxu0 0
        %6590 = vmatmul.mubr.bf16.gmra.mrb[0].mxu0 %v5256
        %v6591 = vpop.f32.mrb[0].mxu0
        %v6592 = vadd.f32 %v6431, %v6591
        %v6593 = vpop.f32.mrb[0].mxu0
        %v6594 = vpop.f32.mrb[0].mxu0
        %v6595 = vadd.f32 %v6434, %v6594
        %v6596 = vpop.f32.mrb[0].mxu0
        %6597 = vmatprep.mubr.bf16.mxu0 0
        %6598 = vmatmul.mubr.bf16.gmra.mrb[0].mxu0 %v5257
        %v6599 = vpop.f32.mrb[0].mxu0
        %v6600 = vadd.f32 %v6439, %v6599
        %v6601 = vpop.f32.mrb[0].mxu0
        %v6602 = vpop.f32.mrb[0].mxu0
        %v6603 = vadd.f32 %v6442, %v6602
        %v6604 = vpop.f32.mrb[0].mxu0
        %6605 = vmatprep.mubr.bf16.mxu0 0
        %6606 = vmatmul.mubr.bf16.gmra.mrb[0].mxu0 %v5258
        %v6607 = vpop.f32.mrb[0].mxu0
        %v6608 = vadd.f32 %v6447, %v6607
        %v6609 = vpop.f32.mrb[0].mxu0
        %v6610 = vpop.f32.mrb[0].mxu0
        %v6611 = vadd.f32 %v6450, %v6610
        %v6612 = vpop.f32.mrb[0].mxu0
        %6613 = vmatprep.mubr.bf16.mxu0 0
        %6614 = vmatmul.mubr.bf16.gmra.mrb[0].mxu0 %v5259
        %v6615 = vpop.f32.mrb[0].mxu0
        %v6616 = vadd.f32 %v6455, %v6615
        %v6617 = vpop.f32.mrb[0].mxu0
        %v6618 = vpop.f32.mrb[0].mxu0
        %v6619 = vadd.f32 %v6458, %v6618
        %v6620 = vpop.f32.mrb[0].mxu0
        %6621 = vmatprep.mubr.bf16.mxu0 0
        %6622 = vmatmul.mubr.bf16.gmra.mrb[0].mxu0 %v5260
        %v6623 = vpop.f32.mrb[0].mxu0
        %v6624 = vadd.f32 %v6463, %v6623
        %v6625 = vpop.f32.mrb[0].mxu0
        %v6626 = vpop.f32.mrb[0].mxu0
        %v6627 = vadd.f32 %v6466, %v6626
        %v6628 = vpop.f32.mrb[0].mxu0
        %6629 = vmatprep.mubr.bf16.mxu0 0
        %6630 = vmatmul.mubr.bf16.gmra.mrb[0].mxu0 %v5261
        %v6631 = vpop.f32.mrb[0].mxu0
        %v6632 = vadd.f32 %v6471, %v6631
        %v6633 = vpop.f32.mrb[0].mxu0
        %v6634 = vpop.f32.mrb[0].mxu0
        %v6635 = vadd.f32 %v6474, %v6634
        %v6636 = vpop.f32.mrb[0].mxu0
        %6637 = vmatprep.mubr.bf16.mxu0 0
        %6638 = vmatmul.mubr.bf16.gmra.mrb[0].mxu0 %v5262
        %v6639 = vpop.f32.mrb[0].mxu0
        %v6640 = vadd.f32 %v6479, %v6639
        %v6641 = vpop.f32.mrb[0].mxu0
        %v6642 = vpop.f32.mrb[0].mxu0
        %v6643 = vadd.f32 %v6482, %v6642
        %v6644 = vpop.f32.mrb[0].mxu0
        %6645 = vmatprep.mubr.bf16.mxu0 0
        %6646 = vmatmul.mubr.bf16.gmra.mrb[0].mxu0 %v5263
        %v6647 = vpop.f32.mrb[0].mxu0
        %v6648 = vadd.f32 %v6487, %v6647
        %v6649 = vpop.f32.mrb[0].mxu0
        %v6650 = vpop.f32.mrb[0].mxu0
        %v6651 = vadd.f32 %v6490, %v6650
        %v6652 = vpop.f32.mrb[0].mxu0
        %6653 = vmatprep.mubr.bf16.mxu0 0
        %6654 = vmatmul.mubr.bf16.gmra.mrb[0].mxu0 %v5264
        %v6655 = vpop.f32.mrb[0].mxu0
        %v6656 = vadd.f32 %v6495, %v6655
        %v6657 = vpop.f32.mrb[0].mxu0
        %v6658 = vpop.f32.mrb[0].mxu0
        %v6659 = vadd.f32 %v6498, %v6658
        %v6660 = vpop.f32.mrb[0].mxu0
        %6661 = vdwg.mxu0
        %v6662 = vld [vmem:[%s5] sm:$0x1]
        %v6664 = vlaneseq
        %v6665 = vshrl.u32 %v6664, 7
        %v6666 = vsub.s32 0, %v6665
        %v6667 = vrot.slane %v6662, %v6666
        %v6669 = vmul.f32 %v6536, %v6667
        %v6670 = vmul.f32 %v6539, %v6667
        %v6671 = vmul.f32 %v6544, %v6667
        %v6672 = vmul.f32 %v6547, %v6667
        %v6673 = vmul.f32 %v6552, %v6667
        %v6674 = vmul.f32 %v6555, %v6667
        %v6675 = vmul.f32 %v6560, %v6667
        %v6676 = vmul.f32 %v6563, %v6667
        %v6677 = vmul.f32 %v6568, %v6667
        %v6678 = vmul.f32 %v6571, %v6667
        %v6679 = vmul.f32 %v6576, %v6667
        %v6680 = vmul.f32 %v6579, %v6667
        %v6681 = vmul.f32 %v6584, %v6667
        %v6682 = vmul.f32 %v6587, %v6667
        %v6683 = vmul.f32 %v6592, %v6667
        %v6684 = vmul.f32 %v6595, %v6667
        %v6685 = vmul.f32 %v6600, %v6667
        %v6686 = vmul.f32 %v6603, %v6667
        %v6687 = vmul.f32 %v6608, %v6667
        %v6688 = vmul.f32 %v6611, %v6667
        %v6689 = vmul.f32 %v6616, %v6667
        %v6690 = vmul.f32 %v6619, %v6667
        %v6691 = vmul.f32 %v6624, %v6667
        %v6692 = vmul.f32 %v6627, %v6667
        %v6693 = vmul.f32 %v6632, %v6667
        %v6694 = vmul.f32 %v6635, %v6667
        %v6695 = vmul.f32 %v6640, %v6667
        %v6696 = vmul.f32 %v6643, %v6667
        %v6697 = vmul.f32 %v6648, %v6667
        %v6698 = vmul.f32 %v6651, %v6667
        %v6699 = vmul.f32 %v6656, %v6667
        %v6700 = vmul.f32 %v6659, %v6667
        %v6701 = vld [vmem:[%s6] sm:$0x1]
        %v6703 = vlaneseq
        %v6704 = vshrl.u32 %v6703, 7
        %v6705 = vsub.s32 0, %v6704
        %v6706 = vrot.slane %v6701, %v6705
        %v6708 = vadd.f32 %v6669, %v6706
        %v6709 = vadd.f32 %v6670, %v6706
        %v6710 = vadd.f32 %v6671, %v6706
        %v6711 = vadd.f32 %v6672, %v6706
        %v6712 = vadd.f32 %v6673, %v6706
        %v6713 = vadd.f32 %v6674, %v6706
        %v6714 = vadd.f32 %v6675, %v6706
        %v6715 = vadd.f32 %v6676, %v6706
        %v6716 = vadd.f32 %v6677, %v6706
        %v6717 = vadd.f32 %v6678, %v6706
        %v6718 = vadd.f32 %v6679, %v6706
        %v6719 = vadd.f32 %v6680, %v6706
        %v6720 = vadd.f32 %v6681, %v6706
        %v6721 = vadd.f32 %v6682, %v6706
        %v6722 = vadd.f32 %v6683, %v6706
        %v6723 = vadd.f32 %v6684, %v6706
        %v6724 = vadd.f32 %v6685, %v6706
        %v6725 = vadd.f32 %v6686, %v6706
        %v6726 = vadd.f32 %v6687, %v6706
        %v6727 = vadd.f32 %v6688, %v6706
        %v6728 = vadd.f32 %v6689, %v6706
        %v6729 = vadd.f32 %v6690, %v6706
        %v6730 = vadd.f32 %v6691, %v6706
        %v6731 = vadd.f32 %v6692, %v6706
        %v6732 = vadd.f32 %v6693, %v6706
        %v6733 = vadd.f32 %v6694, %v6706
        %v6734 = vadd.f32 %v6695, %v6706
        %v6735 = vadd.f32 %v6696, %v6706
        %v6736 = vadd.f32 %v6697, %v6706
        %v6737 = vadd.f32 %v6698, %v6706
        %v6738 = vadd.f32 %v6699, %v6706
        %v6739 = vadd.f32 %v6700, %v6706
        %v6740 = vadd.f32 %v6708, %v2794
        %v6741 = vadd.f32 %v6709, %v2795
        %v6742 = vadd.f32 %v6710, %v2796
        %v6743 = vadd.f32 %v6711, %v2797
        %v6744 = vadd.f32 %v6712, %v2798
        %v6745 = vadd.f32 %v6713, %v2799
        %v6746 = vadd.f32 %v6714, %v2800
        %v6747 = vadd.f32 %v6715, %v2801
        %v6748 = vadd.f32 %v6716, %v2802
        %v6749 = vadd.f32 %v6717, %v2803
        %v6750 = vadd.f32 %v6718, %v2804
        %v6751 = vadd.f32 %v6719, %v2805
        %v6752 = vadd.f32 %v6720, %v2806
        %v6753 = vadd.f32 %v6721, %v2807
        %v6754 = vadd.f32 %v6722, %v2808
        %v6755 = vadd.f32 %v6723, %v2809
        %v6756 = vadd.f32 %v6724, %v2810
        %v6757 = vadd.f32 %v6725, %v2811
        %v6758 = vadd.f32 %v6726, %v2812
        %v6759 = vadd.f32 %v6727, %v2813
        %v6760 = vadd.f32 %v6728, %v2814
        %v6761 = vadd.f32 %v6729, %v2815
        %v6762 = vadd.f32 %v6730, %v2816
        %v6763 = vadd.f32 %v6731, %v2817
        %v6764 = vadd.f32 %v6732, %v2818
        %v6765 = vadd.f32 %v6733, %v2819
        %v6766 = vadd.f32 %v6734, %v2820
        %v6767 = vadd.f32 %v6735, %v2821
        %v6768 = vadd.f32 %v6736, %v2822
        %v6769 = vadd.f32 %v6737, %v2823
        %v6770 = vadd.f32 %v6738, %v2824
        %v6771 = vadd.f32 %v6739, %v2825
        %v6772 = vmax.f32 %v6740, 0.0
        %v6773 = vmax.f32 %v6741, 0.0
        %v6774 = vmax.f32 %v6742, 0.0
        %v6775 = vmax.f32 %v6743, 0.0
        %v6776 = vmax.f32 %v6744, 0.0
        %v6777 = vmax.f32 %v6745, 0.0
        %v6778 = vmax.f32 %v6746, 0.0
        %v6779 = vmax.f32 %v6747, 0.0
        %v6780 = vmax.f32 %v6748, 0.0
        %v6781 = vmax.f32 %v6749, 0.0
        %v6782 = vmax.f32 %v6750, 0.0
        %v6783 = vmax.f32 %v6751, 0.0
        %v6784 = vmax.f32 %v6752, 0.0
        %v6785 = vmax.f32 %v6753, 0.0
        %v6786 = vmax.f32 %v6754, 0.0
        %v6787 = vmax.f32 %v6755, 0.0
        %v6788 = vmax.f32 %v6756, 0.0
        %v6789 = vmax.f32 %v6757, 0.0
        %v6790 = vmax.f32 %v6758, 0.0
        %v6791 = vmax.f32 %v6759, 0.0
        %v6792 = vmax.f32 %v6760, 0.0
        %v6793 = vmax.f32 %v6761, 0.0
        %v6794 = vmax.f32 %v6762, 0.0
        %v6795 = vmax.f32 %v6763, 0.0
        %v6796 = vmax.f32 %v6764, 0.0
        %v6797 = vmax.f32 %v6765, 0.0
        %v6798 = vmax.f32 %v6766, 0.0
        %v6799 = vmax.f32 %v6767, 0.0
        %v6800 = vmax.f32 %v6768, 0.0
        %v6801 = vmax.f32 %v6769, 0.0
        %v6802 = vmax.f32 %v6770, 0.0
        %v6803 = vmax.f32 %v6771, 0.0
        %6804 = vst [vmem:[%s271] sm:$0xff] %v6772
        %6805 = vst [vmem:[%s271 + $0x8] sm:$0xff] %v6773
        %6806 = vst [vmem:[%s271 + $0x10] sm:$0xff] %v6774
        %6807 = vst [vmem:[%s271 + $0x18] sm:$0xff] %v6775
        %6808 = vst [vmem:[%s271 + $0x20] sm:$0xff] %v6776
        %6809 = vst [vmem:[%s271 + $0x28] sm:$0xff] %v6777
        %6810 = vst [vmem:[%s271 + $0x30] sm:$0xff] %v6778
        %6811 = vst [vmem:[%s271 + $0x38] sm:$0xff] %v6779
        %6812 = vst [vmem:[%s271 + $0x40] sm:$0xff] %v6780
        %6813 = vst [vmem:[%s271 + $0x48] sm:$0xff] %v6781
        %6814 = vst [vmem:[%s271 + $0x50] sm:$0xff] %v6782
        %6815 = vst [vmem:[%s271 + $0x58] sm:$0xff] %v6783
        %6816 = vst [vmem:[%s271 + $0x60] sm:$0xff] %v6784
        %6817 = vst [vmem:[%s271 + $0x68] sm:$0xff] %v6785
        %6818 = vst [vmem:[%s271 + $0x70] sm:$0xff] %v6786
        %6819 = vst [vmem:[%s271 + $0x78] sm:$0xff] %v6787
        %6820 = vst [vmem:[%s271 + $0x80] sm:$0xff] %v6788
        %6821 = vst [vmem:[%s271 + $0x88] sm:$0xff] %v6789
        %6822 = vst [vmem:[%s271 + $0x90] sm:$0xff] %v6790
        %6823 = vst [vmem:[%s271 + $0x98] sm:$0xff] %v6791
        %6824 = vst [vmem:[%s271 + $0xa0] sm:$0xff] %v6792
        %6825 = vst [vmem:[%s271 + $0xa8] sm:$0xff] %v6793
        %6826 = vst [vmem:[%s271 + $0xb0] sm:$0xff] %v6794
        %6827 = vst [vmem:[%s271 + $0xb8] sm:$0xff] %v6795
        %6828 = vst [vmem:[%s271 + $0xc0] sm:$0xff] %v6796
        %6829 = vst [vmem:[%s271 + $0xc8] sm:$0xff] %v6797
        %6830 = vst [vmem:[%s271 + $0xd0] sm:$0xff] %v6798
        %6831 = vst [vmem:[%s271 + $0xd8] sm:$0xff] %v6799
        %6832 = vst [vmem:[%s271 + $0xe0] sm:$0xff] %v6800
        %6833 = vst [vmem:[%s271 + $0xe8] sm:$0xff] %v6801
        %6834 = vst [vmem:[%s271 + $0xf0] sm:$0xff] %v6802
        %6835 = vst [vmem:[%s271 + $0xf8] sm:$0xff] %v6803
        %s6836 = sand.u32 %s181, 1
        %s6837 = scalar_lea.sflag [#allocation4], %s6836
        %s6838 = sand.u32 %s181, 1
        %s6839 = smul.addr %s6838, 256
        %s6840 = scalar_lea.vmem [#allocation3], %s6839
        // Predicated region
        $region49: #{tpu_custom_call.1} parent=47 // pred_check
          %p6841 = pneg %p191
        $region50: #{tpu_custom_call.1} parent=47 // pred_check_branch
          %6843 = sbr.rel (%p6841) target = $region52
        $region51: #{tpu_custom_call.1} parent=47 // pred_region
          %s6845 = ssub.s32 4096, 4096
          %6846 = vsyncadd %s6837, %s6845
          %s6847 = smul.addr %s21, 32
          %s6848 = smul.addr %s6847, 128
          %s6849 = scalar_lea.hbm %s7, %s6848
          %s6850 = sshll.u32 %s6840, 4
          %s6851 = int_to_ptr.vmem [resolvable:$true] %s6850
          %6856 = dma.vmem_to_hbm [thread:$0]  %s6851, 4096, %s6849, %s6837, 128, 128, 8
        $region52: #{tpu_custom_call.1} parent=47 // pred_fallthru
          _
      $region48: #{tpu_custom_call.1} parent=5 // pred_fallthru
        _
      %p6857 = scmp.le.s32.totalorder 2, %s16
      // Predicated region
      $region53: #{tpu_custom_call.1} parent=5 // pred_check
        %p6858 = pneg %p6857
      $region54: #{tpu_custom_call.1} parent=5 // pred_check_branch
        %6860 = sbr.rel (%p6858) target = $region56
      $region55: #{tpu_custom_call.1} parent=5 // pred_region
        %s6861 = ssub.s32 %s16, 2
        // Predicated region
        $region57: #{tpu_custom_call.1} parent=55 // pred_check
          %p6862 = pneg %p197
        $region58: #{tpu_custom_call.1} parent=55 // pred_check_branch
          %6864 = sbr.rel (%p6862) target = $region60
        $region59: #{tpu_custom_call.1} parent=55 // pred_region
          %s6865 = sand.u32 %s182, 1
          %s6866 = scalar_lea.sflag [#allocation4], %s6865
          %s6867 = sand.u32 %s182, 1
          %s6868 = smul.addr %s6867, 256
          %s6869 = scalar_lea.vmem [#allocation3], %s6868
          %6870 = dma.done %s6866, 4096
        $region60: #{tpu_custom_call.1} parent=55 // pred_fallthru
          _
      $region56: #{tpu_custom_call.1} parent=5 // pred_fallthru
        _
    $region6: #{tpu_custom_call.1} parent=1 // loop_footer
      %s20 = sadd.s32 1, %s16
    $region7: #{tpu_custom_call.1} parent=1 // loop_footer_branch
      %15 = sbr.rel target = $region3
    $region8: #{tpu_custom_call.1} parent=1 // loop_exit
      _
    %6871 = vsyncpa [#allocation4], 1
    %s6872 = scalar_lea.sflag [#allocation4], 1
    %6873 = vsyncpa %s6872, 1

</llo_original>
